<compile_context>
chip_gen: v6e
topology: v6e:2x2x1
jax: 0.10.0
libtpu: 0.0.40
codegen_flags: <defaults>
</compile_context>

<pallas_src>
import jax
import jax.numpy as jnp
from jax.experimental import pallas as pl
from jax.experimental.pallas import tpu as pltpu

C_SE = 96      # squeeze channels (input to conv2d127)
C_MID = 2304   # expanded channels
C_OUT = 384    # output channels of conv2d128
H = W = 7
HW = H * W
TK = 768       # C_MID chunk (multiple of 128 -> legal lane blocking for w2)


def se_block_kernel(x_se_ref, w1_ref, b1_ref, x_ref, w2_ref, o_ref):
    k = pl.program_id(0)

    @pl.when(k == 0)
    def _():
        o_ref[...] = jnp.zeros_like(o_ref)

    # conv2d127 chunk: s = sigmoid(w1[k] @ x_se + b1[k]) as a (TK, 1) column.
    # Done on the VPU (broadcast-mul) + XLU (lane reduce): K=96 / N=1 is a
    # degenerate MXU shape and this path is trivially cheap & robust.
    w1f = w1_ref[...].astype(jnp.float32)                        # (TK, 96)
    s = jnp.sum(w1f * x_se_ref[...], axis=1, keepdims=True)      # (TK, 1)
    s = jax.nn.sigmoid(s + b1_ref[...])                          # f32 sigmoid

    # broadcast SE scale over the 49 spatial positions (f32 VPU), then cast the
    # result to bf16 as the MXU rhs.
    y = (x_ref[...] * s).astype(w2_ref.dtype)                    # (TK, 49) bf16

    # conv2d128 chunk: (384, TK) @ (TK, 49) with f32 accumulation into the
    # resident output block.
    o_ref[...] += jnp.dot(w2_ref[...], y, preferred_element_type=jnp.float32)


def prepare_params(w1_oihw, b1, w2_oihw):
    """One-time (model-load) parameter prep: matmul layout + bf16 weights.

    This is deliberately outside the per-call path; only reshapes/casts, no
    transposes are needed because the kernel works in channel-major layout.
    """
    w1 = w1_oihw.reshape(C_MID, C_SE).astype(jnp.bfloat16)       # (2304, 96)
    b1c = b1.reshape(C_MID, 1).astype(jnp.float32)               # (2304, 1)
    w2 = w2_oihw.reshape(C_OUT, C_MID).astype(jnp.bfloat16)      # (384, 2304)
    return w1, b1c, w2


def se_block_pallas(x392, x389, w1, b1c, w2):
    """x392: (1, 96, 1, 1) NCHW; x389: (1, 2304, 7, 7) NCHW (both f32).
    w1/b1c/w2 come from prepare_params. Returns (1, 384, 7, 7) f32 NCHW."""
    # Pure reshapes -- NCHW is already channel-major, no data movement.
    x_se = x392.reshape(1, C_SE).astype(jnp.float32)             # (1, 96)
    x_chw = x389.reshape(C_MID, HW).astype(jnp.float32)          # (2304, 49)

    grid_spec = pltpu.PrefetchScalarGridSpec(
        num_scalar_prefetch=0,
        grid=(C_MID // TK,),
        in_specs=[
            pl.BlockSpec((1, C_SE), lambda k: (0, 0)),           # x_se (resident)
            pl.BlockSpec((TK, C_SE), lambda k: (k, 0)),          # w1 chunk
            pl.BlockSpec((TK, 1), lambda k: (k, 0)),             # b1 chunk
            pl.BlockSpec((TK, HW), lambda k: (k, 0)),            # x chunk
            pl.BlockSpec((C_OUT, TK), lambda k: (0, k)),         # w2 chunk
        ],
        out_specs=pl.BlockSpec((C_OUT, HW), lambda k: (0, 0)),   # resident acc
    )

    out_flat = pl.pallas_call(
        se_block_kernel,
        out_shape=jax.ShapeDtypeStruct((C_OUT, HW), jnp.float32),
        grid_spec=grid_spec,
        compiler_params=pltpu.CompilerParams(
            dimension_semantics=("arbitrary",)),
    )(x_se, w1, b1c, x_chw, w2)

    # (384, 49) -> (1, 384, 7, 7): pure reshape, already NCHW.
    return out_flat.reshape(1, C_OUT, H, W)


def reference(x392, x389, w1_oihw, b1, w2_oihw):
    """Pure-JAX f32 reference identical to the PyTorch forward."""
    x_se = x392.reshape(1, C_SE)
    s = x_se @ w1_oihw.reshape(C_MID, C_SE).T + b1.reshape(1, C_MID)
    s = jax.nn.sigmoid(s).reshape(1, C_MID, 1, 1)
    y = s * x389                                                 # (1, 2304, 7, 7)
    y_flat = y.reshape(C_MID, HW)                                # (2304, 49)
    o = w2_oihw.reshape(C_OUT, C_MID) @ y_flat                   # (384, 49)
    return o.reshape(1, C_OUT, H, W)


if __name__ == "__main__":
    key = jax.random.PRNGKey(0)
    k1, k2, k3, k4, k5 = jax.random.split(key, 5)

    # deterministic synthetic parameters (shapes match the nn.Module __init__)
    w1_oihw = jax.random.normal(k1, (C_MID, C_SE, 1, 1), jnp.float32) * 0.05
    b1 = jax.random.normal(k2, (C_MID,), jnp.float32) * 0.05
    w2_oihw = jax.random.normal(k3, (C_OUT, C_MID, 1, 1), jnp.float32) * 0.05

    # deterministic inputs at the shapes the forward implies
    x392 = jax.random.normal(k4, (1, C_SE, 1, 1), jnp.float32)
    x389 = jax.random.normal(k5, (1, C_MID, H, W), jnp.float32)

    # one-time parameter prep (amortized over all forward calls)
    w1, b1c, w2 = prepare_params(w1_oihw, b1, w2_oihw)

    fwd = jax.jit(se_block_pallas)
    out = fwd(x392, x389, w1, b1c, w2)
    out = jax.block_until_ready(out)

    ref = reference(x392, x389, w1_oihw, b1, w2_oihw)
    assert out.shape == (1, C_OUT, H, W), out.shape
    # bf16 weights over a K=2304 reduction -> loosen the f32-exact tolerance.
    assert jnp.allclose(out, ref, atol=7e-2, rtol=2e-2), float(
        jnp.max(jnp.abs(out - ref)))

    print("KERNEL_OK")
</pallas_src>

<mosaic_0001>
module attributes {stable_mosaic.version = 11 : i64} {
  func.func @se_block_kernel(%arg0: i32, %arg1: memref<1x96xf32, #tpu.memory_space<vmem>>, %arg2: memref<768x96xbf16, #tpu.memory_space<vmem>>, %arg3: memref<768x1xf32, #tpu.memory_space<vmem>>, %arg4: memref<768x49xf32, #tpu.memory_space<vmem>>, %arg5: memref<384x768xbf16, #tpu.memory_space<vmem>>, %arg6: memref<384x49xf32, #tpu.memory_space<vmem>>) attributes {dimension_semantics = [#tpu.dimension_semantics<arbitrary>], iteration_bounds = array<i64: 3>, scalar_prefetch = 0 : i64, scratch_operands = 0 : i64, tpu.core_type = #tpu.core_type<tc>, window_params = [{pipeline_mode = #tpu.pipeline_mode<synchronous>, transform_indices = @transform_0, window_bounds = array<i64: 1, 96>}, {transform_indices = @transform_1, window_bounds = array<i64: 768, 96>}, {transform_indices = @transform_2, window_bounds = array<i64: 768, 1>}, {transform_indices = @transform_3, window_bounds = array<i64: 768, 49>}, {transform_indices = @transform_4, window_bounds = array<i64: 384, 768>}, {pipeline_mode = #tpu.pipeline_mode<synchronous>, transform_indices = @transform_5, window_bounds = array<i64: 384, 49>}]} {
    %c0_i32 = arith.constant 0 : i32
    %0 = arith.cmpi eq, %arg0, %c0_i32 : i32
    %1 = arith.extui %0 : i1 to i32
    %c0_i32_0 = arith.constant 0 : i32
    %2 = arith.cmpi ne, %1, %c0_i32_0 : i32
    scf.if %2 {
      %cst_16 = arith.constant 0.000000e+00 : f32
      %26 = vector.broadcast %cst_16 : f32 to vector<384x49xf32>
      %c0_17 = arith.constant 0 : index
      %c0_18 = arith.constant 0 : index
      %27 = vector.load %arg6[%c0_17, %c0_18] : memref<384x49xf32, #tpu.memory_space<vmem>>, vector<384x49xf32>
      tpu.vector_store %arg6[%c0_17, %c0_18], %26 {strides = array<i32>} : memref<384x49xf32, #tpu.memory_space<vmem>>, vector<384x49xf32>,
    } else {
    }
    %c0 = arith.constant 0 : index
    %c0_1 = arith.constant 0 : index
    %3 = vector.load %arg2[%c0, %c0_1] : memref<768x96xbf16, #tpu.memory_space<vmem>>, vector<768x96xbf16>
    %4 = arith.extf %3 : vector<768x96xbf16> to vector<768x96xf32>
    %c0_2 = arith.constant 0 : index
    %c0_3 = arith.constant 0 : index
    %5 = vector.load %arg1[%c0_2, %c0_3] : memref<1x96xf32, #tpu.memory_space<vmem>>, vector<1x96xf32>
    %6 = vector.broadcast %5 : vector<1x96xf32> to vector<768x96xf32>
    %7 = arith.mulf %4, %6 : vector<768x96xf32>
    %cst = arith.constant dense<0.000000e+00> : vector<768xf32>
    %8 = vector.multi_reduction <add>, %7, %cst [1] : vector<768x96xf32> to vector<768xf32>
    %9 = vector.shape_cast %8 : vector<768xf32> to vector<768x1xf32>
    %c0_4 = arith.constant 0 : index
    %c0_5 = arith.constant 0 : index
    %10 = vector.load %arg3[%c0_4, %c0_5] : memref<768x1xf32, #tpu.memory_space<vmem>>, vector<768x1xf32>
    %11 = arith.addf %9, %10 : vector<768x1xf32>
    %12 = arith.negf %11 : vector<768x1xf32>
    %13 = math.exp %12 : vector<768x1xf32>
    %cst_6 = arith.constant 1.000000e+00 : f32
    %14 = vector.broadcast %cst_6 : f32 to vector<768x1xf32>
    %15 = arith.addf %14, %13 : vector<768x1xf32>
    %16 = arith.divf %14, %15 : vector<768x1xf32>
    %c0_7 = arith.constant 0 : index
    %c0_8 = arith.constant 0 : index
    %17 = vector.load %arg4[%c0_7, %c0_8] : memref<768x49xf32, #tpu.memory_space<vmem>>, vector<768x49xf32>
    %18 = vector.broadcast %16 : vector<768x1xf32> to vector<768x49xf32>
    %19 = arith.mulf %17, %18 : vector<768x49xf32>
    %20 = arith.truncf %19 : vector<768x49xf32> to vector<768x49xbf16>
    %c0_9 = arith.constant 0 : index
    %c0_10 = arith.constant 0 : index
    %21 = vector.load %arg6[%c0_9, %c0_10] : memref<384x49xf32, #tpu.memory_space<vmem>>, vector<384x49xf32>
    %c0_11 = arith.constant 0 : index
    %c0_12 = arith.constant 0 : index
    %22 = vector.load %arg5[%c0_11, %c0_12] : memref<384x768xbf16, #tpu.memory_space<vmem>>, vector<384x768xbf16>
    %cst_13 = arith.constant dense<0.000000e+00> : vector<384x49xf32>
    %23 = tpu.matmul %22, %20, %cst_13 {dimension_numbers = #tpu.dot_dimension_numbers<[1], [0], [0], [1], [0, 0, 1, 1], [], []>} : vector<384x768xbf16>, vector<768x49xbf16>, vector<384x49xf32> -> vector<384x49xf32>
    %24 = arith.addf %21, %23 : vector<384x49xf32>
    %c0_14 = arith.constant 0 : index
    %c0_15 = arith.constant 0 : index
    %25 = vector.load %arg6[%c0_14, %c0_15] : memref<384x49xf32, #tpu.memory_space<vmem>>, vector<384x49xf32>
    tpu.vector_store %arg6[%c0_14, %c0_15], %24 {strides = array<i32>} : memref<384x49xf32, #tpu.memory_space<vmem>>, vector<384x49xf32>,
    return
  }
  func.func @transform_0(%arg0: i32) -> (i32, i32) {
    %c0_i32 = arith.constant 0 : i32
    %c0_i32_0 = arith.constant 0 : i32
    %c0_i32_1 = arith.constant 0 : i32
    return %c0_i32, %c0_i32_0 : i32, i32
  }
  func.func @transform_1(%arg0: i32) -> (i32, i32) {
    %c0_i32 = arith.constant 0 : i32
    %c0_i32_0 = arith.constant 0 : i32
    return %arg0, %c0_i32 : i32, i32
  }
  func.func @transform_2(%arg0: i32) -> (i32, i32) {
    %c0_i32 = arith.constant 0 : i32
    %c0_i32_0 = arith.constant 0 : i32
    return %arg0, %c0_i32 : i32, i32
  }
  func.func @transform_3(%arg0: i32) -> (i32, i32) {
    %c0_i32 = arith.constant 0 : i32
    %c0_i32_0 = arith.constant 0 : i32
    return %arg0, %c0_i32 : i32, i32
  }
  func.func @transform_4(%arg0: i32) -> (i32, i32) {
    %c0_i32 = arith.constant 0 : i32
    %c0_i32_0 = arith.constant 0 : i32
    return %c0_i32, %arg0 : i32, i32
  }
  func.func @transform_5(%arg0: i32) -> (i32, i32) {
    %c0_i32 = arith.constant 0 : i32
    %c0_i32_0 = arith.constant 0 : i32
    %c0_i32_1 = arith.constant 0 : i32
    return %c0_i32, %c0_i32_0 : i32, i32
  }
}

</mosaic_0001>

<llo_original>
// kernel: se_block_pallas.1
$region0: #{se_block_pallas.1}
  #allocation0 [shape = 'u32[]', space=smem, size = 0x4, offset = 0x4, fixed_abs, tag = 'smem constant byte address 0x4 - core index']
  #allocation1 [shape = 'u32[144,128]{1,0:T(1,128)}', space=vmem, size = 0x12000, scoped, tag = 'internal scratch']
  %s0 = inlined_call_operand.vmem [shape: f32[1,96], index: 0, kind: input, shape index: {}]
  %s1 = inlined_call_operand.vmem [shape: bf16[2304,96], index: 1, kind: input, shape index: {}]
  %s2 = inlined_call_operand.vmem [shape: f32[2304,1], index: 2, kind: input, shape index: {}]
  %s3 = inlined_call_operand.vmem [shape: f32[2304,49], index: 3, kind: input, shape index: {}]
  %s4 = inlined_call_operand.vmem [shape: bf16[384,2304], index: 4, kind: input, shape index: {}]
  %s5 = inlined_call_operand.vmem [shape: f32[384,49], index: 5, kind: output, shape index: {}]
  %s6 = sld [smem:[#allocation0]]
  $region80: #{se_block_pallas.1} parent=0
    _
  %s8 = ssub.s32 1, %s6
  %s9 = scalar_select 0, %s8, %s6
  $region1: #{se_block_pallas.1} parent=0
    #allocation2 [shape = 'u8[1179648]{0}', space=vmem, size = 0x120000, scoped, tag = 'input window, operand 4']
    loop: start=0, step=1, limit=5
    $region2: #{se_block_pallas.1} parent=1 // loop_pre_header
      _
    $region3: #{se_block_pallas.1} parent=1 // loop_header
      %s11 = sphi 0, %s15
      %p12 = scmp.ge.s32.totalorder %s11, 5
      %s19 = sphi 0, %s19
      %s21 = sphi 0, %s19
      %s22 = sphi 0, %s21
      %s36 = sphi 0, %s22
      %s42 = sphi 0, %s44
      %s45 = sphi 0, %s42
      %s46 = sphi 0, %s45
      %s62 = sphi 0, %s46
      %s68 = sphi 0, %s70
      %s71 = sphi 0, %s68
      %s72 = sphi 0, %s71
      %s88 = sphi 0, %s72
      %s94 = sphi 0, %s96
      %s97 = sphi 0, %s94
      %s98 = sphi 0, %s97
      %s114 = sphi 0, %s98
      %s120 = sphi 0, %s122
      %s123 = sphi 0, %s120
      %s124 = sphi 0, %s123
      %s140 = sphi 0, %s124
      %s144 = sphi 0, %s144
      %s146 = sphi 0, %s144
      %s147 = sphi 0, %s146
      %s161 = sphi 0, %s147
    $region4: #{se_block_pallas.1} parent=1 // loop_header_branch
      %14 = sbr.rel (%p12) target = $region8
    $region5: #{se_block_pallas.1} parent=1 // loop_body
      %s16 = ssub.s32 %s11, 1
      %s17 = ssub.s32 %s11, 2
      %s18 = sadd.s32 %s11, 1
      %s20 = sadd.s32 %s19, 1
      %p23 = scmp.eq.s32.totalorder %s11, 2
      %p24 = scmp.ne.s32.totalorder %s19, %s21
      %p25 = scmp.eq.s32.totalorder %s11, 0
      %p26 = por %p24, %p25
      %p27 = scmp.ne.s32.totalorder %s19, %s21
      %p28 = scmp.eq.s32.totalorder %s16, 2
      %p29 = por %p27, %p28
      %p30 = scmp.ne.s32.totalorder %s21, %s22
      %p31 = scmp.eq.s32.totalorder %s16, 0
      %p32 = por %p30, %p31
      %p33 = scmp.ne.s32.totalorder %s21, %s22
      %p34 = scmp.eq.s32.totalorder %s17, 2
      %p35 = por %p33, %p34
      %p37 = scmp.ne.s32.totalorder %s22, %s36
      %p38 = scmp.eq.s32.totalorder %s17, 0
      %p39 = por %p37, %p38
      %s40 = ssub.s32 %s11, %s18
      %p41 = scmp.eq.s32.totalorder %s40, 0
      %s43 = sadd.s32 %s42, 1
      %s44 = scalar_select %p41, %s42, %s43
      %p47 = pneg %p41
      %p48 = scmp.eq.s32.totalorder %s11, 2
      %p49 = por %p47, %p48
      %p50 = scmp.ne.s32.totalorder %s42, %s45
      %p51 = scmp.eq.s32.totalorder %s11, 0
      %p52 = por %p50, %p51
      %p53 = scmp.ne.s32.totalorder %s42, %s45
      %p54 = scmp.eq.s32.totalorder %s16, 2
      %p55 = por %p53, %p54
      %p56 = scmp.ne.s32.totalorder %s45, %s46
      %p57 = scmp.eq.s32.totalorder %s16, 0
      %p58 = por %p56, %p57
      %p59 = scmp.ne.s32.totalorder %s45, %s46
      %p60 = scmp.eq.s32.totalorder %s17, 2
      %p61 = por %p59, %p60
      %p63 = scmp.ne.s32.totalorder %s46, %s62
      %p64 = scmp.eq.s32.totalorder %s17, 0
      %p65 = por %p63, %p64
      %s66 = ssub.s32 %s11, %s18
      %p67 = scmp.eq.s32.totalorder %s66, 0
      %s69 = sadd.s32 %s68, 1
      %s70 = scalar_select %p67, %s68, %s69
      %p73 = pneg %p67
      %p74 = scmp.eq.s32.totalorder %s11, 2
      %p75 = por %p73, %p74
      %p76 = scmp.ne.s32.totalorder %s68, %s71
      %p77 = scmp.eq.s32.totalorder %s11, 0
      %p78 = por %p76, %p77
      %p79 = scmp.ne.s32.totalorder %s68, %s71
      %p80 = scmp.eq.s32.totalorder %s16, 2
      %p81 = por %p79, %p80
      %p82 = scmp.ne.s32.totalorder %s71, %s72
      %p83 = scmp.eq.s32.totalorder %s16, 0
      %p84 = por %p82, %p83
      %p85 = scmp.ne.s32.totalorder %s71, %s72
      %p86 = scmp.eq.s32.totalorder %s17, 2
      %p87 = por %p85, %p86
      %p89 = scmp.ne.s32.totalorder %s72, %s88
      %p90 = scmp.eq.s32.totalorder %s17, 0
      %p91 = por %p89, %p90
      %s92 = ssub.s32 %s11, %s18
      %p93 = scmp.eq.s32.totalorder %s92, 0
      %s95 = sadd.s32 %s94, 1
      %s96 = scalar_select %p93, %s94, %s95
      %p99 = pneg %p93
      %p100 = scmp.eq.s32.totalorder %s11, 2
      %p101 = por %p99, %p100
      %p102 = scmp.ne.s32.totalorder %s94, %s97
      %p103 = scmp.eq.s32.totalorder %s11, 0
      %p104 = por %p102, %p103
      %p105 = scmp.ne.s32.totalorder %s94, %s97
      %p106 = scmp.eq.s32.totalorder %s16, 2
      %p107 = por %p105, %p106
      %p108 = scmp.ne.s32.totalorder %s97, %s98
      %p109 = scmp.eq.s32.totalorder %s16, 0
      %p110 = por %p108, %p109
      %p111 = scmp.ne.s32.totalorder %s97, %s98
      %p112 = scmp.eq.s32.totalorder %s17, 2
      %p113 = por %p111, %p112
      %p115 = scmp.ne.s32.totalorder %s98, %s114
      %p116 = scmp.eq.s32.totalorder %s17, 0
      %p117 = por %p115, %p116
      %s118 = ssub.s32 %s11, %s18
      %p119 = scmp.eq.s32.totalorder %s118, 0
      %s121 = sadd.s32 %s120, 1
      %s122 = scalar_select %p119, %s120, %s121
      %p125 = pneg %p119
      %p126 = scmp.eq.s32.totalorder %s11, 2
      %p127 = por %p125, %p126
      %p128 = scmp.ne.s32.totalorder %s120, %s123
      %p129 = scmp.eq.s32.totalorder %s11, 0
      %p130 = por %p128, %p129
      %p131 = scmp.ne.s32.totalorder %s120, %s123
      %p132 = scmp.eq.s32.totalorder %s16, 2
      %p133 = por %p131, %p132
      %p134 = scmp.ne.s32.totalorder %s123, %s124
      %p135 = scmp.eq.s32.totalorder %s16, 0
      %p136 = por %p134, %p135
      %p137 = scmp.ne.s32.totalorder %s123, %s124
      %p138 = scmp.eq.s32.totalorder %s17, 2
      %p139 = por %p137, %p138
      %p141 = scmp.ne.s32.totalorder %s124, %s140
      %p142 = scmp.eq.s32.totalorder %s17, 0
      %p143 = por %p141, %p142
      %s145 = sadd.s32 %s144, 1
      %p148 = scmp.eq.s32.totalorder %s11, 2
      %p149 = scmp.ne.s32.totalorder %s144, %s146
      %p150 = scmp.eq.s32.totalorder %s11, 0
      %p151 = por %p149, %p150
      %p152 = scmp.ne.s32.totalorder %s144, %s146
      %p153 = scmp.eq.s32.totalorder %s16, 2
      %p154 = por %p152, %p153
      %p155 = scmp.ne.s32.totalorder %s146, %s147
      %p156 = scmp.eq.s32.totalorder %s16, 0
      %p157 = por %p155, %p156
      %p158 = scmp.ne.s32.totalorder %s146, %s147
      %p159 = scmp.eq.s32.totalorder %s17, 2
      %p160 = por %p158, %p159
      %p162 = scmp.ne.s32.totalorder %s147, %s161
      %p163 = scmp.eq.s32.totalorder %s17, 0
      %p164 = por %p162, %p163
      %p165 = scmp.le.s32.totalorder 1, %s11
      %p166 = scmp.lt.s32.totalorder %s11, 4
      %p167 = pnand %p165, %p166
      %p168 = pneg %p167
      // Predicated region
      $region9: #{se_block_pallas.1} parent=5 // pred_check
        _
      $region10: #{se_block_pallas.1} parent=5 // pred_check_branch
        %170 = sbr.rel (%p167) target = $region12
      $region11: #{se_block_pallas.1} parent=5 // pred_region
        %s171 = ssub.s32 %s11, 1
        // Predicated region
        $region13: #{se_block_pallas.1} parent=11 // pred_check
          %p172 = pneg %p32
        $region14: #{se_block_pallas.1} parent=11 // pred_check_branch
          %174 = sbr.rel (%p172) target = $region16
        $region15: #{se_block_pallas.1} parent=11 // pred_region
          _
        $region16: #{se_block_pallas.1} parent=11 // pred_fallthru
          _
      $region12: #{se_block_pallas.1} parent=5 // pred_fallthru
        _
      %p175 = scmp.lt.s32.totalorder %s11, 3
      // Predicated region
      $region17: #{se_block_pallas.1} parent=5 // pred_check
        %p176 = pneg %p175
      $region18: #{se_block_pallas.1} parent=5 // pred_check_branch
        %178 = sbr.rel (%p176) target = $region20
      $region19: #{se_block_pallas.1} parent=5 // pred_region
        // Predicated region
        $region21: #{se_block_pallas.1} parent=19 // pred_check
          %p179 = pneg %p52
        $region22: #{se_block_pallas.1} parent=19 // pred_check_branch
          %181 = sbr.rel (%p179) target = $region24
        $region23: #{se_block_pallas.1} parent=19 // pred_region
          %s182 = smul.u32 96, %s11
          %p183 = scmp.lt.s32.totalorder %s182, 287
          %s184 = scalar_select %p183, %s182, 287
          %s185 = smul.addr %s184, 4
          %s186 = scalar_lea.vmem %s1, %s185
          %s187 = smul.u32 96, %s11
        $region24: #{se_block_pallas.1} parent=19 // pred_fallthru
          _
        // Predicated region
        $region25: #{se_block_pallas.1} parent=19 // pred_check
          %p188 = pneg %p78
        $region26: #{se_block_pallas.1} parent=19 // pred_check_branch
          %190 = sbr.rel (%p188) target = $region28
        $region27: #{se_block_pallas.1} parent=19 // pred_region
          %s191 = smul.u32 96, %s11
          %p192 = scmp.lt.s32.totalorder %s191, 287
          %s193 = scalar_select %p192, %s191, 287
          %s194 = smul.addr %s193, 8
          %s195 = scalar_lea.vmem %s2, %s194
          %s196 = smul.u32 96, %s11
        $region28: #{se_block_pallas.1} parent=19 // pred_fallthru
          _
        // Predicated region
        $region29: #{se_block_pallas.1} parent=19 // pred_check
          %p197 = pneg %p104
        $region30: #{se_block_pallas.1} parent=19 // pred_check_branch
          %199 = sbr.rel (%p197) target = $region32
        $region31: #{se_block_pallas.1} parent=19 // pred_region
          %s200 = smul.u32 96, %s11
          %p201 = scmp.lt.s32.totalorder %s200, 287
          %s202 = scalar_select %p201, %s200, 287
          %s203 = smul.addr %s202, 8
          %s204 = scalar_lea.vmem %s3, %s203
          %s205 = smul.u32 96, %s11
        $region32: #{se_block_pallas.1} parent=19 // pred_fallthru
          _
        // Predicated region
        $region33: #{se_block_pallas.1} parent=19 // pred_check
          %p206 = pneg %p130
        $region34: #{se_block_pallas.1} parent=19 // pred_check_branch
          %208 = sbr.rel (%p206) target = $region36
        $region35: #{se_block_pallas.1} parent=19 // pred_region
          %s209 = sand.u32 %s120, 1
          %s210 = sand.u32 %s120, 1
          %s211 = smul.addr %s210, 1152
          %s212 = scalar_lea.vmem [#allocation2], %s211
          %s213 = smul.u32 6, %s11
          %s214 = smul.addr %s213, 4
          %s215 = scalar_lea.vmem %s4, %s214
          // Predicated region
          $region37: #{se_block_pallas.1} parent=35 // pred_check
            _
          $region38: #{se_block_pallas.1} parent=35 // pred_check_branch
            %217 = sbr.rel (0) target = $region40
          $region39: #{se_block_pallas.1} parent=35 // pred_region
            // Predicated region
            $region41: #{se_block_pallas.1} parent=39 // pred_check
              _
            $region42: #{se_block_pallas.1} parent=39 // pred_check_branch
              %219 = sbr.rel (0) target = $region44
            $region43: #{se_block_pallas.1} parent=39 // pred_region
              loop: start=0, step=1, limit=1
              $region45: #{se_block_pallas.1} parent=43 // loop_pre_header
                _
              $region46: #{se_block_pallas.1} parent=43 // loop_header
                %s221 = sphi 0, %s225
                %p222 = scmp.ge.s32.totalorder %s221, 1
                %s226 = sphi %s215, %s215
                %s227 = sphi %s212, %s212
              $region47: #{se_block_pallas.1} parent=43 // loop_header_branch
                %224 = sbr.rel (%p222) target = $region51
              $region48: #{se_block_pallas.1} parent=43 // loop_body
                %v228 = vld [vmem:[%s226] sm:$0xff]
                %229 = vst [vmem:[%s227] sm:$0xff] %v228
                %v230 = vld [vmem:[%s226 + $0x8] sm:$0xff]
                %231 = vst [vmem:[%s227 + $0x8] sm:$0xff] %v230
                %v232 = vld [vmem:[%s226 + $0x10] sm:$0xff]
                %233 = vst [vmem:[%s227 + $0x10] sm:$0xff] %v232
                %v234 = vld [vmem:[%s226 + $0x48] sm:$0xff]
                %235 = vst [vmem:[%s227 + $0x18] sm:$0xff] %v234
                %v236 = vld [vmem:[%s226 + $0x50] sm:$0xff]
                %237 = vst [vmem:[%s227 + $0x20] sm:$0xff] %v236
                %v238 = vld [vmem:[%s226 + $0x58] sm:$0xff]
                %239 = vst [vmem:[%s227 + $0x28] sm:$0xff] %v238
                %v240 = vld [vmem:[%s226 + $0x90] sm:$0xff]
                %241 = vst [vmem:[%s227 + $0x30] sm:$0xff] %v240
                %v242 = vld [vmem:[%s226 + $0x98] sm:$0xff]
                %243 = vst [vmem:[%s227 + $0x38] sm:$0xff] %v242
                %v244 = vld [vmem:[%s226 + $0xa0] sm:$0xff]
                %245 = vst [vmem:[%s227 + $0x40] sm:$0xff] %v244
                %v246 = vld [vmem:[%s226 + $0xd8] sm:$0xff]
                %247 = vst [vmem:[%s227 + $0x48] sm:$0xff] %v246
                %v248 = vld [vmem:[%s226 + $0xe0] sm:$0xff]
                %249 = vst [vmem:[%s227 + $0x50] sm:$0xff] %v248
                %v250 = vld [vmem:[%s226 + $0xe8] sm:$0xff]
                %251 = vst [vmem:[%s227 + $0x58] sm:$0xff] %v250
                %v252 = vld [vmem:[%s226 + $0x120] sm:$0xff]
                %253 = vst [vmem:[%s227 + $0x60] sm:$0xff] %v252
                %v254 = vld [vmem:[%s226 + $0x128] sm:$0xff]
                %255 = vst [vmem:[%s227 + $0x68] sm:$0xff] %v254
                %v256 = vld [vmem:[%s226 + $0x130] sm:$0xff]
                %257 = vst [vmem:[%s227 + $0x70] sm:$0xff] %v256
                %v258 = vld [vmem:[%s226 + $0x168] sm:$0xff]
                %259 = vst [vmem:[%s227 + $0x78] sm:$0xff] %v258
                %v260 = vld [vmem:[%s226 + $0x170] sm:$0xff]
                %261 = vst [vmem:[%s227 + $0x80] sm:$0xff] %v260
                %v262 = vld [vmem:[%s226 + $0x178] sm:$0xff]
                %263 = vst [vmem:[%s227 + $0x88] sm:$0xff] %v262
                %v264 = vld [vmem:[%s226 + $0x1b0] sm:$0xff]
                %265 = vst [vmem:[%s227 + $0x90] sm:$0xff] %v264
                %v266 = vld [vmem:[%s226 + $0x1b8] sm:$0xff]
                %267 = vst [vmem:[%s227 + $0x98] sm:$0xff] %v266
                %v268 = vld [vmem:[%s226 + $0x1c0] sm:$0xff]
                %269 = vst [vmem:[%s227 + $0xa0] sm:$0xff] %v268
                %v270 = vld [vmem:[%s226 + $0x1f8] sm:$0xff]
                %271 = vst [vmem:[%s227 + $0xa8] sm:$0xff] %v270
                %v272 = vld [vmem:[%s226 + $0x200] sm:$0xff]
                %273 = vst [vmem:[%s227 + $0xb0] sm:$0xff] %v272
                %v274 = vld [vmem:[%s226 + $0x208] sm:$0xff]
                %275 = vst [vmem:[%s227 + $0xb8] sm:$0xff] %v274
                %v276 = vld [vmem:[%s226 + $0x240] sm:$0xff]
                %277 = vst [vmem:[%s227 + $0xc0] sm:$0xff] %v276
                %v278 = vld [vmem:[%s226 + $0x248] sm:$0xff]
                %279 = vst [vmem:[%s227 + $0xc8] sm:$0xff] %v278
                %v280 = vld [vmem:[%s226 + $0x250] sm:$0xff]
                %281 = vst [vmem:[%s227 + $0xd0] sm:$0xff] %v280
                %v282 = vld [vmem:[%s226 + $0x288] sm:$0xff]
                %283 = vst [vmem:[%s227 + $0xd8] sm:$0xff] %v282
                %v284 = vld [vmem:[%s226 + $0x290] sm:$0xff]
                %285 = vst [vmem:[%s227 + $0xe0] sm:$0xff] %v284
                %v286 = vld [vmem:[%s226 + $0x298] sm:$0xff]
                %287 = vst [vmem:[%s227 + $0xe8] sm:$0xff] %v286
                %v288 = vld [vmem:[%s226 + $0x2d0] sm:$0xff]
                %289 = vst [vmem:[%s227 + $0xf0] sm:$0xff] %v288
                %v290 = vld [vmem:[%s226 + $0x2d8] sm:$0xff]
                %291 = vst [vmem:[%s227 + $0xf8] sm:$0xff] %v290
                %v292 = vld [vmem:[%s226 + $0x2e0] sm:$0xff]
                %293 = vst [vmem:[%s227 + $0x100] sm:$0xff] %v292
                %v294 = vld [vmem:[%s226 + $0x318] sm:$0xff]
                %295 = vst [vmem:[%s227 + $0x108] sm:$0xff] %v294
                %v296 = vld [vmem:[%s226 + $0x320] sm:$0xff]
                %297 = vst [vmem:[%s227 + $0x110] sm:$0xff] %v296
                %v298 = vld [vmem:[%s226 + $0x328] sm:$0xff]
                %299 = vst [vmem:[%s227 + $0x118] sm:$0xff] %v298
                %v300 = vld [vmem:[%s226 + $0x360] sm:$0xff]
                %301 = vst [vmem:[%s227 + $0x120] sm:$0xff] %v300
                %v302 = vld [vmem:[%s226 + $0x368] sm:$0xff]
                %303 = vst [vmem:[%s227 + $0x128] sm:$0xff] %v302
                %v304 = vld [vmem:[%s226 + $0x370] sm:$0xff]
                %305 = vst [vmem:[%s227 + $0x130] sm:$0xff] %v304
                %v306 = vld [vmem:[%s226 + $0x3a8] sm:$0xff]
                %307 = vst [vmem:[%s227 + $0x138] sm:$0xff] %v306
                %v308 = vld [vmem:[%s226 + $0x3b0] sm:$0xff]
                %309 = vst [vmem:[%s227 + $0x140] sm:$0xff] %v308
                %v310 = vld [vmem:[%s226 + $0x3b8] sm:$0xff]
                %311 = vst [vmem:[%s227 + $0x148] sm:$0xff] %v310
                %v312 = vld [vmem:[%s226 + $0x3f0] sm:$0xff]
                %313 = vst [vmem:[%s227 + $0x150] sm:$0xff] %v312
                %v314 = vld [vmem:[%s226 + $0x3f8] sm:$0xff]
                %315 = vst [vmem:[%s227 + $0x158] sm:$0xff] %v314
                %v316 = vld [vmem:[%s226 + $0x400] sm:$0xff]
                %317 = vst [vmem:[%s227 + $0x160] sm:$0xff] %v316
                %v318 = vld [vmem:[%s226 + $0x438] sm:$0xff]
                %319 = vst [vmem:[%s227 + $0x168] sm:$0xff] %v318
                %v320 = vld [vmem:[%s226 + $0x440] sm:$0xff]
                %321 = vst [vmem:[%s227 + $0x170] sm:$0xff] %v320
                %v322 = vld [vmem:[%s226 + $0x448] sm:$0xff]
                %323 = vst [vmem:[%s227 + $0x178] sm:$0xff] %v322
                %v324 = vld [vmem:[%s226 + $0x480] sm:$0xff]
                %325 = vst [vmem:[%s227 + $0x180] sm:$0xff] %v324
                %v326 = vld [vmem:[%s226 + $0x488] sm:$0xff]
                %327 = vst [vmem:[%s227 + $0x188] sm:$0xff] %v326
                %v328 = vld [vmem:[%s226 + $0x490] sm:$0xff]
                %329 = vst [vmem:[%s227 + $0x190] sm:$0xff] %v328
                %v330 = vld [vmem:[%s226 + $0x4c8] sm:$0xff]
                %331 = vst [vmem:[%s227 + $0x198] sm:$0xff] %v330
                %v332 = vld [vmem:[%s226 + $0x4d0] sm:$0xff]
                %333 = vst [vmem:[%s227 + $0x1a0] sm:$0xff] %v332
                %v334 = vld [vmem:[%s226 + $0x4d8] sm:$0xff]
                %335 = vst [vmem:[%s227 + $0x1a8] sm:$0xff] %v334
                %v336 = vld [vmem:[%s226 + $0x510] sm:$0xff]
                %337 = vst [vmem:[%s227 + $0x1b0] sm:$0xff] %v336
                %v338 = vld [vmem:[%s226 + $0x518] sm:$0xff]
                %339 = vst [vmem:[%s227 + $0x1b8] sm:$0xff] %v338
                %v340 = vld [vmem:[%s226 + $0x520] sm:$0xff]
                %341 = vst [vmem:[%s227 + $0x1c0] sm:$0xff] %v340
                %v342 = vld [vmem:[%s226 + $0x558] sm:$0xff]
                %343 = vst [vmem:[%s227 + $0x1c8] sm:$0xff] %v342
                %v344 = vld [vmem:[%s226 + $0x560] sm:$0xff]
                %345 = vst [vmem:[%s227 + $0x1d0] sm:$0xff] %v344
                %v346 = vld [vmem:[%s226 + $0x568] sm:$0xff]
                %347 = vst [vmem:[%s227 + $0x1d8] sm:$0xff] %v346
                %v348 = vld [vmem:[%s226 + $0x5a0] sm:$0xff]
                %349 = vst [vmem:[%s227 + $0x1e0] sm:$0xff] %v348
                %v350 = vld [vmem:[%s226 + $0x5a8] sm:$0xff]
                %351 = vst [vmem:[%s227 + $0x1e8] sm:$0xff] %v350
                %v352 = vld [vmem:[%s226 + $0x5b0] sm:$0xff]
                %353 = vst [vmem:[%s227 + $0x1f0] sm:$0xff] %v352
                %v354 = vld [vmem:[%s226 + $0x5e8] sm:$0xff]
                %355 = vst [vmem:[%s227 + $0x1f8] sm:$0xff] %v354
                %v356 = vld [vmem:[%s226 + $0x5f0] sm:$0xff]
                %357 = vst [vmem:[%s227 + $0x200] sm:$0xff] %v356
                %v358 = vld [vmem:[%s226 + $0x5f8] sm:$0xff]
                %359 = vst [vmem:[%s227 + $0x208] sm:$0xff] %v358
                %v360 = vld [vmem:[%s226 + $0x630] sm:$0xff]
                %361 = vst [vmem:[%s227 + $0x210] sm:$0xff] %v360
                %v362 = vld [vmem:[%s226 + $0x638] sm:$0xff]
                %363 = vst [vmem:[%s227 + $0x218] sm:$0xff] %v362
                %v364 = vld [vmem:[%s226 + $0x640] sm:$0xff]
                %365 = vst [vmem:[%s227 + $0x220] sm:$0xff] %v364
                %v366 = vld [vmem:[%s226 + $0x678] sm:$0xff]
                %367 = vst [vmem:[%s227 + $0x228] sm:$0xff] %v366
                %v368 = vld [vmem:[%s226 + $0x680] sm:$0xff]
                %369 = vst [vmem:[%s227 + $0x230] sm:$0xff] %v368
                %v370 = vld [vmem:[%s226 + $0x688] sm:$0xff]
                %371 = vst [vmem:[%s227 + $0x238] sm:$0xff] %v370
                %v372 = vld [vmem:[%s226 + $0x6c0] sm:$0xff]
                %373 = vst [vmem:[%s227 + $0x240] sm:$0xff] %v372
                %v374 = vld [vmem:[%s226 + $0x6c8] sm:$0xff]
                %375 = vst [vmem:[%s227 + $0x248] sm:$0xff] %v374
                %v376 = vld [vmem:[%s226 + $0x6d0] sm:$0xff]
                %377 = vst [vmem:[%s227 + $0x250] sm:$0xff] %v376
                %v378 = vld [vmem:[%s226 + $0x708] sm:$0xff]
                %379 = vst [vmem:[%s227 + $0x258] sm:$0xff] %v378
                %v380 = vld [vmem:[%s226 + $0x710] sm:$0xff]
                %381 = vst [vmem:[%s227 + $0x260] sm:$0xff] %v380
                %v382 = vld [vmem:[%s226 + $0x718] sm:$0xff]
                %383 = vst [vmem:[%s227 + $0x268] sm:$0xff] %v382
                %v384 = vld [vmem:[%s226 + $0x750] sm:$0xff]
                %385 = vst [vmem:[%s227 + $0x270] sm:$0xff] %v384
                %v386 = vld [vmem:[%s226 + $0x758] sm:$0xff]
                %387 = vst [vmem:[%s227 + $0x278] sm:$0xff] %v386
                %v388 = vld [vmem:[%s226 + $0x760] sm:$0xff]
                %389 = vst [vmem:[%s227 + $0x280] sm:$0xff] %v388
                %v390 = vld [vmem:[%s226 + $0x798] sm:$0xff]
                %391 = vst [vmem:[%s227 + $0x288] sm:$0xff] %v390
                %v392 = vld [vmem:[%s226 + $0x7a0] sm:$0xff]
                %393 = vst [vmem:[%s227 + $0x290] sm:$0xff] %v392
                %v394 = vld [vmem:[%s226 + $0x7a8] sm:$0xff]
                %395 = vst [vmem:[%s227 + $0x298] sm:$0xff] %v394
                %v396 = vld [vmem:[%s226 + $0x7e0] sm:$0xff]
                %397 = vst [vmem:[%s227 + $0x2a0] sm:$0xff] %v396
                %v398 = vld [vmem:[%s226 + $0x7e8] sm:$0xff]
                %399 = vst [vmem:[%s227 + $0x2a8] sm:$0xff] %v398
                %v400 = vld [vmem:[%s226 + $0x7f0] sm:$0xff]
                %401 = vst [vmem:[%s227 + $0x2b0] sm:$0xff] %v400
                %v402 = vld [vmem:[%s226 + $0x828] sm:$0xff]
                %403 = vst [vmem:[%s227 + $0x2b8] sm:$0xff] %v402
                %v404 = vld [vmem:[%s226 + $0x830] sm:$0xff]
                %405 = vst [vmem:[%s227 + $0x2c0] sm:$0xff] %v404
                %v406 = vld [vmem:[%s226 + $0x838] sm:$0xff]
                %407 = vst [vmem:[%s227 + $0x2c8] sm:$0xff] %v406
                %v408 = vld [vmem:[%s226 + $0x870] sm:$0xff]
                %409 = vst [vmem:[%s227 + $0x2d0] sm:$0xff] %v408
                %v410 = vld [vmem:[%s226 + $0x878] sm:$0xff]
                %411 = vst [vmem:[%s227 + $0x2d8] sm:$0xff] %v410
                %v412 = vld [vmem:[%s226 + $0x880] sm:$0xff]
                %413 = vst [vmem:[%s227 + $0x2e0] sm:$0xff] %v412
                %v414 = vld [vmem:[%s226 + $0x8b8] sm:$0xff]
                %415 = vst [vmem:[%s227 + $0x2e8] sm:$0xff] %v414
                %v416 = vld [vmem:[%s226 + $0x8c0] sm:$0xff]
                %417 = vst [vmem:[%s227 + $0x2f0] sm:$0xff] %v416
                %v418 = vld [vmem:[%s226 + $0x8c8] sm:$0xff]
                %419 = vst [vmem:[%s227 + $0x2f8] sm:$0xff] %v418
                %v420 = vld [vmem:[%s226 + $0x900] sm:$0xff]
                %421 = vst [vmem:[%s227 + $0x300] sm:$0xff] %v420
                %v422 = vld [vmem:[%s226 + $0x908] sm:$0xff]
                %423 = vst [vmem:[%s227 + $0x308] sm:$0xff] %v422
                %v424 = vld [vmem:[%s226 + $0x910] sm:$0xff]
                %425 = vst [vmem:[%s227 + $0x310] sm:$0xff] %v424
                %v426 = vld [vmem:[%s226 + $0x948] sm:$0xff]
                %427 = vst [vmem:[%s227 + $0x318] sm:$0xff] %v426
                %v428 = vld [vmem:[%s226 + $0x950] sm:$0xff]
                %429 = vst [vmem:[%s227 + $0x320] sm:$0xff] %v428
                %v430 = vld [vmem:[%s226 + $0x958] sm:$0xff]
                %431 = vst [vmem:[%s227 + $0x328] sm:$0xff] %v430
                %v432 = vld [vmem:[%s226 + $0x990] sm:$0xff]
                %433 = vst [vmem:[%s227 + $0x330] sm:$0xff] %v432
                %v434 = vld [vmem:[%s226 + $0x998] sm:$0xff]
                %435 = vst [vmem:[%s227 + $0x338] sm:$0xff] %v434
                %v436 = vld [vmem:[%s226 + $0x9a0] sm:$0xff]
                %437 = vst [vmem:[%s227 + $0x340] sm:$0xff] %v436
                %v438 = vld [vmem:[%s226 + $0x9d8] sm:$0xff]
                %439 = vst [vmem:[%s227 + $0x348] sm:$0xff] %v438
                %v440 = vld [vmem:[%s226 + $0x9e0] sm:$0xff]
                %441 = vst [vmem:[%s227 + $0x350] sm:$0xff] %v440
                %v442 = vld [vmem:[%s226 + $0x9e8] sm:$0xff]
                %443 = vst [vmem:[%s227 + $0x358] sm:$0xff] %v442
                %v444 = vld [vmem:[%s226 + $0xa20] sm:$0xff]
                %445 = vst [vmem:[%s227 + $0x360] sm:$0xff] %v444
                %v446 = vld [vmem:[%s226 + $0xa28] sm:$0xff]
                %447 = vst [vmem:[%s227 + $0x368] sm:$0xff] %v446
                %v448 = vld [vmem:[%s226 + $0xa30] sm:$0xff]
                %449 = vst [vmem:[%s227 + $0x370] sm:$0xff] %v448
                %v450 = vld [vmem:[%s226 + $0xa68] sm:$0xff]
                %451 = vst [vmem:[%s227 + $0x378] sm:$0xff] %v450
                %v452 = vld [vmem:[%s226 + $0xa70] sm:$0xff]
                %453 = vst [vmem:[%s227 + $0x380] sm:$0xff] %v452
                %v454 = vld [vmem:[%s226 + $0xa78] sm:$0xff]
                %455 = vst [vmem:[%s227 + $0x388] sm:$0xff] %v454
                %v456 = vld [vmem:[%s226 + $0xab0] sm:$0xff]
                %457 = vst [vmem:[%s227 + $0x390] sm:$0xff] %v456
                %v458 = vld [vmem:[%s226 + $0xab8] sm:$0xff]
                %459 = vst [vmem:[%s227 + $0x398] sm:$0xff] %v458
                %v460 = vld [vmem:[%s226 + $0xac0] sm:$0xff]
                %461 = vst [vmem:[%s227 + $0x3a0] sm:$0xff] %v460
                %v462 = vld [vmem:[%s226 + $0xaf8] sm:$0xff]
                %463 = vst [vmem:[%s227 + $0x3a8] sm:$0xff] %v462
                %v464 = vld [vmem:[%s226 + $0xb00] sm:$0xff]
                %465 = vst [vmem:[%s227 + $0x3b0] sm:$0xff] %v464
                %v466 = vld [vmem:[%s226 + $0xb08] sm:$0xff]
                %467 = vst [vmem:[%s227 + $0x3b8] sm:$0xff] %v466
                %v468 = vld [vmem:[%s226 + $0xb40] sm:$0xff]
                %469 = vst [vmem:[%s227 + $0x3c0] sm:$0xff] %v468
                %v470 = vld [vmem:[%s226 + $0xb48] sm:$0xff]
                %471 = vst [vmem:[%s227 + $0x3c8] sm:$0xff] %v470
                %v472 = vld [vmem:[%s226 + $0xb50] sm:$0xff]
                %473 = vst [vmem:[%s227 + $0x3d0] sm:$0xff] %v472
                %v474 = vld [vmem:[%s226 + $0xb88] sm:$0xff]
                %475 = vst [vmem:[%s227 + $0x3d8] sm:$0xff] %v474
                %v476 = vld [vmem:[%s226 + $0xb90] sm:$0xff]
                %477 = vst [vmem:[%s227 + $0x3e0] sm:$0xff] %v476
                %v478 = vld [vmem:[%s226 + $0xb98] sm:$0xff]
                %479 = vst [vmem:[%s227 + $0x3e8] sm:$0xff] %v478
                %v480 = vld [vmem:[%s226 + $0xbd0] sm:$0xff]
                %481 = vst [vmem:[%s227 + $0x3f0] sm:$0xff] %v480
                %v482 = vld [vmem:[%s226 + $0xbd8] sm:$0xff]
                %483 = vst [vmem:[%s227 + $0x3f8] sm:$0xff] %v482
                %v484 = vld [vmem:[%s226 + $0xbe0] sm:$0xff]
                %485 = vst [vmem:[%s227 + $0x400] sm:$0xff] %v484
                %v486 = vld [vmem:[%s226 + $0xc18] sm:$0xff]
                %487 = vst [vmem:[%s227 + $0x408] sm:$0xff] %v486
                %v488 = vld [vmem:[%s226 + $0xc20] sm:$0xff]
                %489 = vst [vmem:[%s227 + $0x410] sm:$0xff] %v488
                %v490 = vld [vmem:[%s226 + $0xc28] sm:$0xff]
                %491 = vst [vmem:[%s227 + $0x418] sm:$0xff] %v490
                %v492 = vld [vmem:[%s226 + $0xc60] sm:$0xff]
                %493 = vst [vmem:[%s227 + $0x420] sm:$0xff] %v492
                %v494 = vld [vmem:[%s226 + $0xc68] sm:$0xff]
                %495 = vst [vmem:[%s227 + $0x428] sm:$0xff] %v494
                %v496 = vld [vmem:[%s226 + $0xc70] sm:$0xff]
                %497 = vst [vmem:[%s227 + $0x430] sm:$0xff] %v496
                %v498 = vld [vmem:[%s226 + $0xca8] sm:$0xff]
                %499 = vst [vmem:[%s227 + $0x438] sm:$0xff] %v498
                %v500 = vld [vmem:[%s226 + $0xcb0] sm:$0xff]
                %501 = vst [vmem:[%s227 + $0x440] sm:$0xff] %v500
                %v502 = vld [vmem:[%s226 + $0xcb8] sm:$0xff]
                %503 = vst [vmem:[%s227 + $0x448] sm:$0xff] %v502
                %v504 = vld [vmem:[%s226 + $0xcf0] sm:$0xff]
                %505 = vst [vmem:[%s227 + $0x450] sm:$0xff] %v504
                %v506 = vld [vmem:[%s226 + $0xcf8] sm:$0xff]
                %507 = vst [vmem:[%s227 + $0x458] sm:$0xff] %v506
                %v508 = vld [vmem:[%s226 + $0xd00] sm:$0xff]
                %509 = vst [vmem:[%s227 + $0x460] sm:$0xff] %v508
                %v510 = vld [vmem:[%s226 + $0xd38] sm:$0xff]
                %511 = vst [vmem:[%s227 + $0x468] sm:$0xff] %v510
                %v512 = vld [vmem:[%s226 + $0xd40] sm:$0xff]
                %513 = vst [vmem:[%s227 + $0x470] sm:$0xff] %v512
                %v514 = vld [vmem:[%s226 + $0xd48] sm:$0xff]
                %515 = vst [vmem:[%s227 + $0x478] sm:$0xff] %v514
              $region49: #{se_block_pallas.1} parent=43 // loop_footer
                %s225 = sadd.s32 1, %s221
              $region50: #{se_block_pallas.1} parent=43 // loop_footer_branch
                %220 = sbr.rel target = $region46
              $region51: #{se_block_pallas.1} parent=43 // loop_exit
                _
            $region44: #{se_block_pallas.1} parent=39 // pred_fallthru
              _
            // Predicated region
            $region52: #{se_block_pallas.1} parent=39 // pred_check
              _
            $region53: #{se_block_pallas.1} parent=39 // pred_check_branch
              %517 = sbr.rel target = $region55
            $region54: #{se_block_pallas.1} parent=39 // pred_region
              _
            $region55: #{se_block_pallas.1} parent=39 // pred_fallthru
              _
          $region40: #{se_block_pallas.1} parent=35 // pred_fallthru
            _
          %518 = vnop
        $region36: #{se_block_pallas.1} parent=19 // pred_fallthru
          _
      $region20: #{se_block_pallas.1} parent=5 // pred_fallthru
        _
      %p519 = scmp.le.s32.totalorder 1, %s11
      %p520 = scmp.lt.s32.totalorder %s11, 4
      %p521 = pnand %p519, %p520
      %p522 = pneg %p521
      // Predicated region
      $region56: #{se_block_pallas.1} parent=5 // pred_check
        _
      $region57: #{se_block_pallas.1} parent=5 // pred_check_branch
        %524 = sbr.rel (%p521) target = $region59
      $region58: #{se_block_pallas.1} parent=5 // pred_region
        %s525 = ssub.s32 %s11, 1
        %s526 = sand.u32 %s123, 1
        %s527 = sand.u32 %s123, 1
        %s528 = smul.addr %s527, 1152
        %s529 = scalar_lea.vmem [#allocation2], %s528
        // Predicated region
        $region60: #{se_block_pallas.1} parent=58 // pred_check
          %p530 = pneg %p136
        $region61: #{se_block_pallas.1} parent=58 // pred_check_branch
          %532 = sbr.rel (%p530) target = $region63
        $region62: #{se_block_pallas.1} parent=58 // pred_region
          _
        $region63: #{se_block_pallas.1} parent=58 // pred_fallthru
          _
        %p533 = pneg %p32
        %p534 = pneg %p29
        %s535 = smul.u32 96, %s16
        %p536 = scmp.lt.s32.totalorder %s535, 287
        %s537 = scalar_select %p536, %s535, 287
        %s538 = smul.addr %s537, 4
        %s539 = scalar_lea.vmem %s1, %s538
        %p540 = pneg %p58
        %p541 = pneg %p55
        %s542 = smul.u32 96, %s16
        %p543 = scmp.lt.s32.totalorder %s542, 287
        %s544 = scalar_select %p543, %s542, 287
        %s545 = smul.addr %s544, 8
        %s546 = scalar_lea.vmem %s2, %s545
        %p547 = pneg %p84
        %p548 = pneg %p81
        %s549 = smul.u32 96, %s16
        %p550 = scmp.lt.s32.totalorder %s549, 287
        %s551 = scalar_select %p550, %s549, 287
        %s552 = smul.addr %s551, 8
        %s553 = scalar_lea.vmem %s3, %s552
        %p554 = pneg %p110
        %p555 = pneg %p107
        %s556 = sand.u32 %s123, 1
        %s557 = sand.u32 %s123, 1
        %s558 = smul.addr %s557, 1152
        %s559 = scalar_lea.vmem [#allocation2], %s558
        %p560 = pneg %p136
        %p561 = pneg %p133
        %p562 = pneg %p157
        %p563 = pneg %p154
        %s564 = smul.u32 96, %s16
        %p565 = scmp.lt.s32.totalorder %s564, 287
        %s566 = scalar_select %p565, %s564, 287
        %s567 = smul.addr %s566, 4
        %s568 = scalar_lea.vmem %s1, %s567
        %s569 = smul.u32 96, %s16
        %s570 = smul.u32 96, %s16
        %p571 = scmp.lt.s32.totalorder %s570, 287
        %s572 = scalar_select %p571, %s570, 287
        %s573 = smul.addr %s572, 8
        %s574 = scalar_lea.vmem %s2, %s573
        %s575 = smul.u32 96, %s16
        %s576 = smul.u32 96, %s16
        %p577 = scmp.lt.s32.totalorder %s576, 287
        %s578 = scalar_select %p577, %s576, 287
        %s579 = smul.addr %s578, 8
        %s580 = scalar_lea.vmem %s3, %s579
        %s581 = smul.u32 96, %s16
        %s582 = smul.u32 6, %s16
        %p584 = scmp.eq.s32.totalorder %s16, 0
        // Predicated region
        $region64: #{se_block_pallas.1} parent=58 // pred_check
          %p585 = pneg %p584
        $region65: #{se_block_pallas.1} parent=58 // pred_check_branch
          %587 = sbr.rel (%p585) target = $region67
        $region66: #{se_block_pallas.1} parent=58 // pred_region
          %vm588 = vcmask 400384
          %589 = vst.msk [vmem:[%s5] sm:$0xff] %vm588, 0.0
          %590 = vst.msk [vmem:[%s5 + $0x8] sm:$0xff] %vm588, 0.0
          %591 = vst.msk [vmem:[%s5 + $0x10] sm:$0xff] %vm588, 0.0
          %592 = vst.msk [vmem:[%s5 + $0x18] sm:$0xff] %vm588, 0.0
          %593 = vst.msk [vmem:[%s5 + $0x20] sm:$0xff] %vm588, 0.0
          %594 = vst.msk [vmem:[%s5 + $0x28] sm:$0xff] %vm588, 0.0
          %595 = vst.msk [vmem:[%s5 + $0x30] sm:$0xff] %vm588, 0.0
          %596 = vst.msk [vmem:[%s5 + $0x38] sm:$0xff] %vm588, 0.0
          %597 = vst.msk [vmem:[%s5 + $0x40] sm:$0xff] %vm588, 0.0
          %598 = vst.msk [vmem:[%s5 + $0x48] sm:$0xff] %vm588, 0.0
          %599 = vst.msk [vmem:[%s5 + $0x50] sm:$0xff] %vm588, 0.0
          %600 = vst.msk [vmem:[%s5 + $0x58] sm:$0xff] %vm588, 0.0
          %601 = vst.msk [vmem:[%s5 + $0x60] sm:$0xff] %vm588, 0.0
          %602 = vst.msk [vmem:[%s5 + $0x68] sm:$0xff] %vm588, 0.0
          %603 = vst.msk [vmem:[%s5 + $0x70] sm:$0xff] %vm588, 0.0
          %604 = vst.msk [vmem:[%s5 + $0x78] sm:$0xff] %vm588, 0.0
          %605 = vst.msk [vmem:[%s5 + $0x80] sm:$0xff] %vm588, 0.0
          %606 = vst.msk [vmem:[%s5 + $0x88] sm:$0xff] %vm588, 0.0
          %607 = vst.msk [vmem:[%s5 + $0x90] sm:$0xff] %vm588, 0.0
          %608 = vst.msk [vmem:[%s5 + $0x98] sm:$0xff] %vm588, 0.0
          %609 = vst.msk [vmem:[%s5 + $0xa0] sm:$0xff] %vm588, 0.0
          %610 = vst.msk [vmem:[%s5 + $0xa8] sm:$0xff] %vm588, 0.0
          %611 = vst.msk [vmem:[%s5 + $0xb0] sm:$0xff] %vm588, 0.0
          %612 = vst.msk [vmem:[%s5 + $0xb8] sm:$0xff] %vm588, 0.0
          %613 = vst.msk [vmem:[%s5 + $0xc0] sm:$0xff] %vm588, 0.0
          %614 = vst.msk [vmem:[%s5 + $0xc8] sm:$0xff] %vm588, 0.0
          %615 = vst.msk [vmem:[%s5 + $0xd0] sm:$0xff] %vm588, 0.0
          %616 = vst.msk [vmem:[%s5 + $0xd8] sm:$0xff] %vm588, 0.0
          %617 = vst.msk [vmem:[%s5 + $0xe0] sm:$0xff] %vm588, 0.0
          %618 = vst.msk [vmem:[%s5 + $0xe8] sm:$0xff] %vm588, 0.0
          %619 = vst.msk [vmem:[%s5 + $0xf0] sm:$0xff] %vm588, 0.0
          %620 = vst.msk [vmem:[%s5 + $0xf8] sm:$0xff] %vm588, 0.0
          %621 = vst.msk [vmem:[%s5 + $0x100] sm:$0xff] %vm588, 0.0
          %622 = vst.msk [vmem:[%s5 + $0x108] sm:$0xff] %vm588, 0.0
          %623 = vst.msk [vmem:[%s5 + $0x110] sm:$0xff] %vm588, 0.0
          %624 = vst.msk [vmem:[%s5 + $0x118] sm:$0xff] %vm588, 0.0
          %625 = vst.msk [vmem:[%s5 + $0x120] sm:$0xff] %vm588, 0.0
          %626 = vst.msk [vmem:[%s5 + $0x128] sm:$0xff] %vm588, 0.0
          %627 = vst.msk [vmem:[%s5 + $0x130] sm:$0xff] %vm588, 0.0
          %628 = vst.msk [vmem:[%s5 + $0x138] sm:$0xff] %vm588, 0.0
          %629 = vst.msk [vmem:[%s5 + $0x140] sm:$0xff] %vm588, 0.0
          %630 = vst.msk [vmem:[%s5 + $0x148] sm:$0xff] %vm588, 0.0
          %631 = vst.msk [vmem:[%s5 + $0x150] sm:$0xff] %vm588, 0.0
          %632 = vst.msk [vmem:[%s5 + $0x158] sm:$0xff] %vm588, 0.0
          %633 = vst.msk [vmem:[%s5 + $0x160] sm:$0xff] %vm588, 0.0
          %634 = vst.msk [vmem:[%s5 + $0x168] sm:$0xff] %vm588, 0.0
          %635 = vst.msk [vmem:[%s5 + $0x170] sm:$0xff] %vm588, 0.0
          %636 = vst.msk [vmem:[%s5 + $0x178] sm:$0xff] %vm588, 0.0
        $region67: #{se_block_pallas.1} parent=58 // pred_fallthru
          _
        %v637 = vld [vmem:[%s568] sm:$0xf]
        %v638 = vld [vmem:[%s568 + $0x4] sm:$0xf]
        %v639 = vld [vmem:[%s568 + $0x8] sm:$0xf]
        %v640 = vld [vmem:[%s568 + $0xc] sm:$0xf]
        %v641 = vld [vmem:[%s568 + $0x10] sm:$0xf]
        %v642 = vld [vmem:[%s568 + $0x14] sm:$0xf]
        %v643 = vld [vmem:[%s568 + $0x18] sm:$0xf]
        %v644 = vld [vmem:[%s568 + $0x1c] sm:$0xf]
        %v645 = vld [vmem:[%s568 + $0x20] sm:$0xf]
        %v646 = vld [vmem:[%s568 + $0x24] sm:$0xf]
        %v647 = vld [vmem:[%s568 + $0x28] sm:$0xf]
        %v648 = vld [vmem:[%s568 + $0x2c] sm:$0xf]
        %v649 = vld [vmem:[%s568 + $0x30] sm:$0xf]
        %v650 = vld [vmem:[%s568 + $0x34] sm:$0xf]
        %v651 = vld [vmem:[%s568 + $0x38] sm:$0xf]
        %v652 = vld [vmem:[%s568 + $0x3c] sm:$0xf]
        %v653 = vld [vmem:[%s568 + $0x40] sm:$0xf]
        %v654 = vld [vmem:[%s568 + $0x44] sm:$0xf]
        %v655 = vld [vmem:[%s568 + $0x48] sm:$0xf]
        %v656 = vld [vmem:[%s568 + $0x4c] sm:$0xf]
        %v657 = vld [vmem:[%s568 + $0x50] sm:$0xf]
        %v658 = vld [vmem:[%s568 + $0x54] sm:$0xf]
        %v659 = vld [vmem:[%s568 + $0x58] sm:$0xf]
        %v660 = vld [vmem:[%s568 + $0x5c] sm:$0xf]
        %v661 = vld [vmem:[%s568 + $0x60] sm:$0xf]
        %v662 = vld [vmem:[%s568 + $0x64] sm:$0xf]
        %v663 = vld [vmem:[%s568 + $0x68] sm:$0xf]
        %v664 = vld [vmem:[%s568 + $0x6c] sm:$0xf]
        %v665 = vld [vmem:[%s568 + $0x70] sm:$0xf]
        %v666 = vld [vmem:[%s568 + $0x74] sm:$0xf]
        %v667 = vld [vmem:[%s568 + $0x78] sm:$0xf]
        %v668 = vld [vmem:[%s568 + $0x7c] sm:$0xf]
        %v669 = vld [vmem:[%s568 + $0x80] sm:$0xf]
        %v670 = vld [vmem:[%s568 + $0x84] sm:$0xf]
        %v671 = vld [vmem:[%s568 + $0x88] sm:$0xf]
        %v672 = vld [vmem:[%s568 + $0x8c] sm:$0xf]
        %v673 = vld [vmem:[%s568 + $0x90] sm:$0xf]
        %v674 = vld [vmem:[%s568 + $0x94] sm:$0xf]
        %v675 = vld [vmem:[%s568 + $0x98] sm:$0xf]
        %v676 = vld [vmem:[%s568 + $0x9c] sm:$0xf]
        %v677 = vld [vmem:[%s568 + $0xa0] sm:$0xf]
        %v678 = vld [vmem:[%s568 + $0xa4] sm:$0xf]
        %v679 = vld [vmem:[%s568 + $0xa8] sm:$0xf]
        %v680 = vld [vmem:[%s568 + $0xac] sm:$0xf]
        %v681 = vld [vmem:[%s568 + $0xb0] sm:$0xf]
        %v682 = vld [vmem:[%s568 + $0xb4] sm:$0xf]
        %v683 = vld [vmem:[%s568 + $0xb8] sm:$0xf]
        %v684 = vld [vmem:[%s568 + $0xbc] sm:$0xf]
        %v685 = vld [vmem:[%s568 + $0xc0] sm:$0xf]
        %v686 = vld [vmem:[%s568 + $0xc4] sm:$0xf]
        %v687 = vld [vmem:[%s568 + $0xc8] sm:$0xf]
        %v688 = vld [vmem:[%s568 + $0xcc] sm:$0xf]
        %v689 = vld [vmem:[%s568 + $0xd0] sm:$0xf]
        %v690 = vld [vmem:[%s568 + $0xd4] sm:$0xf]
        %v691 = vld [vmem:[%s568 + $0xd8] sm:$0xf]
        %v692 = vld [vmem:[%s568 + $0xdc] sm:$0xf]
        %v693 = vld [vmem:[%s568 + $0xe0] sm:$0xf]
        %v694 = vld [vmem:[%s568 + $0xe4] sm:$0xf]
        %v695 = vld [vmem:[%s568 + $0xe8] sm:$0xf]
        %v696 = vld [vmem:[%s568 + $0xec] sm:$0xf]
        %v697 = vld [vmem:[%s568 + $0xf0] sm:$0xf]
        %v698 = vld [vmem:[%s568 + $0xf4] sm:$0xf]
        %v699 = vld [vmem:[%s568 + $0xf8] sm:$0xf]
        %v700 = vld [vmem:[%s568 + $0xfc] sm:$0xf]
        %v701 = vld [vmem:[%s568 + $0x100] sm:$0xf]
        %v702 = vld [vmem:[%s568 + $0x104] sm:$0xf]
        %v703 = vld [vmem:[%s568 + $0x108] sm:$0xf]
        %v704 = vld [vmem:[%s568 + $0x10c] sm:$0xf]
        %v705 = vld [vmem:[%s568 + $0x110] sm:$0xf]
        %v706 = vld [vmem:[%s568 + $0x114] sm:$0xf]
        %v707 = vld [vmem:[%s568 + $0x118] sm:$0xf]
        %v708 = vld [vmem:[%s568 + $0x11c] sm:$0xf]
        %v709 = vld [vmem:[%s568 + $0x120] sm:$0xf]
        %v710 = vld [vmem:[%s568 + $0x124] sm:$0xf]
        %v711 = vld [vmem:[%s568 + $0x128] sm:$0xf]
        %v712 = vld [vmem:[%s568 + $0x12c] sm:$0xf]
        %v713 = vld [vmem:[%s568 + $0x130] sm:$0xf]
        %v714 = vld [vmem:[%s568 + $0x134] sm:$0xf]
        %v715 = vld [vmem:[%s568 + $0x138] sm:$0xf]
        %v716 = vld [vmem:[%s568 + $0x13c] sm:$0xf]
        %v717 = vld [vmem:[%s568 + $0x140] sm:$0xf]
        %v718 = vld [vmem:[%s568 + $0x144] sm:$0xf]
        %v719 = vld [vmem:[%s568 + $0x148] sm:$0xf]
        %v720 = vld [vmem:[%s568 + $0x14c] sm:$0xf]
        %v721 = vld [vmem:[%s568 + $0x150] sm:$0xf]
        %v722 = vld [vmem:[%s568 + $0x154] sm:$0xf]
        %v723 = vld [vmem:[%s568 + $0x158] sm:$0xf]
        %v724 = vld [vmem:[%s568 + $0x15c] sm:$0xf]
        %v725 = vld [vmem:[%s568 + $0x160] sm:$0xf]
        %v726 = vld [vmem:[%s568 + $0x164] sm:$0xf]
        %v727 = vld [vmem:[%s568 + $0x168] sm:$0xf]
        %v728 = vld [vmem:[%s568 + $0x16c] sm:$0xf]
        %v729 = vld [vmem:[%s568 + $0x170] sm:$0xf]
        %v730 = vld [vmem:[%s568 + $0x174] sm:$0xf]
        %v731 = vld [vmem:[%s568 + $0x178] sm:$0xf]
        %v732 = vld [vmem:[%s568 + $0x17c] sm:$0xf]
        %v733 = vunpack.c.l.bf16 %v637
        %v734 = vunpack.c.l.bf16 %v638
        %v735 = vunpack.c.l.bf16 %v639
        %v736 = vunpack.c.l.bf16 %v640
        %v737 = vunpack.c.l.bf16 %v641
        %v738 = vunpack.c.l.bf16 %v642
        %v739 = vunpack.c.l.bf16 %v643
        %v740 = vunpack.c.l.bf16 %v644
        %v741 = vunpack.c.l.bf16 %v645
        %v742 = vunpack.c.l.bf16 %v646
        %v743 = vunpack.c.l.bf16 %v647
        %v744 = vunpack.c.l.bf16 %v648
        %v745 = vunpack.c.l.bf16 %v649
        %v746 = vunpack.c.l.bf16 %v650
        %v747 = vunpack.c.l.bf16 %v651
        %v748 = vunpack.c.l.bf16 %v652
        %v749 = vunpack.c.l.bf16 %v653
        %v750 = vunpack.c.l.bf16 %v654
        %v751 = vunpack.c.l.bf16 %v655
        %v752 = vunpack.c.l.bf16 %v656
        %v753 = vunpack.c.l.bf16 %v657
        %v754 = vunpack.c.l.bf16 %v658
        %v755 = vunpack.c.l.bf16 %v659
        %v756 = vunpack.c.l.bf16 %v660
        %v757 = vunpack.c.l.bf16 %v661
        %v758 = vunpack.c.l.bf16 %v662
        %v759 = vunpack.c.l.bf16 %v663
        %v760 = vunpack.c.l.bf16 %v664
        %v761 = vunpack.c.l.bf16 %v665
        %v762 = vunpack.c.l.bf16 %v666
        %v763 = vunpack.c.l.bf16 %v667
        %v764 = vunpack.c.l.bf16 %v668
        %v765 = vunpack.c.l.bf16 %v669
        %v766 = vunpack.c.l.bf16 %v670
        %v767 = vunpack.c.l.bf16 %v671
        %v768 = vunpack.c.l.bf16 %v672
        %v769 = vunpack.c.l.bf16 %v673
        %v770 = vunpack.c.l.bf16 %v674
        %v771 = vunpack.c.l.bf16 %v675
        %v772 = vunpack.c.l.bf16 %v676
        %v773 = vunpack.c.l.bf16 %v677
        %v774 = vunpack.c.l.bf16 %v678
        %v775 = vunpack.c.l.bf16 %v679
        %v776 = vunpack.c.l.bf16 %v680
        %v777 = vunpack.c.l.bf16 %v681
        %v778 = vunpack.c.l.bf16 %v682
        %v779 = vunpack.c.l.bf16 %v683
        %v780 = vunpack.c.l.bf16 %v684
        %v781 = vunpack.c.l.bf16 %v685
        %v782 = vunpack.c.l.bf16 %v686
        %v783 = vunpack.c.l.bf16 %v687
        %v784 = vunpack.c.l.bf16 %v688
        %v785 = vunpack.c.l.bf16 %v689
        %v786 = vunpack.c.l.bf16 %v690
        %v787 = vunpack.c.l.bf16 %v691
        %v788 = vunpack.c.l.bf16 %v692
        %v789 = vunpack.c.l.bf16 %v693
        %v790 = vunpack.c.l.bf16 %v694
        %v791 = vunpack.c.l.bf16 %v695
        %v792 = vunpack.c.l.bf16 %v696
        %v793 = vunpack.c.l.bf16 %v697
        %v794 = vunpack.c.l.bf16 %v698
        %v795 = vunpack.c.l.bf16 %v699
        %v796 = vunpack.c.l.bf16 %v700
        %v797 = vunpack.c.l.bf16 %v701
        %v798 = vunpack.c.l.bf16 %v702
        %v799 = vunpack.c.l.bf16 %v703
        %v800 = vunpack.c.l.bf16 %v704
        %v801 = vunpack.c.l.bf16 %v705
        %v802 = vunpack.c.l.bf16 %v706
        %v803 = vunpack.c.l.bf16 %v707
        %v804 = vunpack.c.l.bf16 %v708
        %v805 = vunpack.c.l.bf16 %v709
        %v806 = vunpack.c.l.bf16 %v710
        %v807 = vunpack.c.l.bf16 %v711
        %v808 = vunpack.c.l.bf16 %v712
        %v809 = vunpack.c.l.bf16 %v713
        %v810 = vunpack.c.l.bf16 %v714
        %v811 = vunpack.c.l.bf16 %v715
        %v812 = vunpack.c.l.bf16 %v716
        %v813 = vunpack.c.l.bf16 %v717
        %v814 = vunpack.c.l.bf16 %v718
        %v815 = vunpack.c.l.bf16 %v719
        %v816 = vunpack.c.l.bf16 %v720
        %v817 = vunpack.c.l.bf16 %v721
        %v818 = vunpack.c.l.bf16 %v722
        %v819 = vunpack.c.l.bf16 %v723
        %v820 = vunpack.c.l.bf16 %v724
        %v821 = vunpack.c.l.bf16 %v725
        %v822 = vunpack.c.l.bf16 %v726
        %v823 = vunpack.c.l.bf16 %v727
        %v824 = vunpack.c.l.bf16 %v728
        %v825 = vunpack.c.l.bf16 %v729
        %v826 = vunpack.c.l.bf16 %v730
        %v827 = vunpack.c.l.bf16 %v731
        %v828 = vunpack.c.l.bf16 %v732
        %v829 = vld [vmem:[%s0] sm:$0x1]
        %v831 = vlaneseq
        %v832 = vshrl.u32 %v831, 7
        %v833 = vsub.s32 0, %v832
        %v834 = vrot.slane %v829, %v833
        %v836 = vmul.f32 %v733, %v834
        %v837 = vmul.f32 %v734, %v834
        %v838 = vmul.f32 %v735, %v834
        %v839 = vmul.f32 %v736, %v834
        %v840 = vmul.f32 %v737, %v834
        %v841 = vmul.f32 %v738, %v834
        %v842 = vmul.f32 %v739, %v834
        %v843 = vmul.f32 %v740, %v834
        %v844 = vmul.f32 %v741, %v834
        %v845 = vmul.f32 %v742, %v834
        %v846 = vmul.f32 %v743, %v834
        %v847 = vmul.f32 %v744, %v834
        %v848 = vmul.f32 %v745, %v834
        %v849 = vmul.f32 %v746, %v834
        %v850 = vmul.f32 %v747, %v834
        %v851 = vmul.f32 %v748, %v834
        %v852 = vmul.f32 %v749, %v834
        %v853 = vmul.f32 %v750, %v834
        %v854 = vmul.f32 %v751, %v834
        %v855 = vmul.f32 %v752, %v834
        %v856 = vmul.f32 %v753, %v834
        %v857 = vmul.f32 %v754, %v834
        %v858 = vmul.f32 %v755, %v834
        %v859 = vmul.f32 %v756, %v834
        %v860 = vmul.f32 %v757, %v834
        %v861 = vmul.f32 %v758, %v834
        %v862 = vmul.f32 %v759, %v834
        %v863 = vmul.f32 %v760, %v834
        %v864 = vmul.f32 %v761, %v834
        %v865 = vmul.f32 %v762, %v834
        %v866 = vmul.f32 %v763, %v834
        %v867 = vmul.f32 %v764, %v834
        %v868 = vmul.f32 %v765, %v834
        %v869 = vmul.f32 %v766, %v834
        %v870 = vmul.f32 %v767, %v834
        %v871 = vmul.f32 %v768, %v834
        %v872 = vmul.f32 %v769, %v834
        %v873 = vmul.f32 %v770, %v834
        %v874 = vmul.f32 %v771, %v834
        %v875 = vmul.f32 %v772, %v834
        %v876 = vmul.f32 %v773, %v834
        %v877 = vmul.f32 %v774, %v834
        %v878 = vmul.f32 %v775, %v834
        %v879 = vmul.f32 %v776, %v834
        %v880 = vmul.f32 %v777, %v834
        %v881 = vmul.f32 %v778, %v834
        %v882 = vmul.f32 %v779, %v834
        %v883 = vmul.f32 %v780, %v834
        %v884 = vmul.f32 %v781, %v834
        %v885 = vmul.f32 %v782, %v834
        %v886 = vmul.f32 %v783, %v834
        %v887 = vmul.f32 %v784, %v834
        %v888 = vmul.f32 %v785, %v834
        %v889 = vmul.f32 %v786, %v834
        %v890 = vmul.f32 %v787, %v834
        %v891 = vmul.f32 %v788, %v834
        %v892 = vmul.f32 %v789, %v834
        %v893 = vmul.f32 %v790, %v834
        %v894 = vmul.f32 %v791, %v834
        %v895 = vmul.f32 %v792, %v834
        %v896 = vmul.f32 %v793, %v834
        %v897 = vmul.f32 %v794, %v834
        %v898 = vmul.f32 %v795, %v834
        %v899 = vmul.f32 %v796, %v834
        %v900 = vmul.f32 %v797, %v834
        %v901 = vmul.f32 %v798, %v834
        %v902 = vmul.f32 %v799, %v834
        %v903 = vmul.f32 %v800, %v834
        %v904 = vmul.f32 %v801, %v834
        %v905 = vmul.f32 %v802, %v834
        %v906 = vmul.f32 %v803, %v834
        %v907 = vmul.f32 %v804, %v834
        %v908 = vmul.f32 %v805, %v834
        %v909 = vmul.f32 %v806, %v834
        %v910 = vmul.f32 %v807, %v834
        %v911 = vmul.f32 %v808, %v834
        %v912 = vmul.f32 %v809, %v834
        %v913 = vmul.f32 %v810, %v834
        %v914 = vmul.f32 %v811, %v834
        %v915 = vmul.f32 %v812, %v834
        %v916 = vmul.f32 %v813, %v834
        %v917 = vmul.f32 %v814, %v834
        %v918 = vmul.f32 %v815, %v834
        %v919 = vmul.f32 %v816, %v834
        %v920 = vmul.f32 %v817, %v834
        %v921 = vmul.f32 %v818, %v834
        %v922 = vmul.f32 %v819, %v834
        %v923 = vmul.f32 %v820, %v834
        %v924 = vmul.f32 %v821, %v834
        %v925 = vmul.f32 %v822, %v834
        %v926 = vmul.f32 %v823, %v834
        %v927 = vmul.f32 %v824, %v834
        %v928 = vmul.f32 %v825, %v834
        %v929 = vmul.f32 %v826, %v834
        %v930 = vmul.f32 %v827, %v834
        %v931 = vmul.f32 %v828, %v834
        %vm932 = vcmask 785408
        %v933 = vsel %vm932, %v836, 0.0
        %934 = vadd.xlane.f32.xlu0 %v933
        %v935 = vpop.xlane.xlu0 %934
        %v936 = vsel %vm932, %v837, 0.0
        %937 = vadd.xlane.f32.xlu0 %v936
        %v938 = vpop.xlane.xlu0 %937
        %v939 = vsel %vm932, %v838, 0.0
        %940 = vadd.xlane.f32.xlu0 %v939
        %v941 = vpop.xlane.xlu0 %940
        %v942 = vsel %vm932, %v839, 0.0
        %943 = vadd.xlane.f32.xlu0 %v942
        %v944 = vpop.xlane.xlu0 %943
        %v945 = vsel %vm932, %v840, 0.0
        %946 = vadd.xlane.f32.xlu0 %v945
        %v947 = vpop.xlane.xlu0 %946
        %v948 = vsel %vm932, %v841, 0.0
        %949 = vadd.xlane.f32.xlu0 %v948
        %v950 = vpop.xlane.xlu0 %949
        %v951 = vsel %vm932, %v842, 0.0
        %952 = vadd.xlane.f32.xlu0 %v951
        %v953 = vpop.xlane.xlu0 %952
        %v954 = vsel %vm932, %v843, 0.0
        %955 = vadd.xlane.f32.xlu0 %v954
        %v956 = vpop.xlane.xlu0 %955
        %v957 = vsel %vm932, %v844, 0.0
        %958 = vadd.xlane.f32.xlu0 %v957
        %v959 = vpop.xlane.xlu0 %958
        %v960 = vsel %vm932, %v845, 0.0
        %961 = vadd.xlane.f32.xlu0 %v960
        %v962 = vpop.xlane.xlu0 %961
        %v963 = vsel %vm932, %v846, 0.0
        %964 = vadd.xlane.f32.xlu0 %v963
        %v965 = vpop.xlane.xlu0 %964
        %v966 = vsel %vm932, %v847, 0.0
        %967 = vadd.xlane.f32.xlu0 %v966
        %v968 = vpop.xlane.xlu0 %967
        %v969 = vsel %vm932, %v848, 0.0
        %970 = vadd.xlane.f32.xlu0 %v969
        %v971 = vpop.xlane.xlu0 %970
        %v972 = vsel %vm932, %v849, 0.0
        %973 = vadd.xlane.f32.xlu0 %v972
        %v974 = vpop.xlane.xlu0 %973
        %v975 = vsel %vm932, %v850, 0.0
        %976 = vadd.xlane.f32.xlu0 %v975
        %v977 = vpop.xlane.xlu0 %976
        %v978 = vsel %vm932, %v851, 0.0
        %979 = vadd.xlane.f32.xlu0 %v978
        %v980 = vpop.xlane.xlu0 %979
        %v981 = vsel %vm932, %v852, 0.0
        %982 = vadd.xlane.f32.xlu0 %v981
        %v983 = vpop.xlane.xlu0 %982
        %v984 = vsel %vm932, %v853, 0.0
        %985 = vadd.xlane.f32.xlu0 %v984
        %v986 = vpop.xlane.xlu0 %985
        %v987 = vsel %vm932, %v854, 0.0
        %988 = vadd.xlane.f32.xlu0 %v987
        %v989 = vpop.xlane.xlu0 %988
        %v990 = vsel %vm932, %v855, 0.0
        %991 = vadd.xlane.f32.xlu0 %v990
        %v992 = vpop.xlane.xlu0 %991
        %v993 = vsel %vm932, %v856, 0.0
        %994 = vadd.xlane.f32.xlu0 %v993
        %v995 = vpop.xlane.xlu0 %994
        %v996 = vsel %vm932, %v857, 0.0
        %997 = vadd.xlane.f32.xlu0 %v996
        %v998 = vpop.xlane.xlu0 %997
        %v999 = vsel %vm932, %v858, 0.0
        %1000 = vadd.xlane.f32.xlu0 %v999
        %v1001 = vpop.xlane.xlu0 %1000
        %v1002 = vsel %vm932, %v859, 0.0
        %1003 = vadd.xlane.f32.xlu0 %v1002
        %v1004 = vpop.xlane.xlu0 %1003
        %v1005 = vsel %vm932, %v860, 0.0
        %1006 = vadd.xlane.f32.xlu0 %v1005
        %v1007 = vpop.xlane.xlu0 %1006
        %v1008 = vsel %vm932, %v861, 0.0
        %1009 = vadd.xlane.f32.xlu0 %v1008
        %v1010 = vpop.xlane.xlu0 %1009
        %v1011 = vsel %vm932, %v862, 0.0
        %1012 = vadd.xlane.f32.xlu0 %v1011
        %v1013 = vpop.xlane.xlu0 %1012
        %v1014 = vsel %vm932, %v863, 0.0
        %1015 = vadd.xlane.f32.xlu0 %v1014
        %v1016 = vpop.xlane.xlu0 %1015
        %v1017 = vsel %vm932, %v864, 0.0
        %1018 = vadd.xlane.f32.xlu0 %v1017
        %v1019 = vpop.xlane.xlu0 %1018
        %v1020 = vsel %vm932, %v865, 0.0
        %1021 = vadd.xlane.f32.xlu0 %v1020
        %v1022 = vpop.xlane.xlu0 %1021
        %v1023 = vsel %vm932, %v866, 0.0
        %1024 = vadd.xlane.f32.xlu0 %v1023
        %v1025 = vpop.xlane.xlu0 %1024
        %v1026 = vsel %vm932, %v867, 0.0
        %1027 = vadd.xlane.f32.xlu0 %v1026
        %v1028 = vpop.xlane.xlu0 %1027
        %v1029 = vsel %vm932, %v868, 0.0
        %1030 = vadd.xlane.f32.xlu0 %v1029
        %v1031 = vpop.xlane.xlu0 %1030
        %v1032 = vsel %vm932, %v869, 0.0
        %1033 = vadd.xlane.f32.xlu0 %v1032
        %v1034 = vpop.xlane.xlu0 %1033
        %v1035 = vsel %vm932, %v870, 0.0
        %1036 = vadd.xlane.f32.xlu0 %v1035
        %v1037 = vpop.xlane.xlu0 %1036
        %v1038 = vsel %vm932, %v871, 0.0
        %1039 = vadd.xlane.f32.xlu0 %v1038
        %v1040 = vpop.xlane.xlu0 %1039
        %v1041 = vsel %vm932, %v872, 0.0
        %1042 = vadd.xlane.f32.xlu0 %v1041
        %v1043 = vpop.xlane.xlu0 %1042
        %v1044 = vsel %vm932, %v873, 0.0
        %1045 = vadd.xlane.f32.xlu0 %v1044
        %v1046 = vpop.xlane.xlu0 %1045
        %v1047 = vsel %vm932, %v874, 0.0
        %1048 = vadd.xlane.f32.xlu0 %v1047
        %v1049 = vpop.xlane.xlu0 %1048
        %v1050 = vsel %vm932, %v875, 0.0
        %1051 = vadd.xlane.f32.xlu0 %v1050
        %v1052 = vpop.xlane.xlu0 %1051
        %v1053 = vsel %vm932, %v876, 0.0
        %1054 = vadd.xlane.f32.xlu0 %v1053
        %v1055 = vpop.xlane.xlu0 %1054
        %v1056 = vsel %vm932, %v877, 0.0
        %1057 = vadd.xlane.f32.xlu0 %v1056
        %v1058 = vpop.xlane.xlu0 %1057
        %v1059 = vsel %vm932, %v878, 0.0
        %1060 = vadd.xlane.f32.xlu0 %v1059
        %v1061 = vpop.xlane.xlu0 %1060
        %v1062 = vsel %vm932, %v879, 0.0
        %1063 = vadd.xlane.f32.xlu0 %v1062
        %v1064 = vpop.xlane.xlu0 %1063
        %v1065 = vsel %vm932, %v880, 0.0
        %1066 = vadd.xlane.f32.xlu0 %v1065
        %v1067 = vpop.xlane.xlu0 %1066
        %v1068 = vsel %vm932, %v881, 0.0
        %1069 = vadd.xlane.f32.xlu0 %v1068
        %v1070 = vpop.xlane.xlu0 %1069
        %v1071 = vsel %vm932, %v882, 0.0
        %1072 = vadd.xlane.f32.xlu0 %v1071
        %v1073 = vpop.xlane.xlu0 %1072
        %v1074 = vsel %vm932, %v883, 0.0
        %1075 = vadd.xlane.f32.xlu0 %v1074
        %v1076 = vpop.xlane.xlu0 %1075
        %v1077 = vsel %vm932, %v884, 0.0
        %1078 = vadd.xlane.f32.xlu0 %v1077
        %v1079 = vpop.xlane.xlu0 %1078
        %v1080 = vsel %vm932, %v885, 0.0
        %1081 = vadd.xlane.f32.xlu0 %v1080
        %v1082 = vpop.xlane.xlu0 %1081
        %v1083 = vsel %vm932, %v886, 0.0
        %1084 = vadd.xlane.f32.xlu0 %v1083
        %v1085 = vpop.xlane.xlu0 %1084
        %v1086 = vsel %vm932, %v887, 0.0
        %1087 = vadd.xlane.f32.xlu0 %v1086
        %v1088 = vpop.xlane.xlu0 %1087
        %v1089 = vsel %vm932, %v888, 0.0
        %1090 = vadd.xlane.f32.xlu0 %v1089
        %v1091 = vpop.xlane.xlu0 %1090
        %v1092 = vsel %vm932, %v889, 0.0
        %1093 = vadd.xlane.f32.xlu0 %v1092
        %v1094 = vpop.xlane.xlu0 %1093
        %v1095 = vsel %vm932, %v890, 0.0
        %1096 = vadd.xlane.f32.xlu0 %v1095
        %v1097 = vpop.xlane.xlu0 %1096
        %v1098 = vsel %vm932, %v891, 0.0
        %1099 = vadd.xlane.f32.xlu0 %v1098
        %v1100 = vpop.xlane.xlu0 %1099
        %v1101 = vsel %vm932, %v892, 0.0
        %1102 = vadd.xlane.f32.xlu0 %v1101
        %v1103 = vpop.xlane.xlu0 %1102
        %v1104 = vsel %vm932, %v893, 0.0
        %1105 = vadd.xlane.f32.xlu0 %v1104
        %v1106 = vpop.xlane.xlu0 %1105
        %v1107 = vsel %vm932, %v894, 0.0
        %1108 = vadd.xlane.f32.xlu0 %v1107
        %v1109 = vpop.xlane.xlu0 %1108
        %v1110 = vsel %vm932, %v895, 0.0
        %1111 = vadd.xlane.f32.xlu0 %v1110
        %v1112 = vpop.xlane.xlu0 %1111
        %v1113 = vsel %vm932, %v896, 0.0
        %1114 = vadd.xlane.f32.xlu0 %v1113
        %v1115 = vpop.xlane.xlu0 %1114
        %v1116 = vsel %vm932, %v897, 0.0
        %1117 = vadd.xlane.f32.xlu0 %v1116
        %v1118 = vpop.xlane.xlu0 %1117
        %v1119 = vsel %vm932, %v898, 0.0
        %1120 = vadd.xlane.f32.xlu0 %v1119
        %v1121 = vpop.xlane.xlu0 %1120
        %v1122 = vsel %vm932, %v899, 0.0
        %1123 = vadd.xlane.f32.xlu0 %v1122
        %v1124 = vpop.xlane.xlu0 %1123
        %v1125 = vsel %vm932, %v900, 0.0
        %1126 = vadd.xlane.f32.xlu0 %v1125
        %v1127 = vpop.xlane.xlu0 %1126
        %v1128 = vsel %vm932, %v901, 0.0
        %1129 = vadd.xlane.f32.xlu0 %v1128
        %v1130 = vpop.xlane.xlu0 %1129
        %v1131 = vsel %vm932, %v902, 0.0
        %1132 = vadd.xlane.f32.xlu0 %v1131
        %v1133 = vpop.xlane.xlu0 %1132
        %v1134 = vsel %vm932, %v903, 0.0
        %1135 = vadd.xlane.f32.xlu0 %v1134
        %v1136 = vpop.xlane.xlu0 %1135
        %v1137 = vsel %vm932, %v904, 0.0
        %1138 = vadd.xlane.f32.xlu0 %v1137
        %v1139 = vpop.xlane.xlu0 %1138
        %v1140 = vsel %vm932, %v905, 0.0
        %1141 = vadd.xlane.f32.xlu0 %v1140
        %v1142 = vpop.xlane.xlu0 %1141
        %v1143 = vsel %vm932, %v906, 0.0
        %1144 = vadd.xlane.f32.xlu0 %v1143
        %v1145 = vpop.xlane.xlu0 %1144
        %v1146 = vsel %vm932, %v907, 0.0
        %1147 = vadd.xlane.f32.xlu0 %v1146
        %v1148 = vpop.xlane.xlu0 %1147
        %v1149 = vsel %vm932, %v908, 0.0
        %1150 = vadd.xlane.f32.xlu0 %v1149
        %v1151 = vpop.xlane.xlu0 %1150
        %v1152 = vsel %vm932, %v909, 0.0
        %1153 = vadd.xlane.f32.xlu0 %v1152
        %v1154 = vpop.xlane.xlu0 %1153
        %v1155 = vsel %vm932, %v910, 0.0
        %1156 = vadd.xlane.f32.xlu0 %v1155
        %v1157 = vpop.xlane.xlu0 %1156
        %v1158 = vsel %vm932, %v911, 0.0
        %1159 = vadd.xlane.f32.xlu0 %v1158
        %v1160 = vpop.xlane.xlu0 %1159
        %v1161 = vsel %vm932, %v912, 0.0
        %1162 = vadd.xlane.f32.xlu0 %v1161
        %v1163 = vpop.xlane.xlu0 %1162
        %v1164 = vsel %vm932, %v913, 0.0
        %1165 = vadd.xlane.f32.xlu0 %v1164
        %v1166 = vpop.xlane.xlu0 %1165
        %v1167 = vsel %vm932, %v914, 0.0
        %1168 = vadd.xlane.f32.xlu0 %v1167
        %v1169 = vpop.xlane.xlu0 %1168
        %v1170 = vsel %vm932, %v915, 0.0
        %1171 = vadd.xlane.f32.xlu0 %v1170
        %v1172 = vpop.xlane.xlu0 %1171
        %v1173 = vsel %vm932, %v916, 0.0
        %1174 = vadd.xlane.f32.xlu0 %v1173
        %v1175 = vpop.xlane.xlu0 %1174
        %v1176 = vsel %vm932, %v917, 0.0
        %1177 = vadd.xlane.f32.xlu0 %v1176
        %v1178 = vpop.xlane.xlu0 %1177
        %v1179 = vsel %vm932, %v918, 0.0
        %1180 = vadd.xlane.f32.xlu0 %v1179
        %v1181 = vpop.xlane.xlu0 %1180
        %v1182 = vsel %vm932, %v919, 0.0
        %1183 = vadd.xlane.f32.xlu0 %v1182
        %v1184 = vpop.xlane.xlu0 %1183
        %v1185 = vsel %vm932, %v920, 0.0
        %1186 = vadd.xlane.f32.xlu0 %v1185
        %v1187 = vpop.xlane.xlu0 %1186
        %v1188 = vsel %vm932, %v921, 0.0
        %1189 = vadd.xlane.f32.xlu0 %v1188
        %v1190 = vpop.xlane.xlu0 %1189
        %v1191 = vsel %vm932, %v922, 0.0
        %1192 = vadd.xlane.f32.xlu0 %v1191
        %v1193 = vpop.xlane.xlu0 %1192
        %v1194 = vsel %vm932, %v923, 0.0
        %1195 = vadd.xlane.f32.xlu0 %v1194
        %v1196 = vpop.xlane.xlu0 %1195
        %v1197 = vsel %vm932, %v924, 0.0
        %1198 = vadd.xlane.f32.xlu0 %v1197
        %v1199 = vpop.xlane.xlu0 %1198
        %v1200 = vsel %vm932, %v925, 0.0
        %1201 = vadd.xlane.f32.xlu0 %v1200
        %v1202 = vpop.xlane.xlu0 %1201
        %v1203 = vsel %vm932, %v926, 0.0
        %1204 = vadd.xlane.f32.xlu0 %v1203
        %v1205 = vpop.xlane.xlu0 %1204
        %v1206 = vsel %vm932, %v927, 0.0
        %1207 = vadd.xlane.f32.xlu0 %v1206
        %v1208 = vpop.xlane.xlu0 %1207
        %v1209 = vsel %vm932, %v928, 0.0
        %1210 = vadd.xlane.f32.xlu0 %v1209
        %v1211 = vpop.xlane.xlu0 %1210
        %v1212 = vsel %vm932, %v929, 0.0
        %1213 = vadd.xlane.f32.xlu0 %v1212
        %v1214 = vpop.xlane.xlu0 %1213
        %v1215 = vsel %vm932, %v930, 0.0
        %1216 = vadd.xlane.f32.xlu0 %v1215
        %v1217 = vpop.xlane.xlu0 %1216
        %v1218 = vsel %vm932, %v931, 0.0
        %1219 = vadd.xlane.f32.xlu0 %v1218
        %v1220 = vpop.xlane.xlu0 %1219
        %v1221 = vld [vmem:[%s574] sm:$0xff]
        %v1222 = vld [vmem:[%s574 + $0x8] sm:$0xff]
        %v1223 = vld [vmem:[%s574 + $0x10] sm:$0xff]
        %v1224 = vld [vmem:[%s574 + $0x18] sm:$0xff]
        %v1225 = vld [vmem:[%s574 + $0x20] sm:$0xff]
        %v1226 = vld [vmem:[%s574 + $0x28] sm:$0xff]
        %v1227 = vld [vmem:[%s574 + $0x30] sm:$0xff]
        %v1228 = vld [vmem:[%s574 + $0x38] sm:$0xff]
        %v1229 = vld [vmem:[%s574 + $0x40] sm:$0xff]
        %v1230 = vld [vmem:[%s574 + $0x48] sm:$0xff]
        %v1231 = vld [vmem:[%s574 + $0x50] sm:$0xff]
        %v1232 = vld [vmem:[%s574 + $0x58] sm:$0xff]
        %v1233 = vld [vmem:[%s574 + $0x60] sm:$0xff]
        %v1234 = vld [vmem:[%s574 + $0x68] sm:$0xff]
        %v1235 = vld [vmem:[%s574 + $0x70] sm:$0xff]
        %v1236 = vld [vmem:[%s574 + $0x78] sm:$0xff]
        %v1237 = vld [vmem:[%s574 + $0x80] sm:$0xff]
        %v1238 = vld [vmem:[%s574 + $0x88] sm:$0xff]
        %v1239 = vld [vmem:[%s574 + $0x90] sm:$0xff]
        %v1240 = vld [vmem:[%s574 + $0x98] sm:$0xff]
        %v1241 = vld [vmem:[%s574 + $0xa0] sm:$0xff]
        %v1242 = vld [vmem:[%s574 + $0xa8] sm:$0xff]
        %v1243 = vld [vmem:[%s574 + $0xb0] sm:$0xff]
        %v1244 = vld [vmem:[%s574 + $0xb8] sm:$0xff]
        %v1245 = vld [vmem:[%s574 + $0xc0] sm:$0xff]
        %v1246 = vld [vmem:[%s574 + $0xc8] sm:$0xff]
        %v1247 = vld [vmem:[%s574 + $0xd0] sm:$0xff]
        %v1248 = vld [vmem:[%s574 + $0xd8] sm:$0xff]
        %v1249 = vld [vmem:[%s574 + $0xe0] sm:$0xff]
        %v1250 = vld [vmem:[%s574 + $0xe8] sm:$0xff]
        %v1251 = vld [vmem:[%s574 + $0xf0] sm:$0xff]
        %v1252 = vld [vmem:[%s574 + $0xf8] sm:$0xff]
        %v1253 = vld [vmem:[%s574 + $0x100] sm:$0xff]
        %v1254 = vld [vmem:[%s574 + $0x108] sm:$0xff]
        %v1255 = vld [vmem:[%s574 + $0x110] sm:$0xff]
        %v1256 = vld [vmem:[%s574 + $0x118] sm:$0xff]
        %v1257 = vld [vmem:[%s574 + $0x120] sm:$0xff]
        %v1258 = vld [vmem:[%s574 + $0x128] sm:$0xff]
        %v1259 = vld [vmem:[%s574 + $0x130] sm:$0xff]
        %v1260 = vld [vmem:[%s574 + $0x138] sm:$0xff]
        %v1261 = vld [vmem:[%s574 + $0x140] sm:$0xff]
        %v1262 = vld [vmem:[%s574 + $0x148] sm:$0xff]
        %v1263 = vld [vmem:[%s574 + $0x150] sm:$0xff]
        %v1264 = vld [vmem:[%s574 + $0x158] sm:$0xff]
        %v1265 = vld [vmem:[%s574 + $0x160] sm:$0xff]
        %v1266 = vld [vmem:[%s574 + $0x168] sm:$0xff]
        %v1267 = vld [vmem:[%s574 + $0x170] sm:$0xff]
        %v1268 = vld [vmem:[%s574 + $0x178] sm:$0xff]
        %v1269 = vld [vmem:[%s574 + $0x180] sm:$0xff]
        %v1270 = vld [vmem:[%s574 + $0x188] sm:$0xff]
        %v1271 = vld [vmem:[%s574 + $0x190] sm:$0xff]
        %v1272 = vld [vmem:[%s574 + $0x198] sm:$0xff]
        %v1273 = vld [vmem:[%s574 + $0x1a0] sm:$0xff]
        %v1274 = vld [vmem:[%s574 + $0x1a8] sm:$0xff]
        %v1275 = vld [vmem:[%s574 + $0x1b0] sm:$0xff]
        %v1276 = vld [vmem:[%s574 + $0x1b8] sm:$0xff]
        %v1277 = vld [vmem:[%s574 + $0x1c0] sm:$0xff]
        %v1278 = vld [vmem:[%s574 + $0x1c8] sm:$0xff]
        %v1279 = vld [vmem:[%s574 + $0x1d0] sm:$0xff]
        %v1280 = vld [vmem:[%s574 + $0x1d8] sm:$0xff]
        %v1281 = vld [vmem:[%s574 + $0x1e0] sm:$0xff]
        %v1282 = vld [vmem:[%s574 + $0x1e8] sm:$0xff]
        %v1283 = vld [vmem:[%s574 + $0x1f0] sm:$0xff]
        %v1284 = vld [vmem:[%s574 + $0x1f8] sm:$0xff]
        %v1285 = vld [vmem:[%s574 + $0x200] sm:$0xff]
        %v1286 = vld [vmem:[%s574 + $0x208] sm:$0xff]
        %v1287 = vld [vmem:[%s574 + $0x210] sm:$0xff]
        %v1288 = vld [vmem:[%s574 + $0x218] sm:$0xff]
        %v1289 = vld [vmem:[%s574 + $0x220] sm:$0xff]
        %v1290 = vld [vmem:[%s574 + $0x228] sm:$0xff]
        %v1291 = vld [vmem:[%s574 + $0x230] sm:$0xff]
        %v1292 = vld [vmem:[%s574 + $0x238] sm:$0xff]
        %v1293 = vld [vmem:[%s574 + $0x240] sm:$0xff]
        %v1294 = vld [vmem:[%s574 + $0x248] sm:$0xff]
        %v1295 = vld [vmem:[%s574 + $0x250] sm:$0xff]
        %v1296 = vld [vmem:[%s574 + $0x258] sm:$0xff]
        %v1297 = vld [vmem:[%s574 + $0x260] sm:$0xff]
        %v1298 = vld [vmem:[%s574 + $0x268] sm:$0xff]
        %v1299 = vld [vmem:[%s574 + $0x270] sm:$0xff]
        %v1300 = vld [vmem:[%s574 + $0x278] sm:$0xff]
        %v1301 = vld [vmem:[%s574 + $0x280] sm:$0xff]
        %v1302 = vld [vmem:[%s574 + $0x288] sm:$0xff]
        %v1303 = vld [vmem:[%s574 + $0x290] sm:$0xff]
        %v1304 = vld [vmem:[%s574 + $0x298] sm:$0xff]
        %v1305 = vld [vmem:[%s574 + $0x2a0] sm:$0xff]
        %v1306 = vld [vmem:[%s574 + $0x2a8] sm:$0xff]
        %v1307 = vld [vmem:[%s574 + $0x2b0] sm:$0xff]
        %v1308 = vld [vmem:[%s574 + $0x2b8] sm:$0xff]
        %v1309 = vld [vmem:[%s574 + $0x2c0] sm:$0xff]
        %v1310 = vld [vmem:[%s574 + $0x2c8] sm:$0xff]
        %v1311 = vld [vmem:[%s574 + $0x2d0] sm:$0xff]
        %v1312 = vld [vmem:[%s574 + $0x2d8] sm:$0xff]
        %v1313 = vld [vmem:[%s574 + $0x2e0] sm:$0xff]
        %v1314 = vld [vmem:[%s574 + $0x2e8] sm:$0xff]
        %v1315 = vld [vmem:[%s574 + $0x2f0] sm:$0xff]
        %v1316 = vld [vmem:[%s574 + $0x2f8] sm:$0xff]
        %v1317 = vadd.f32 %v935, %v1221
        %v1318 = vadd.f32 %v938, %v1222
        %v1319 = vadd.f32 %v941, %v1223
        %v1320 = vadd.f32 %v944, %v1224
        %v1321 = vadd.f32 %v947, %v1225
        %v1322 = vadd.f32 %v950, %v1226
        %v1323 = vadd.f32 %v953, %v1227
        %v1324 = vadd.f32 %v956, %v1228
        %v1325 = vadd.f32 %v959, %v1229
        %v1326 = vadd.f32 %v962, %v1230
        %v1327 = vadd.f32 %v965, %v1231
        %v1328 = vadd.f32 %v968, %v1232
        %v1329 = vadd.f32 %v971, %v1233
        %v1330 = vadd.f32 %v974, %v1234
        %v1331 = vadd.f32 %v977, %v1235
        %v1332 = vadd.f32 %v980, %v1236
        %v1333 = vadd.f32 %v983, %v1237
        %v1334 = vadd.f32 %v986, %v1238
        %v1335 = vadd.f32 %v989, %v1239
        %v1336 = vadd.f32 %v992, %v1240
        %v1337 = vadd.f32 %v995, %v1241
        %v1338 = vadd.f32 %v998, %v1242
        %v1339 = vadd.f32 %v1001, %v1243
        %v1340 = vadd.f32 %v1004, %v1244
        %v1341 = vadd.f32 %v1007, %v1245
        %v1342 = vadd.f32 %v1010, %v1246
        %v1343 = vadd.f32 %v1013, %v1247
        %v1344 = vadd.f32 %v1016, %v1248
        %v1345 = vadd.f32 %v1019, %v1249
        %v1346 = vadd.f32 %v1022, %v1250
        %v1347 = vadd.f32 %v1025, %v1251
        %v1348 = vadd.f32 %v1028, %v1252
        %v1349 = vadd.f32 %v1031, %v1253
        %v1350 = vadd.f32 %v1034, %v1254
        %v1351 = vadd.f32 %v1037, %v1255
        %v1352 = vadd.f32 %v1040, %v1256
        %v1353 = vadd.f32 %v1043, %v1257
        %v1354 = vadd.f32 %v1046, %v1258
        %v1355 = vadd.f32 %v1049, %v1259
        %v1356 = vadd.f32 %v1052, %v1260
        %v1357 = vadd.f32 %v1055, %v1261
        %v1358 = vadd.f32 %v1058, %v1262
        %v1359 = vadd.f32 %v1061, %v1263
        %v1360 = vadd.f32 %v1064, %v1264
        %v1361 = vadd.f32 %v1067, %v1265
        %v1362 = vadd.f32 %v1070, %v1266
        %v1363 = vadd.f32 %v1073, %v1267
        %v1364 = vadd.f32 %v1076, %v1268
        %v1365 = vadd.f32 %v1079, %v1269
        %v1366 = vadd.f32 %v1082, %v1270
        %v1367 = vadd.f32 %v1085, %v1271
        %v1368 = vadd.f32 %v1088, %v1272
        %v1369 = vadd.f32 %v1091, %v1273
        %v1370 = vadd.f32 %v1094, %v1274
        %v1371 = vadd.f32 %v1097, %v1275
        %v1372 = vadd.f32 %v1100, %v1276
        %v1373 = vadd.f32 %v1103, %v1277
        %v1374 = vadd.f32 %v1106, %v1278
        %v1375 = vadd.f32 %v1109, %v1279
        %v1376 = vadd.f32 %v1112, %v1280
        %v1377 = vadd.f32 %v1115, %v1281
        %v1378 = vadd.f32 %v1118, %v1282
        %v1379 = vadd.f32 %v1121, %v1283
        %v1380 = vadd.f32 %v1124, %v1284
        %v1381 = vadd.f32 %v1127, %v1285
        %v1382 = vadd.f32 %v1130, %v1286
        %v1383 = vadd.f32 %v1133, %v1287
        %v1384 = vadd.f32 %v1136, %v1288
        %v1385 = vadd.f32 %v1139, %v1289
        %v1386 = vadd.f32 %v1142, %v1290
        %v1387 = vadd.f32 %v1145, %v1291
        %v1388 = vadd.f32 %v1148, %v1292
        %v1389 = vadd.f32 %v1151, %v1293
        %v1390 = vadd.f32 %v1154, %v1294
        %v1391 = vadd.f32 %v1157, %v1295
        %v1392 = vadd.f32 %v1160, %v1296
        %v1393 = vadd.f32 %v1163, %v1297
        %v1394 = vadd.f32 %v1166, %v1298
        %v1395 = vadd.f32 %v1169, %v1299
        %v1396 = vadd.f32 %v1172, %v1300
        %v1397 = vadd.f32 %v1175, %v1301
        %v1398 = vadd.f32 %v1178, %v1302
        %v1399 = vadd.f32 %v1181, %v1303
        %v1400 = vadd.f32 %v1184, %v1304
        %v1401 = vadd.f32 %v1187, %v1305
        %v1402 = vadd.f32 %v1190, %v1306
        %v1403 = vadd.f32 %v1193, %v1307
        %v1404 = vadd.f32 %v1196, %v1308
        %v1405 = vadd.f32 %v1199, %v1309
        %v1406 = vadd.f32 %v1202, %v1310
        %v1407 = vadd.f32 %v1205, %v1311
        %v1408 = vadd.f32 %v1208, %v1312
        %v1409 = vadd.f32 %v1211, %v1313
        %v1410 = vadd.f32 %v1214, %v1314
        %v1411 = vadd.f32 %v1217, %v1315
        %v1412 = vadd.f32 %v1220, %v1316
        %v1413 = vxor.u32 %v1317, 2147483648
        %v1414 = vxor.u32 %v1318, 2147483648
        %v1415 = vxor.u32 %v1319, 2147483648
        %v1416 = vxor.u32 %v1320, 2147483648
        %v1417 = vxor.u32 %v1321, 2147483648
        %v1418 = vxor.u32 %v1322, 2147483648
        %v1419 = vxor.u32 %v1323, 2147483648
        %v1420 = vxor.u32 %v1324, 2147483648
        %v1421 = vxor.u32 %v1325, 2147483648
        %v1422 = vxor.u32 %v1326, 2147483648
        %v1423 = vxor.u32 %v1327, 2147483648
        %v1424 = vxor.u32 %v1328, 2147483648
        %v1425 = vxor.u32 %v1329, 2147483648
        %v1426 = vxor.u32 %v1330, 2147483648
        %v1427 = vxor.u32 %v1331, 2147483648
        %v1428 = vxor.u32 %v1332, 2147483648
        %v1429 = vxor.u32 %v1333, 2147483648
        %v1430 = vxor.u32 %v1334, 2147483648
        %v1431 = vxor.u32 %v1335, 2147483648
        %v1432 = vxor.u32 %v1336, 2147483648
        %v1433 = vxor.u32 %v1337, 2147483648
        %v1434 = vxor.u32 %v1338, 2147483648
        %v1435 = vxor.u32 %v1339, 2147483648
        %v1436 = vxor.u32 %v1340, 2147483648
        %v1437 = vxor.u32 %v1341, 2147483648
        %v1438 = vxor.u32 %v1342, 2147483648
        %v1439 = vxor.u32 %v1343, 2147483648
        %v1440 = vxor.u32 %v1344, 2147483648
        %v1441 = vxor.u32 %v1345, 2147483648
        %v1442 = vxor.u32 %v1346, 2147483648
        %v1443 = vxor.u32 %v1347, 2147483648
        %v1444 = vxor.u32 %v1348, 2147483648
        %v1445 = vxor.u32 %v1349, 2147483648
        %v1446 = vxor.u32 %v1350, 2147483648
        %v1447 = vxor.u32 %v1351, 2147483648
        %v1448 = vxor.u32 %v1352, 2147483648
        %v1449 = vxor.u32 %v1353, 2147483648
        %v1450 = vxor.u32 %v1354, 2147483648
        %v1451 = vxor.u32 %v1355, 2147483648
        %v1452 = vxor.u32 %v1356, 2147483648
        %v1453 = vxor.u32 %v1357, 2147483648
        %v1454 = vxor.u32 %v1358, 2147483648
        %v1455 = vxor.u32 %v1359, 2147483648
        %v1456 = vxor.u32 %v1360, 2147483648
        %v1457 = vxor.u32 %v1361, 2147483648
        %v1458 = vxor.u32 %v1362, 2147483648
        %v1459 = vxor.u32 %v1363, 2147483648
        %v1460 = vxor.u32 %v1364, 2147483648
        %v1461 = vxor.u32 %v1365, 2147483648
        %v1462 = vxor.u32 %v1366, 2147483648
        %v1463 = vxor.u32 %v1367, 2147483648
        %v1464 = vxor.u32 %v1368, 2147483648
        %v1465 = vxor.u32 %v1369, 2147483648
        %v1466 = vxor.u32 %v1370, 2147483648
        %v1467 = vxor.u32 %v1371, 2147483648
        %v1468 = vxor.u32 %v1372, 2147483648
        %v1469 = vxor.u32 %v1373, 2147483648
        %v1470 = vxor.u32 %v1374, 2147483648
        %v1471 = vxor.u32 %v1375, 2147483648
        %v1472 = vxor.u32 %v1376, 2147483648
        %v1473 = vxor.u32 %v1377, 2147483648
        %v1474 = vxor.u32 %v1378, 2147483648
        %v1475 = vxor.u32 %v1379, 2147483648
        %v1476 = vxor.u32 %v1380, 2147483648
        %v1477 = vxor.u32 %v1381, 2147483648
        %v1478 = vxor.u32 %v1382, 2147483648
        %v1479 = vxor.u32 %v1383, 2147483648
        %v1480 = vxor.u32 %v1384, 2147483648
        %v1481 = vxor.u32 %v1385, 2147483648
        %v1482 = vxor.u32 %v1386, 2147483648
        %v1483 = vxor.u32 %v1387, 2147483648
        %v1484 = vxor.u32 %v1388, 2147483648
        %v1485 = vxor.u32 %v1389, 2147483648
        %v1486 = vxor.u32 %v1390, 2147483648
        %v1487 = vxor.u32 %v1391, 2147483648
        %v1488 = vxor.u32 %v1392, 2147483648
        %v1489 = vxor.u32 %v1393, 2147483648
        %v1490 = vxor.u32 %v1394, 2147483648
        %v1491 = vxor.u32 %v1395, 2147483648
        %v1492 = vxor.u32 %v1396, 2147483648
        %v1493 = vxor.u32 %v1397, 2147483648
        %v1494 = vxor.u32 %v1398, 2147483648
        %v1495 = vxor.u32 %v1399, 2147483648
        %v1496 = vxor.u32 %v1400, 2147483648
        %v1497 = vxor.u32 %v1401, 2147483648
        %v1498 = vxor.u32 %v1402, 2147483648
        %v1499 = vxor.u32 %v1403, 2147483648
        %v1500 = vxor.u32 %v1404, 2147483648
        %v1501 = vxor.u32 %v1405, 2147483648
        %v1502 = vxor.u32 %v1406, 2147483648
        %v1503 = vxor.u32 %v1407, 2147483648
        %v1504 = vxor.u32 %v1408, 2147483648
        %v1505 = vxor.u32 %v1409, 2147483648
        %v1506 = vxor.u32 %v1410, 2147483648
        %v1507 = vxor.u32 %v1411, 2147483648
        %v1508 = vxor.u32 %v1412, 2147483648
        %v1509 = vmul.f32 %v1413, 1.442695
        %v1510 = vpow.pop %v1509
        %v1511 = vmul.f32 %v1414, 1.442695
        %v1512 = vpow.pop %v1511
        %v1513 = vmul.f32 %v1415, 1.442695
        %v1514 = vpow.pop %v1513
        %v1515 = vmul.f32 %v1416, 1.442695
        %v1516 = vpow.pop %v1515
        %v1517 = vmul.f32 %v1417, 1.442695
        %v1518 = vpow.pop %v1517
        %v1519 = vmul.f32 %v1418, 1.442695
        %v1520 = vpow.pop %v1519
        %v1521 = vmul.f32 %v1419, 1.442695
        %v1522 = vpow.pop %v1521
        %v1523 = vmul.f32 %v1420, 1.442695
        %v1524 = vpow.pop %v1523
        %v1525 = vmul.f32 %v1421, 1.442695
        %v1526 = vpow.pop %v1525
        %v1527 = vmul.f32 %v1422, 1.442695
        %v1528 = vpow.pop %v1527
        %v1529 = vmul.f32 %v1423, 1.442695
        %v1530 = vpow.pop %v1529
        %v1531 = vmul.f32 %v1424, 1.442695
        %v1532 = vpow.pop %v1531
        %v1533 = vmul.f32 %v1425, 1.442695
        %v1534 = vpow.pop %v1533
        %v1535 = vmul.f32 %v1426, 1.442695
        %v1536 = vpow.pop %v1535
        %v1537 = vmul.f32 %v1427, 1.442695
        %v1538 = vpow.pop %v1537
        %v1539 = vmul.f32 %v1428, 1.442695
        %v1540 = vpow.pop %v1539
        %v1541 = vmul.f32 %v1429, 1.442695
        %v1542 = vpow.pop %v1541
        %v1543 = vmul.f32 %v1430, 1.442695
        %v1544 = vpow.pop %v1543
        %v1545 = vmul.f32 %v1431, 1.442695
        %v1546 = vpow.pop %v1545
        %v1547 = vmul.f32 %v1432, 1.442695
        %v1548 = vpow.pop %v1547
        %v1549 = vmul.f32 %v1433, 1.442695
        %v1550 = vpow.pop %v1549
        %v1551 = vmul.f32 %v1434, 1.442695
        %v1552 = vpow.pop %v1551
        %v1553 = vmul.f32 %v1435, 1.442695
        %v1554 = vpow.pop %v1553
        %v1555 = vmul.f32 %v1436, 1.442695
        %v1556 = vpow.pop %v1555
        %v1557 = vmul.f32 %v1437, 1.442695
        %v1558 = vpow.pop %v1557
        %v1559 = vmul.f32 %v1438, 1.442695
        %v1560 = vpow.pop %v1559
        %v1561 = vmul.f32 %v1439, 1.442695
        %v1562 = vpow.pop %v1561
        %v1563 = vmul.f32 %v1440, 1.442695
        %v1564 = vpow.pop %v1563
        %v1565 = vmul.f32 %v1441, 1.442695
        %v1566 = vpow.pop %v1565
        %v1567 = vmul.f32 %v1442, 1.442695
        %v1568 = vpow.pop %v1567
        %v1569 = vmul.f32 %v1443, 1.442695
        %v1570 = vpow.pop %v1569
        %v1571 = vmul.f32 %v1444, 1.442695
        %v1572 = vpow.pop %v1571
        %v1573 = vmul.f32 %v1445, 1.442695
        %v1574 = vpow.pop %v1573
        %v1575 = vmul.f32 %v1446, 1.442695
        %v1576 = vpow.pop %v1575
        %v1577 = vmul.f32 %v1447, 1.442695
        %v1578 = vpow.pop %v1577
        %v1579 = vmul.f32 %v1448, 1.442695
        %v1580 = vpow.pop %v1579
        %v1581 = vmul.f32 %v1449, 1.442695
        %v1582 = vpow.pop %v1581
        %v1583 = vmul.f32 %v1450, 1.442695
        %v1584 = vpow.pop %v1583
        %v1585 = vmul.f32 %v1451, 1.442695
        %v1586 = vpow.pop %v1585
        %v1587 = vmul.f32 %v1452, 1.442695
        %v1588 = vpow.pop %v1587
        %v1589 = vmul.f32 %v1453, 1.442695
        %v1590 = vpow.pop %v1589
        %v1591 = vmul.f32 %v1454, 1.442695
        %v1592 = vpow.pop %v1591
        %v1593 = vmul.f32 %v1455, 1.442695
        %v1594 = vpow.pop %v1593
        %v1595 = vmul.f32 %v1456, 1.442695
        %v1596 = vpow.pop %v1595
        %v1597 = vmul.f32 %v1457, 1.442695
        %v1598 = vpow.pop %v1597
        %v1599 = vmul.f32 %v1458, 1.442695
        %v1600 = vpow.pop %v1599
        %v1601 = vmul.f32 %v1459, 1.442695
        %v1602 = vpow.pop %v1601
        %v1603 = vmul.f32 %v1460, 1.442695
        %v1604 = vpow.pop %v1603
        %v1605 = vmul.f32 %v1461, 1.442695
        %v1606 = vpow.pop %v1605
        %v1607 = vmul.f32 %v1462, 1.442695
        %v1608 = vpow.pop %v1607
        %v1609 = vmul.f32 %v1463, 1.442695
        %v1610 = vpow.pop %v1609
        %v1611 = vmul.f32 %v1464, 1.442695
        %v1612 = vpow.pop %v1611
        %v1613 = vmul.f32 %v1465, 1.442695
        %v1614 = vpow.pop %v1613
        %v1615 = vmul.f32 %v1466, 1.442695
        %v1616 = vpow.pop %v1615
        %v1617 = vmul.f32 %v1467, 1.442695
        %v1618 = vpow.pop %v1617
        %v1619 = vmul.f32 %v1468, 1.442695
        %v1620 = vpow.pop %v1619
        %v1621 = vmul.f32 %v1469, 1.442695
        %v1622 = vpow.pop %v1621
        %v1623 = vmul.f32 %v1470, 1.442695
        %v1624 = vpow.pop %v1623
        %v1625 = vmul.f32 %v1471, 1.442695
        %v1626 = vpow.pop %v1625
        %v1627 = vmul.f32 %v1472, 1.442695
        %v1628 = vpow.pop %v1627
        %v1629 = vmul.f32 %v1473, 1.442695
        %v1630 = vpow.pop %v1629
        %v1631 = vmul.f32 %v1474, 1.442695
        %v1632 = vpow.pop %v1631
        %v1633 = vmul.f32 %v1475, 1.442695
        %v1634 = vpow.pop %v1633
        %v1635 = vmul.f32 %v1476, 1.442695
        %v1636 = vpow.pop %v1635
        %v1637 = vmul.f32 %v1477, 1.442695
        %v1638 = vpow.pop %v1637
        %v1639 = vmul.f32 %v1478, 1.442695
        %v1640 = vpow.pop %v1639
        %v1641 = vmul.f32 %v1479, 1.442695
        %v1642 = vpow.pop %v1641
        %v1643 = vmul.f32 %v1480, 1.442695
        %v1644 = vpow.pop %v1643
        %v1645 = vmul.f32 %v1481, 1.442695
        %v1646 = vpow.pop %v1645
        %v1647 = vmul.f32 %v1482, 1.442695
        %v1648 = vpow.pop %v1647
        %v1649 = vmul.f32 %v1483, 1.442695
        %v1650 = vpow.pop %v1649
        %v1651 = vmul.f32 %v1484, 1.442695
        %v1652 = vpow.pop %v1651
        %v1653 = vmul.f32 %v1485, 1.442695
        %v1654 = vpow.pop %v1653
        %v1655 = vmul.f32 %v1486, 1.442695
        %v1656 = vpow.pop %v1655
        %v1657 = vmul.f32 %v1487, 1.442695
        %v1658 = vpow.pop %v1657
        %v1659 = vmul.f32 %v1488, 1.442695
        %v1660 = vpow.pop %v1659
        %v1661 = vmul.f32 %v1489, 1.442695
        %v1662 = vpow.pop %v1661
        %v1663 = vmul.f32 %v1490, 1.442695
        %v1664 = vpow.pop %v1663
        %v1665 = vmul.f32 %v1491, 1.442695
        %v1666 = vpow.pop %v1665
        %v1667 = vmul.f32 %v1492, 1.442695
        %v1668 = vpow.pop %v1667
        %v1669 = vmul.f32 %v1493, 1.442695
        %v1670 = vpow.pop %v1669
        %v1671 = vmul.f32 %v1494, 1.442695
        %v1672 = vpow.pop %v1671
        %v1673 = vmul.f32 %v1495, 1.442695
        %v1674 = vpow.pop %v1673
        %v1675 = vmul.f32 %v1496, 1.442695
        %v1676 = vpow.pop %v1675
        %v1677 = vmul.f32 %v1497, 1.442695
        %v1678 = vpow.pop %v1677
        %v1679 = vmul.f32 %v1498, 1.442695
        %v1680 = vpow.pop %v1679
        %v1681 = vmul.f32 %v1499, 1.442695
        %v1682 = vpow.pop %v1681
        %v1683 = vmul.f32 %v1500, 1.442695
        %v1684 = vpow.pop %v1683
        %v1685 = vmul.f32 %v1501, 1.442695
        %v1686 = vpow.pop %v1685
        %v1687 = vmul.f32 %v1502, 1.442695
        %v1688 = vpow.pop %v1687
        %v1689 = vmul.f32 %v1503, 1.442695
        %v1690 = vpow.pop %v1689
        %v1691 = vmul.f32 %v1504, 1.442695
        %v1692 = vpow.pop %v1691
        %v1693 = vmul.f32 %v1505, 1.442695
        %v1694 = vpow.pop %v1693
        %v1695 = vmul.f32 %v1506, 1.442695
        %v1696 = vpow.pop %v1695
        %v1697 = vmul.f32 %v1507, 1.442695
        %v1698 = vpow.pop %v1697
        %v1699 = vmul.f32 %v1508, 1.442695
        %v1700 = vpow.pop %v1699
        %v1701 = vadd.f32 %v1510, 1.0
        %v1702 = vadd.f32 %v1512, 1.0
        %v1703 = vadd.f32 %v1514, 1.0
        %v1704 = vadd.f32 %v1516, 1.0
        %v1705 = vadd.f32 %v1518, 1.0
        %v1706 = vadd.f32 %v1520, 1.0
        %v1707 = vadd.f32 %v1522, 1.0
        %v1708 = vadd.f32 %v1524, 1.0
        %v1709 = vadd.f32 %v1526, 1.0
        %v1710 = vadd.f32 %v1528, 1.0
        %v1711 = vadd.f32 %v1530, 1.0
        %v1712 = vadd.f32 %v1532, 1.0
        %v1713 = vadd.f32 %v1534, 1.0
        %v1714 = vadd.f32 %v1536, 1.0
        %v1715 = vadd.f32 %v1538, 1.0
        %v1716 = vadd.f32 %v1540, 1.0
        %v1717 = vadd.f32 %v1542, 1.0
        %v1718 = vadd.f32 %v1544, 1.0
        %v1719 = vadd.f32 %v1546, 1.0
        %v1720 = vadd.f32 %v1548, 1.0
        %v1721 = vadd.f32 %v1550, 1.0
        %v1722 = vadd.f32 %v1552, 1.0
        %v1723 = vadd.f32 %v1554, 1.0
        %v1724 = vadd.f32 %v1556, 1.0
        %v1725 = vadd.f32 %v1558, 1.0
        %v1726 = vadd.f32 %v1560, 1.0
        %v1727 = vadd.f32 %v1562, 1.0
        %v1728 = vadd.f32 %v1564, 1.0
        %v1729 = vadd.f32 %v1566, 1.0
        %v1730 = vadd.f32 %v1568, 1.0
        %v1731 = vadd.f32 %v1570, 1.0
        %v1732 = vadd.f32 %v1572, 1.0
        %v1733 = vadd.f32 %v1574, 1.0
        %v1734 = vadd.f32 %v1576, 1.0
        %v1735 = vadd.f32 %v1578, 1.0
        %v1736 = vadd.f32 %v1580, 1.0
        %v1737 = vadd.f32 %v1582, 1.0
        %v1738 = vadd.f32 %v1584, 1.0
        %v1739 = vadd.f32 %v1586, 1.0
        %v1740 = vadd.f32 %v1588, 1.0
        %v1741 = vadd.f32 %v1590, 1.0
        %v1742 = vadd.f32 %v1592, 1.0
        %v1743 = vadd.f32 %v1594, 1.0
        %v1744 = vadd.f32 %v1596, 1.0
        %v1745 = vadd.f32 %v1598, 1.0
        %v1746 = vadd.f32 %v1600, 1.0
        %v1747 = vadd.f32 %v1602, 1.0
        %v1748 = vadd.f32 %v1604, 1.0
        %v1749 = vadd.f32 %v1606, 1.0
        %v1750 = vadd.f32 %v1608, 1.0
        %v1751 = vadd.f32 %v1610, 1.0
        %v1752 = vadd.f32 %v1612, 1.0
        %v1753 = vadd.f32 %v1614, 1.0
        %v1754 = vadd.f32 %v1616, 1.0
        %v1755 = vadd.f32 %v1618, 1.0
        %v1756 = vadd.f32 %v1620, 1.0
        %v1757 = vadd.f32 %v1622, 1.0
        %v1758 = vadd.f32 %v1624, 1.0
        %v1759 = vadd.f32 %v1626, 1.0
        %v1760 = vadd.f32 %v1628, 1.0
        %v1761 = vadd.f32 %v1630, 1.0
        %v1762 = vadd.f32 %v1632, 1.0
        %v1763 = vadd.f32 %v1634, 1.0
        %v1764 = vadd.f32 %v1636, 1.0
        %v1765 = vadd.f32 %v1638, 1.0
        %v1766 = vadd.f32 %v1640, 1.0
        %v1767 = vadd.f32 %v1642, 1.0
        %v1768 = vadd.f32 %v1644, 1.0
        %v1769 = vadd.f32 %v1646, 1.0
        %v1770 = vadd.f32 %v1648, 1.0
        %v1771 = vadd.f32 %v1650, 1.0
        %v1772 = vadd.f32 %v1652, 1.0
        %v1773 = vadd.f32 %v1654, 1.0
        %v1774 = vadd.f32 %v1656, 1.0
        %v1775 = vadd.f32 %v1658, 1.0
        %v1776 = vadd.f32 %v1660, 1.0
        %v1777 = vadd.f32 %v1662, 1.0
        %v1778 = vadd.f32 %v1664, 1.0
        %v1779 = vadd.f32 %v1666, 1.0
        %v1780 = vadd.f32 %v1668, 1.0
        %v1781 = vadd.f32 %v1670, 1.0
        %v1782 = vadd.f32 %v1672, 1.0
        %v1783 = vadd.f32 %v1674, 1.0
        %v1784 = vadd.f32 %v1676, 1.0
        %v1785 = vadd.f32 %v1678, 1.0
        %v1786 = vadd.f32 %v1680, 1.0
        %v1787 = vadd.f32 %v1682, 1.0
        %v1788 = vadd.f32 %v1684, 1.0
        %v1789 = vadd.f32 %v1686, 1.0
        %v1790 = vadd.f32 %v1688, 1.0
        %v1791 = vadd.f32 %v1690, 1.0
        %v1792 = vadd.f32 %v1692, 1.0
        %v1793 = vadd.f32 %v1694, 1.0
        %v1794 = vadd.f32 %v1696, 1.0
        %v1795 = vadd.f32 %v1698, 1.0
        %v1796 = vadd.f32 %v1700, 1.0
        %v1797 = vrcp.pop %v1701
        %v1798 = vmul.f32 1.0, %v1797
        %v1799 = vrcp.pop %v1702
        %v1800 = vmul.f32 1.0, %v1799
        %v1801 = vrcp.pop %v1703
        %v1802 = vmul.f32 1.0, %v1801
        %v1803 = vrcp.pop %v1704
        %v1804 = vmul.f32 1.0, %v1803
        %v1805 = vrcp.pop %v1705
        %v1806 = vmul.f32 1.0, %v1805
        %v1807 = vrcp.pop %v1706
        %v1808 = vmul.f32 1.0, %v1807
        %v1809 = vrcp.pop %v1707
        %v1810 = vmul.f32 1.0, %v1809
        %v1811 = vrcp.pop %v1708
        %v1812 = vmul.f32 1.0, %v1811
        %v1813 = vrcp.pop %v1709
        %v1814 = vmul.f32 1.0, %v1813
        %v1815 = vrcp.pop %v1710
        %v1816 = vmul.f32 1.0, %v1815
        %v1817 = vrcp.pop %v1711
        %v1818 = vmul.f32 1.0, %v1817
        %v1819 = vrcp.pop %v1712
        %v1820 = vmul.f32 1.0, %v1819
        %v1821 = vrcp.pop %v1713
        %v1822 = vmul.f32 1.0, %v1821
        %v1823 = vrcp.pop %v1714
        %v1824 = vmul.f32 1.0, %v1823
        %v1825 = vrcp.pop %v1715
        %v1826 = vmul.f32 1.0, %v1825
        %v1827 = vrcp.pop %v1716
        %v1828 = vmul.f32 1.0, %v1827
        %v1829 = vrcp.pop %v1717
        %v1830 = vmul.f32 1.0, %v1829
        %v1831 = vrcp.pop %v1718
        %v1832 = vmul.f32 1.0, %v1831
        %v1833 = vrcp.pop %v1719
        %v1834 = vmul.f32 1.0, %v1833
        %v1835 = vrcp.pop %v1720
        %v1836 = vmul.f32 1.0, %v1835
        %v1837 = vrcp.pop %v1721
        %v1838 = vmul.f32 1.0, %v1837
        %v1839 = vrcp.pop %v1722
        %v1840 = vmul.f32 1.0, %v1839
        %v1841 = vrcp.pop %v1723
        %v1842 = vmul.f32 1.0, %v1841
        %v1843 = vrcp.pop %v1724
        %v1844 = vmul.f32 1.0, %v1843
        %v1845 = vrcp.pop %v1725
        %v1846 = vmul.f32 1.0, %v1845
        %v1847 = vrcp.pop %v1726
        %v1848 = vmul.f32 1.0, %v1847
        %v1849 = vrcp.pop %v1727
        %v1850 = vmul.f32 1.0, %v1849
        %v1851 = vrcp.pop %v1728
        %v1852 = vmul.f32 1.0, %v1851
        %v1853 = vrcp.pop %v1729
        %v1854 = vmul.f32 1.0, %v1853
        %v1855 = vrcp.pop %v1730
        %v1856 = vmul.f32 1.0, %v1855
        %v1857 = vrcp.pop %v1731
        %v1858 = vmul.f32 1.0, %v1857
        %v1859 = vrcp.pop %v1732
        %v1860 = vmul.f32 1.0, %v1859
        %v1861 = vrcp.pop %v1733
        %v1862 = vmul.f32 1.0, %v1861
        %v1863 = vrcp.pop %v1734
        %v1864 = vmul.f32 1.0, %v1863
        %v1865 = vrcp.pop %v1735
        %v1866 = vmul.f32 1.0, %v1865
        %v1867 = vrcp.pop %v1736
        %v1868 = vmul.f32 1.0, %v1867
        %v1869 = vrcp.pop %v1737
        %v1870 = vmul.f32 1.0, %v1869
        %v1871 = vrcp.pop %v1738
        %v1872 = vmul.f32 1.0, %v1871
        %v1873 = vrcp.pop %v1739
        %v1874 = vmul.f32 1.0, %v1873
        %v1875 = vrcp.pop %v1740
        %v1876 = vmul.f32 1.0, %v1875
        %v1877 = vrcp.pop %v1741
        %v1878 = vmul.f32 1.0, %v1877
        %v1879 = vrcp.pop %v1742
        %v1880 = vmul.f32 1.0, %v1879
        %v1881 = vrcp.pop %v1743
        %v1882 = vmul.f32 1.0, %v1881
        %v1883 = vrcp.pop %v1744
        %v1884 = vmul.f32 1.0, %v1883
        %v1885 = vrcp.pop %v1745
        %v1886 = vmul.f32 1.0, %v1885
        %v1887 = vrcp.pop %v1746
        %v1888 = vmul.f32 1.0, %v1887
        %v1889 = vrcp.pop %v1747
        %v1890 = vmul.f32 1.0, %v1889
        %v1891 = vrcp.pop %v1748
        %v1892 = vmul.f32 1.0, %v1891
        %v1893 = vrcp.pop %v1749
        %v1894 = vmul.f32 1.0, %v1893
        %v1895 = vrcp.pop %v1750
        %v1896 = vmul.f32 1.0, %v1895
        %v1897 = vrcp.pop %v1751
        %v1898 = vmul.f32 1.0, %v1897
        %v1899 = vrcp.pop %v1752
        %v1900 = vmul.f32 1.0, %v1899
        %v1901 = vrcp.pop %v1753
        %v1902 = vmul.f32 1.0, %v1901
        %v1903 = vrcp.pop %v1754
        %v1904 = vmul.f32 1.0, %v1903
        %v1905 = vrcp.pop %v1755
        %v1906 = vmul.f32 1.0, %v1905
        %v1907 = vrcp.pop %v1756
        %v1908 = vmul.f32 1.0, %v1907
        %v1909 = vrcp.pop %v1757
        %v1910 = vmul.f32 1.0, %v1909
        %v1911 = vrcp.pop %v1758
        %v1912 = vmul.f32 1.0, %v1911
        %v1913 = vrcp.pop %v1759
        %v1914 = vmul.f32 1.0, %v1913
        %v1915 = vrcp.pop %v1760
        %v1916 = vmul.f32 1.0, %v1915
        %v1917 = vrcp.pop %v1761
        %v1918 = vmul.f32 1.0, %v1917
        %v1919 = vrcp.pop %v1762
        %v1920 = vmul.f32 1.0, %v1919
        %v1921 = vrcp.pop %v1763
        %v1922 = vmul.f32 1.0, %v1921
        %v1923 = vrcp.pop %v1764
        %v1924 = vmul.f32 1.0, %v1923
        %v1925 = vrcp.pop %v1765
        %v1926 = vmul.f32 1.0, %v1925
        %v1927 = vrcp.pop %v1766
        %v1928 = vmul.f32 1.0, %v1927
        %v1929 = vrcp.pop %v1767
        %v1930 = vmul.f32 1.0, %v1929
        %v1931 = vrcp.pop %v1768
        %v1932 = vmul.f32 1.0, %v1931
        %v1933 = vrcp.pop %v1769
        %v1934 = vmul.f32 1.0, %v1933
        %v1935 = vrcp.pop %v1770
        %v1936 = vmul.f32 1.0, %v1935
        %v1937 = vrcp.pop %v1771
        %v1938 = vmul.f32 1.0, %v1937
        %v1939 = vrcp.pop %v1772
        %v1940 = vmul.f32 1.0, %v1939
        %v1941 = vrcp.pop %v1773
        %v1942 = vmul.f32 1.0, %v1941
        %v1943 = vrcp.pop %v1774
        %v1944 = vmul.f32 1.0, %v1943
        %v1945 = vrcp.pop %v1775
        %v1946 = vmul.f32 1.0, %v1945
        %v1947 = vrcp.pop %v1776
        %v1948 = vmul.f32 1.0, %v1947
        %v1949 = vrcp.pop %v1777
        %v1950 = vmul.f32 1.0, %v1949
        %v1951 = vrcp.pop %v1778
        %v1952 = vmul.f32 1.0, %v1951
        %v1953 = vrcp.pop %v1779
        %v1954 = vmul.f32 1.0, %v1953
        %v1955 = vrcp.pop %v1780
        %v1956 = vmul.f32 1.0, %v1955
        %v1957 = vrcp.pop %v1781
        %v1958 = vmul.f32 1.0, %v1957
        %v1959 = vrcp.pop %v1782
        %v1960 = vmul.f32 1.0, %v1959
        %v1961 = vrcp.pop %v1783
        %v1962 = vmul.f32 1.0, %v1961
        %v1963 = vrcp.pop %v1784
        %v1964 = vmul.f32 1.0, %v1963
        %v1965 = vrcp.pop %v1785
        %v1966 = vmul.f32 1.0, %v1965
        %v1967 = vrcp.pop %v1786
        %v1968 = vmul.f32 1.0, %v1967
        %v1969 = vrcp.pop %v1787
        %v1970 = vmul.f32 1.0, %v1969
        %v1971 = vrcp.pop %v1788
        %v1972 = vmul.f32 1.0, %v1971
        %v1973 = vrcp.pop %v1789
        %v1974 = vmul.f32 1.0, %v1973
        %v1975 = vrcp.pop %v1790
        %v1976 = vmul.f32 1.0, %v1975
        %v1977 = vrcp.pop %v1791
        %v1978 = vmul.f32 1.0, %v1977
        %v1979 = vrcp.pop %v1792
        %v1980 = vmul.f32 1.0, %v1979
        %v1981 = vrcp.pop %v1793
        %v1982 = vmul.f32 1.0, %v1981
        %v1983 = vrcp.pop %v1794
        %v1984 = vmul.f32 1.0, %v1983
        %v1985 = vrcp.pop %v1795
        %v1986 = vmul.f32 1.0, %v1985
        %v1987 = vrcp.pop %v1796
        %v1988 = vmul.f32 1.0, %v1987
        %v1989 = vld [vmem:[%s580] sm:$0xff]
        %v1990 = vld [vmem:[%s580 + $0x8] sm:$0xff]
        %v1991 = vld [vmem:[%s580 + $0x10] sm:$0xff]
        %v1992 = vld [vmem:[%s580 + $0x18] sm:$0xff]
        %v1993 = vld [vmem:[%s580 + $0x20] sm:$0xff]
        %v1994 = vld [vmem:[%s580 + $0x28] sm:$0xff]
        %v1995 = vld [vmem:[%s580 + $0x30] sm:$0xff]
        %v1996 = vld [vmem:[%s580 + $0x38] sm:$0xff]
        %v1997 = vld [vmem:[%s580 + $0x40] sm:$0xff]
        %v1998 = vld [vmem:[%s580 + $0x48] sm:$0xff]
        %v1999 = vld [vmem:[%s580 + $0x50] sm:$0xff]
        %v2000 = vld [vmem:[%s580 + $0x58] sm:$0xff]
        %v2001 = vld [vmem:[%s580 + $0x60] sm:$0xff]
        %v2002 = vld [vmem:[%s580 + $0x68] sm:$0xff]
        %v2003 = vld [vmem:[%s580 + $0x70] sm:$0xff]
        %v2004 = vld [vmem:[%s580 + $0x78] sm:$0xff]
        %v2005 = vld [vmem:[%s580 + $0x80] sm:$0xff]
        %v2006 = vld [vmem:[%s580 + $0x88] sm:$0xff]
        %v2007 = vld [vmem:[%s580 + $0x90] sm:$0xff]
        %v2008 = vld [vmem:[%s580 + $0x98] sm:$0xff]
        %v2009 = vld [vmem:[%s580 + $0xa0] sm:$0xff]
        %v2010 = vld [vmem:[%s580 + $0xa8] sm:$0xff]
        %v2011 = vld [vmem:[%s580 + $0xb0] sm:$0xff]
        %v2012 = vld [vmem:[%s580 + $0xb8] sm:$0xff]
        %v2013 = vld [vmem:[%s580 + $0xc0] sm:$0xff]
        %v2014 = vld [vmem:[%s580 + $0xc8] sm:$0xff]
        %v2015 = vld [vmem:[%s580 + $0xd0] sm:$0xff]
        %v2016 = vld [vmem:[%s580 + $0xd8] sm:$0xff]
        %v2017 = vld [vmem:[%s580 + $0xe0] sm:$0xff]
        %v2018 = vld [vmem:[%s580 + $0xe8] sm:$0xff]
        %v2019 = vld [vmem:[%s580 + $0xf0] sm:$0xff]
        %v2020 = vld [vmem:[%s580 + $0xf8] sm:$0xff]
        %v2021 = vld [vmem:[%s580 + $0x100] sm:$0xff]
        %v2022 = vld [vmem:[%s580 + $0x108] sm:$0xff]
        %v2023 = vld [vmem:[%s580 + $0x110] sm:$0xff]
        %v2024 = vld [vmem:[%s580 + $0x118] sm:$0xff]
        %v2025 = vld [vmem:[%s580 + $0x120] sm:$0xff]
        %v2026 = vld [vmem:[%s580 + $0x128] sm:$0xff]
        %v2027 = vld [vmem:[%s580 + $0x130] sm:$0xff]
        %v2028 = vld [vmem:[%s580 + $0x138] sm:$0xff]
        %v2029 = vld [vmem:[%s580 + $0x140] sm:$0xff]
        %v2030 = vld [vmem:[%s580 + $0x148] sm:$0xff]
        %v2031 = vld [vmem:[%s580 + $0x150] sm:$0xff]
        %v2032 = vld [vmem:[%s580 + $0x158] sm:$0xff]
        %v2033 = vld [vmem:[%s580 + $0x160] sm:$0xff]
        %v2034 = vld [vmem:[%s580 + $0x168] sm:$0xff]
        %v2035 = vld [vmem:[%s580 + $0x170] sm:$0xff]
        %v2036 = vld [vmem:[%s580 + $0x178] sm:$0xff]
        %v2037 = vld [vmem:[%s580 + $0x180] sm:$0xff]
        %v2038 = vld [vmem:[%s580 + $0x188] sm:$0xff]
        %v2039 = vld [vmem:[%s580 + $0x190] sm:$0xff]
        %v2040 = vld [vmem:[%s580 + $0x198] sm:$0xff]
        %v2041 = vld [vmem:[%s580 + $0x1a0] sm:$0xff]
        %v2042 = vld [vmem:[%s580 + $0x1a8] sm:$0xff]
        %v2043 = vld [vmem:[%s580 + $0x1b0] sm:$0xff]
        %v2044 = vld [vmem:[%s580 + $0x1b8] sm:$0xff]
        %v2045 = vld [vmem:[%s580 + $0x1c0] sm:$0xff]
        %v2046 = vld [vmem:[%s580 + $0x1c8] sm:$0xff]
        %v2047 = vld [vmem:[%s580 + $0x1d0] sm:$0xff]
        %v2048 = vld [vmem:[%s580 + $0x1d8] sm:$0xff]
        %v2049 = vld [vmem:[%s580 + $0x1e0] sm:$0xff]
        %v2050 = vld [vmem:[%s580 + $0x1e8] sm:$0xff]
        %v2051 = vld [vmem:[%s580 + $0x1f0] sm:$0xff]
        %v2052 = vld [vmem:[%s580 + $0x1f8] sm:$0xff]
        %v2053 = vld [vmem:[%s580 + $0x200] sm:$0xff]
        %v2054 = vld [vmem:[%s580 + $0x208] sm:$0xff]
        %v2055 = vld [vmem:[%s580 + $0x210] sm:$0xff]
        %v2056 = vld [vmem:[%s580 + $0x218] sm:$0xff]
        %v2057 = vld [vmem:[%s580 + $0x220] sm:$0xff]
        %v2058 = vld [vmem:[%s580 + $0x228] sm:$0xff]
        %v2059 = vld [vmem:[%s580 + $0x230] sm:$0xff]
        %v2060 = vld [vmem:[%s580 + $0x238] sm:$0xff]
        %v2061 = vld [vmem:[%s580 + $0x240] sm:$0xff]
        %v2062 = vld [vmem:[%s580 + $0x248] sm:$0xff]
        %v2063 = vld [vmem:[%s580 + $0x250] sm:$0xff]
        %v2064 = vld [vmem:[%s580 + $0x258] sm:$0xff]
        %v2065 = vld [vmem:[%s580 + $0x260] sm:$0xff]
        %v2066 = vld [vmem:[%s580 + $0x268] sm:$0xff]
        %v2067 = vld [vmem:[%s580 + $0x270] sm:$0xff]
        %v2068 = vld [vmem:[%s580 + $0x278] sm:$0xff]
        %v2069 = vld [vmem:[%s580 + $0x280] sm:$0xff]
        %v2070 = vld [vmem:[%s580 + $0x288] sm:$0xff]
        %v2071 = vld [vmem:[%s580 + $0x290] sm:$0xff]
        %v2072 = vld [vmem:[%s580 + $0x298] sm:$0xff]
        %v2073 = vld [vmem:[%s580 + $0x2a0] sm:$0xff]
        %v2074 = vld [vmem:[%s580 + $0x2a8] sm:$0xff]
        %v2075 = vld [vmem:[%s580 + $0x2b0] sm:$0xff]
        %v2076 = vld [vmem:[%s580 + $0x2b8] sm:$0xff]
        %v2077 = vld [vmem:[%s580 + $0x2c0] sm:$0xff]
        %v2078 = vld [vmem:[%s580 + $0x2c8] sm:$0xff]
        %v2079 = vld [vmem:[%s580 + $0x2d0] sm:$0xff]
        %v2080 = vld [vmem:[%s580 + $0x2d8] sm:$0xff]
        %v2081 = vld [vmem:[%s580 + $0x2e0] sm:$0xff]
        %v2082 = vld [vmem:[%s580 + $0x2e8] sm:$0xff]
        %v2083 = vld [vmem:[%s580 + $0x2f0] sm:$0xff]
        %v2084 = vld [vmem:[%s580 + $0x2f8] sm:$0xff]
        %2086 = vset.pattern.permute.xlu0 0
        %2087 = vperm.xlu0 %2086, %v1798
        %v2088 = vpop.permute.xlu0 %2087
        %2091 = vset.pattern.permute.xlu0 0
        %2092 = vperm.xlu0 %2091, %v1800
        %v2093 = vpop.permute.xlu0 %2092
        %2096 = vset.pattern.permute.xlu0 0
        %2097 = vperm.xlu0 %2096, %v1802
        %v2098 = vpop.permute.xlu0 %2097
        %2101 = vset.pattern.permute.xlu0 0
        %2102 = vperm.xlu0 %2101, %v1804
        %v2103 = vpop.permute.xlu0 %2102
        %2106 = vset.pattern.permute.xlu0 0
        %2107 = vperm.xlu0 %2106, %v1806
        %v2108 = vpop.permute.xlu0 %2107
        %2111 = vset.pattern.permute.xlu0 0
        %2112 = vperm.xlu0 %2111, %v1808
        %v2113 = vpop.permute.xlu0 %2112
        %2116 = vset.pattern.permute.xlu0 0
        %2117 = vperm.xlu0 %2116, %v1810
        %v2118 = vpop.permute.xlu0 %2117
        %2121 = vset.pattern.permute.xlu0 0
        %2122 = vperm.xlu0 %2121, %v1812
        %v2123 = vpop.permute.xlu0 %2122
        %2126 = vset.pattern.permute.xlu0 0
        %2127 = vperm.xlu0 %2126, %v1814
        %v2128 = vpop.permute.xlu0 %2127
        %2131 = vset.pattern.permute.xlu0 0
        %2132 = vperm.xlu0 %2131, %v1816
        %v2133 = vpop.permute.xlu0 %2132
        %2136 = vset.pattern.permute.xlu0 0
        %2137 = vperm.xlu0 %2136, %v1818
        %v2138 = vpop.permute.xlu0 %2137
        %2141 = vset.pattern.permute.xlu0 0
        %2142 = vperm.xlu0 %2141, %v1820
        %v2143 = vpop.permute.xlu0 %2142
        %2146 = vset.pattern.permute.xlu0 0
        %2147 = vperm.xlu0 %2146, %v1822
        %v2148 = vpop.permute.xlu0 %2147
        %2151 = vset.pattern.permute.xlu0 0
        %2152 = vperm.xlu0 %2151, %v1824
        %v2153 = vpop.permute.xlu0 %2152
        %2156 = vset.pattern.permute.xlu0 0
        %2157 = vperm.xlu0 %2156, %v1826
        %v2158 = vpop.permute.xlu0 %2157
        %2161 = vset.pattern.permute.xlu0 0
        %2162 = vperm.xlu0 %2161, %v1828
        %v2163 = vpop.permute.xlu0 %2162
        %2166 = vset.pattern.permute.xlu0 0
        %2167 = vperm.xlu0 %2166, %v1830
        %v2168 = vpop.permute.xlu0 %2167
        %2171 = vset.pattern.permute.xlu0 0
        %2172 = vperm.xlu0 %2171, %v1832
        %v2173 = vpop.permute.xlu0 %2172
        %2176 = vset.pattern.permute.xlu0 0
        %2177 = vperm.xlu0 %2176, %v1834
        %v2178 = vpop.permute.xlu0 %2177
        %2181 = vset.pattern.permute.xlu0 0
        %2182 = vperm.xlu0 %2181, %v1836
        %v2183 = vpop.permute.xlu0 %2182
        %2186 = vset.pattern.permute.xlu0 0
        %2187 = vperm.xlu0 %2186, %v1838
        %v2188 = vpop.permute.xlu0 %2187
        %2191 = vset.pattern.permute.xlu0 0
        %2192 = vperm.xlu0 %2191, %v1840
        %v2193 = vpop.permute.xlu0 %2192
        %2196 = vset.pattern.permute.xlu0 0
        %2197 = vperm.xlu0 %2196, %v1842
        %v2198 = vpop.permute.xlu0 %2197
        %2201 = vset.pattern.permute.xlu0 0
        %2202 = vperm.xlu0 %2201, %v1844
        %v2203 = vpop.permute.xlu0 %2202
        %2206 = vset.pattern.permute.xlu0 0
        %2207 = vperm.xlu0 %2206, %v1846
        %v2208 = vpop.permute.xlu0 %2207
        %2211 = vset.pattern.permute.xlu0 0
        %2212 = vperm.xlu0 %2211, %v1848
        %v2213 = vpop.permute.xlu0 %2212
        %2216 = vset.pattern.permute.xlu0 0
        %2217 = vperm.xlu0 %2216, %v1850
        %v2218 = vpop.permute.xlu0 %2217
        %2221 = vset.pattern.permute.xlu0 0
        %2222 = vperm.xlu0 %2221, %v1852
        %v2223 = vpop.permute.xlu0 %2222
        %2226 = vset.pattern.permute.xlu0 0
        %2227 = vperm.xlu0 %2226, %v1854
        %v2228 = vpop.permute.xlu0 %2227
        %2231 = vset.pattern.permute.xlu0 0
        %2232 = vperm.xlu0 %2231, %v1856
        %v2233 = vpop.permute.xlu0 %2232
        %2236 = vset.pattern.permute.xlu0 0
        %2237 = vperm.xlu0 %2236, %v1858
        %v2238 = vpop.permute.xlu0 %2237
        %2241 = vset.pattern.permute.xlu0 0
        %2242 = vperm.xlu0 %2241, %v1860
        %v2243 = vpop.permute.xlu0 %2242
        %2246 = vset.pattern.permute.xlu0 0
        %2247 = vperm.xlu0 %2246, %v1862
        %v2248 = vpop.permute.xlu0 %2247
        %2251 = vset.pattern.permute.xlu0 0
        %2252 = vperm.xlu0 %2251, %v1864
        %v2253 = vpop.permute.xlu0 %2252
        %2256 = vset.pattern.permute.xlu0 0
        %2257 = vperm.xlu0 %2256, %v1866
        %v2258 = vpop.permute.xlu0 %2257
        %2261 = vset.pattern.permute.xlu0 0
        %2262 = vperm.xlu0 %2261, %v1868
        %v2263 = vpop.permute.xlu0 %2262
        %2266 = vset.pattern.permute.xlu0 0
        %2267 = vperm.xlu0 %2266, %v1870
        %v2268 = vpop.permute.xlu0 %2267
        %2271 = vset.pattern.permute.xlu0 0
        %2272 = vperm.xlu0 %2271, %v1872
        %v2273 = vpop.permute.xlu0 %2272
        %2276 = vset.pattern.permute.xlu0 0
        %2277 = vperm.xlu0 %2276, %v1874
        %v2278 = vpop.permute.xlu0 %2277
        %2281 = vset.pattern.permute.xlu0 0
        %2282 = vperm.xlu0 %2281, %v1876
        %v2283 = vpop.permute.xlu0 %2282
        %2286 = vset.pattern.permute.xlu0 0
        %2287 = vperm.xlu0 %2286, %v1878
        %v2288 = vpop.permute.xlu0 %2287
        %2291 = vset.pattern.permute.xlu0 0
        %2292 = vperm.xlu0 %2291, %v1880
        %v2293 = vpop.permute.xlu0 %2292
        %2296 = vset.pattern.permute.xlu0 0
        %2297 = vperm.xlu0 %2296, %v1882
        %v2298 = vpop.permute.xlu0 %2297
        %2301 = vset.pattern.permute.xlu0 0
        %2302 = vperm.xlu0 %2301, %v1884
        %v2303 = vpop.permute.xlu0 %2302
        %2306 = vset.pattern.permute.xlu0 0
        %2307 = vperm.xlu0 %2306, %v1886
        %v2308 = vpop.permute.xlu0 %2307
        %2311 = vset.pattern.permute.xlu0 0
        %2312 = vperm.xlu0 %2311, %v1888
        %v2313 = vpop.permute.xlu0 %2312
        %2316 = vset.pattern.permute.xlu0 0
        %2317 = vperm.xlu0 %2316, %v1890
        %v2318 = vpop.permute.xlu0 %2317
        %2321 = vset.pattern.permute.xlu0 0
        %2322 = vperm.xlu0 %2321, %v1892
        %v2323 = vpop.permute.xlu0 %2322
        %2326 = vset.pattern.permute.xlu0 0
        %2327 = vperm.xlu0 %2326, %v1894
        %v2328 = vpop.permute.xlu0 %2327
        %2331 = vset.pattern.permute.xlu0 0
        %2332 = vperm.xlu0 %2331, %v1896
        %v2333 = vpop.permute.xlu0 %2332
        %2336 = vset.pattern.permute.xlu0 0
        %2337 = vperm.xlu0 %2336, %v1898
        %v2338 = vpop.permute.xlu0 %2337
        %2341 = vset.pattern.permute.xlu0 0
        %2342 = vperm.xlu0 %2341, %v1900
        %v2343 = vpop.permute.xlu0 %2342
        %2346 = vset.pattern.permute.xlu0 0
        %2347 = vperm.xlu0 %2346, %v1902
        %v2348 = vpop.permute.xlu0 %2347
        %2351 = vset.pattern.permute.xlu0 0
        %2352 = vperm.xlu0 %2351, %v1904
        %v2353 = vpop.permute.xlu0 %2352
        %2356 = vset.pattern.permute.xlu0 0
        %2357 = vperm.xlu0 %2356, %v1906
        %v2358 = vpop.permute.xlu0 %2357
        %2361 = vset.pattern.permute.xlu0 0
        %2362 = vperm.xlu0 %2361, %v1908
        %v2363 = vpop.permute.xlu0 %2362
        %2366 = vset.pattern.permute.xlu0 0
        %2367 = vperm.xlu0 %2366, %v1910
        %v2368 = vpop.permute.xlu0 %2367
        %2371 = vset.pattern.permute.xlu0 0
        %2372 = vperm.xlu0 %2371, %v1912
        %v2373 = vpop.permute.xlu0 %2372
        %2376 = vset.pattern.permute.xlu0 0
        %2377 = vperm.xlu0 %2376, %v1914
        %v2378 = vpop.permute.xlu0 %2377
        %2381 = vset.pattern.permute.xlu0 0
        %2382 = vperm.xlu0 %2381, %v1916
        %v2383 = vpop.permute.xlu0 %2382
        %2386 = vset.pattern.permute.xlu0 0
        %2387 = vperm.xlu0 %2386, %v1918
        %v2388 = vpop.permute.xlu0 %2387
        %2391 = vset.pattern.permute.xlu0 0
        %2392 = vperm.xlu0 %2391, %v1920
        %v2393 = vpop.permute.xlu0 %2392
        %2396 = vset.pattern.permute.xlu0 0
        %2397 = vperm.xlu0 %2396, %v1922
        %v2398 = vpop.permute.xlu0 %2397
        %2401 = vset.pattern.permute.xlu0 0
        %2402 = vperm.xlu0 %2401, %v1924
        %v2403 = vpop.permute.xlu0 %2402
        %2406 = vset.pattern.permute.xlu0 0
        %2407 = vperm.xlu0 %2406, %v1926
        %v2408 = vpop.permute.xlu0 %2407
        %2411 = vset.pattern.permute.xlu0 0
        %2412 = vperm.xlu0 %2411, %v1928
        %v2413 = vpop.permute.xlu0 %2412
        %2416 = vset.pattern.permute.xlu0 0
        %2417 = vperm.xlu0 %2416, %v1930
        %v2418 = vpop.permute.xlu0 %2417
        %2421 = vset.pattern.permute.xlu0 0
        %2422 = vperm.xlu0 %2421, %v1932
        %v2423 = vpop.permute.xlu0 %2422
        %2426 = vset.pattern.permute.xlu0 0
        %2427 = vperm.xlu0 %2426, %v1934
        %v2428 = vpop.permute.xlu0 %2427
        %2431 = vset.pattern.permute.xlu0 0
        %2432 = vperm.xlu0 %2431, %v1936
        %v2433 = vpop.permute.xlu0 %2432
        %2436 = vset.pattern.permute.xlu0 0
        %2437 = vperm.xlu0 %2436, %v1938
        %v2438 = vpop.permute.xlu0 %2437
        %2441 = vset.pattern.permute.xlu0 0
        %2442 = vperm.xlu0 %2441, %v1940
        %v2443 = vpop.permute.xlu0 %2442
        %2446 = vset.pattern.permute.xlu0 0
        %2447 = vperm.xlu0 %2446, %v1942
        %v2448 = vpop.permute.xlu0 %2447
        %2451 = vset.pattern.permute.xlu0 0
        %2452 = vperm.xlu0 %2451, %v1944
        %v2453 = vpop.permute.xlu0 %2452
        %2456 = vset.pattern.permute.xlu0 0
        %2457 = vperm.xlu0 %2456, %v1946
        %v2458 = vpop.permute.xlu0 %2457
        %2461 = vset.pattern.permute.xlu0 0
        %2462 = vperm.xlu0 %2461, %v1948
        %v2463 = vpop.permute.xlu0 %2462
        %2466 = vset.pattern.permute.xlu0 0
        %2467 = vperm.xlu0 %2466, %v1950
        %v2468 = vpop.permute.xlu0 %2467
        %2471 = vset.pattern.permute.xlu0 0
        %2472 = vperm.xlu0 %2471, %v1952
        %v2473 = vpop.permute.xlu0 %2472
        %2476 = vset.pattern.permute.xlu0 0
        %2477 = vperm.xlu0 %2476, %v1954
        %v2478 = vpop.permute.xlu0 %2477
        %2481 = vset.pattern.permute.xlu0 0
        %2482 = vperm.xlu0 %2481, %v1956
        %v2483 = vpop.permute.xlu0 %2482
        %2486 = vset.pattern.permute.xlu0 0
        %2487 = vperm.xlu0 %2486, %v1958
        %v2488 = vpop.permute.xlu0 %2487
        %2491 = vset.pattern.permute.xlu0 0
        %2492 = vperm.xlu0 %2491, %v1960
        %v2493 = vpop.permute.xlu0 %2492
        %2496 = vset.pattern.permute.xlu0 0
        %2497 = vperm.xlu0 %2496, %v1962
        %v2498 = vpop.permute.xlu0 %2497
        %2501 = vset.pattern.permute.xlu0 0
        %2502 = vperm.xlu0 %2501, %v1964
        %v2503 = vpop.permute.xlu0 %2502
        %2506 = vset.pattern.permute.xlu0 0
        %2507 = vperm.xlu0 %2506, %v1966
        %v2508 = vpop.permute.xlu0 %2507
        %2511 = vset.pattern.permute.xlu0 0
        %2512 = vperm.xlu0 %2511, %v1968
        %v2513 = vpop.permute.xlu0 %2512
        %2516 = vset.pattern.permute.xlu0 0
        %2517 = vperm.xlu0 %2516, %v1970
        %v2518 = vpop.permute.xlu0 %2517
        %2521 = vset.pattern.permute.xlu0 0
        %2522 = vperm.xlu0 %2521, %v1972
        %v2523 = vpop.permute.xlu0 %2522
        %2526 = vset.pattern.permute.xlu0 0
        %2527 = vperm.xlu0 %2526, %v1974
        %v2528 = vpop.permute.xlu0 %2527
        %2531 = vset.pattern.permute.xlu0 0
        %2532 = vperm.xlu0 %2531, %v1976
        %v2533 = vpop.permute.xlu0 %2532
        %2536 = vset.pattern.permute.xlu0 0
        %2537 = vperm.xlu0 %2536, %v1978
        %v2538 = vpop.permute.xlu0 %2537
        %2541 = vset.pattern.permute.xlu0 0
        %2542 = vperm.xlu0 %2541, %v1980
        %v2543 = vpop.permute.xlu0 %2542
        %2546 = vset.pattern.permute.xlu0 0
        %2547 = vperm.xlu0 %2546, %v1982
        %v2548 = vpop.permute.xlu0 %2547
        %2551 = vset.pattern.permute.xlu0 0
        %2552 = vperm.xlu0 %2551, %v1984
        %v2553 = vpop.permute.xlu0 %2552
        %2556 = vset.pattern.permute.xlu0 0
        %2557 = vperm.xlu0 %2556, %v1986
        %v2558 = vpop.permute.xlu0 %2557
        %2561 = vset.pattern.permute.xlu0 0
        %2562 = vperm.xlu0 %2561, %v1988
        %v2563 = vpop.permute.xlu0 %2562
        %v2565 = vmul.f32 %v1989, %v2088
        %v2566 = vmul.f32 %v1990, %v2093
        %v2567 = vmul.f32 %v1991, %v2098
        %v2568 = vmul.f32 %v1992, %v2103
        %v2569 = vmul.f32 %v1993, %v2108
        %v2570 = vmul.f32 %v1994, %v2113
        %v2571 = vmul.f32 %v1995, %v2118
        %v2572 = vmul.f32 %v1996, %v2123
        %v2573 = vmul.f32 %v1997, %v2128
        %v2574 = vmul.f32 %v1998, %v2133
        %v2575 = vmul.f32 %v1999, %v2138
        %v2576 = vmul.f32 %v2000, %v2143
        %v2577 = vmul.f32 %v2001, %v2148
        %v2578 = vmul.f32 %v2002, %v2153
        %v2579 = vmul.f32 %v2003, %v2158
        %v2580 = vmul.f32 %v2004, %v2163
        %v2581 = vmul.f32 %v2005, %v2168
        %v2582 = vmul.f32 %v2006, %v2173
        %v2583 = vmul.f32 %v2007, %v2178
        %v2584 = vmul.f32 %v2008, %v2183
        %v2585 = vmul.f32 %v2009, %v2188
        %v2586 = vmul.f32 %v2010, %v2193
        %v2587 = vmul.f32 %v2011, %v2198
        %v2588 = vmul.f32 %v2012, %v2203
        %v2589 = vmul.f32 %v2013, %v2208
        %v2590 = vmul.f32 %v2014, %v2213
        %v2591 = vmul.f32 %v2015, %v2218
        %v2592 = vmul.f32 %v2016, %v2223
        %v2593 = vmul.f32 %v2017, %v2228
        %v2594 = vmul.f32 %v2018, %v2233
        %v2595 = vmul.f32 %v2019, %v2238
        %v2596 = vmul.f32 %v2020, %v2243
        %v2597 = vmul.f32 %v2021, %v2248
        %v2598 = vmul.f32 %v2022, %v2253
        %v2599 = vmul.f32 %v2023, %v2258
        %v2600 = vmul.f32 %v2024, %v2263
        %v2601 = vmul.f32 %v2025, %v2268
        %v2602 = vmul.f32 %v2026, %v2273
        %v2603 = vmul.f32 %v2027, %v2278
        %v2604 = vmul.f32 %v2028, %v2283
        %v2605 = vmul.f32 %v2029, %v2288
        %v2606 = vmul.f32 %v2030, %v2293
        %v2607 = vmul.f32 %v2031, %v2298
        %v2608 = vmul.f32 %v2032, %v2303
        %v2609 = vmul.f32 %v2033, %v2308
        %v2610 = vmul.f32 %v2034, %v2313
        %v2611 = vmul.f32 %v2035, %v2318
        %v2612 = vmul.f32 %v2036, %v2323
        %v2613 = vmul.f32 %v2037, %v2328
        %v2614 = vmul.f32 %v2038, %v2333
        %v2615 = vmul.f32 %v2039, %v2338
        %v2616 = vmul.f32 %v2040, %v2343
        %v2617 = vmul.f32 %v2041, %v2348
        %v2618 = vmul.f32 %v2042, %v2353
        %v2619 = vmul.f32 %v2043, %v2358
        %v2620 = vmul.f32 %v2044, %v2363
        %v2621 = vmul.f32 %v2045, %v2368
        %v2622 = vmul.f32 %v2046, %v2373
        %v2623 = vmul.f32 %v2047, %v2378
        %v2624 = vmul.f32 %v2048, %v2383
        %v2625 = vmul.f32 %v2049, %v2388
        %v2626 = vmul.f32 %v2050, %v2393
        %v2627 = vmul.f32 %v2051, %v2398
        %v2628 = vmul.f32 %v2052, %v2403
        %v2629 = vmul.f32 %v2053, %v2408
        %v2630 = vmul.f32 %v2054, %v2413
        %v2631 = vmul.f32 %v2055, %v2418
        %v2632 = vmul.f32 %v2056, %v2423
        %v2633 = vmul.f32 %v2057, %v2428
        %v2634 = vmul.f32 %v2058, %v2433
        %v2635 = vmul.f32 %v2059, %v2438
        %v2636 = vmul.f32 %v2060, %v2443
        %v2637 = vmul.f32 %v2061, %v2448
        %v2638 = vmul.f32 %v2062, %v2453
        %v2639 = vmul.f32 %v2063, %v2458
        %v2640 = vmul.f32 %v2064, %v2463
        %v2641 = vmul.f32 %v2065, %v2468
        %v2642 = vmul.f32 %v2066, %v2473
        %v2643 = vmul.f32 %v2067, %v2478
        %v2644 = vmul.f32 %v2068, %v2483
        %v2645 = vmul.f32 %v2069, %v2488
        %v2646 = vmul.f32 %v2070, %v2493
        %v2647 = vmul.f32 %v2071, %v2498
        %v2648 = vmul.f32 %v2072, %v2503
        %v2649 = vmul.f32 %v2073, %v2508
        %v2650 = vmul.f32 %v2074, %v2513
        %v2651 = vmul.f32 %v2075, %v2518
        %v2652 = vmul.f32 %v2076, %v2523
        %v2653 = vmul.f32 %v2077, %v2528
        %v2654 = vmul.f32 %v2078, %v2533
        %v2655 = vmul.f32 %v2079, %v2538
        %v2656 = vmul.f32 %v2080, %v2543
        %v2657 = vmul.f32 %v2081, %v2548
        %v2658 = vmul.f32 %v2082, %v2553
        %v2659 = vmul.f32 %v2083, %v2558
        %v2660 = vmul.f32 %v2084, %v2563
        %v2661 = vpack.c.bf16 %v2566, %v2565
        %v2662 = vpack.c.bf16 %v2568, %v2567
        %v2663 = vpack.c.bf16 %v2570, %v2569
        %v2664 = vpack.c.bf16 %v2572, %v2571
        %v2665 = vpack.c.bf16 %v2574, %v2573
        %v2666 = vpack.c.bf16 %v2576, %v2575
        %v2667 = vpack.c.bf16 %v2578, %v2577
        %v2668 = vpack.c.bf16 %v2580, %v2579
        %v2669 = vpack.c.bf16 %v2582, %v2581
        %v2670 = vpack.c.bf16 %v2584, %v2583
        %v2671 = vpack.c.bf16 %v2586, %v2585
        %v2672 = vpack.c.bf16 %v2588, %v2587
        %v2673 = vpack.c.bf16 %v2590, %v2589
        %v2674 = vpack.c.bf16 %v2592, %v2591
        %v2675 = vpack.c.bf16 %v2594, %v2593
        %v2676 = vpack.c.bf16 %v2596, %v2595
        %v2677 = vpack.c.bf16 %v2598, %v2597
        %v2678 = vpack.c.bf16 %v2600, %v2599
        %v2679 = vpack.c.bf16 %v2602, %v2601
        %v2680 = vpack.c.bf16 %v2604, %v2603
        %v2681 = vpack.c.bf16 %v2606, %v2605
        %v2682 = vpack.c.bf16 %v2608, %v2607
        %v2683 = vpack.c.bf16 %v2610, %v2609
        %v2684 = vpack.c.bf16 %v2612, %v2611
        %v2685 = vpack.c.bf16 %v2614, %v2613
        %v2686 = vpack.c.bf16 %v2616, %v2615
        %v2687 = vpack.c.bf16 %v2618, %v2617
        %v2688 = vpack.c.bf16 %v2620, %v2619
        %v2689 = vpack.c.bf16 %v2622, %v2621
        %v2690 = vpack.c.bf16 %v2624, %v2623
        %v2691 = vpack.c.bf16 %v2626, %v2625
        %v2692 = vpack.c.bf16 %v2628, %v2627
        %v2693 = vpack.c.bf16 %v2630, %v2629
        %v2694 = vpack.c.bf16 %v2632, %v2631
        %v2695 = vpack.c.bf16 %v2634, %v2633
        %v2696 = vpack.c.bf16 %v2636, %v2635
        %v2697 = vpack.c.bf16 %v2638, %v2637
        %v2698 = vpack.c.bf16 %v2640, %v2639
        %v2699 = vpack.c.bf16 %v2642, %v2641
        %v2700 = vpack.c.bf16 %v2644, %v2643
        %v2701 = vpack.c.bf16 %v2646, %v2645
        %v2702 = vpack.c.bf16 %v2648, %v2647
        %v2703 = vpack.c.bf16 %v2650, %v2649
        %v2704 = vpack.c.bf16 %v2652, %v2651
        %v2705 = vpack.c.bf16 %v2654, %v2653
        %v2706 = vpack.c.bf16 %v2656, %v2655
        %v2707 = vpack.c.bf16 %v2658, %v2657
        %v2708 = vpack.c.bf16 %v2660, %v2659
        %v2709 = vld [vmem:[%s5] sm:$0xff]
        %v2710 = vld [vmem:[%s5 + $0x8] sm:$0xff]
        %v2711 = vld [vmem:[%s5 + $0x10] sm:$0xff]
        %v2712 = vld [vmem:[%s5 + $0x18] sm:$0xff]
        %v2713 = vld [vmem:[%s5 + $0x20] sm:$0xff]
        %v2714 = vld [vmem:[%s5 + $0x28] sm:$0xff]
        %v2715 = vld [vmem:[%s5 + $0x30] sm:$0xff]
        %v2716 = vld [vmem:[%s5 + $0x38] sm:$0xff]
        %v2717 = vld [vmem:[%s5 + $0x40] sm:$0xff]
        %v2718 = vld [vmem:[%s5 + $0x48] sm:$0xff]
        %v2719 = vld [vmem:[%s5 + $0x50] sm:$0xff]
        %v2720 = vld [vmem:[%s5 + $0x58] sm:$0xff]
        %v2721 = vld [vmem:[%s5 + $0x60] sm:$0xff]
        %v2722 = vld [vmem:[%s5 + $0x68] sm:$0xff]
        %v2723 = vld [vmem:[%s5 + $0x70] sm:$0xff]
        %v2724 = vld [vmem:[%s5 + $0x78] sm:$0xff]
        %v2725 = vld [vmem:[%s5 + $0x80] sm:$0xff]
        %v2726 = vld [vmem:[%s5 + $0x88] sm:$0xff]
        %v2727 = vld [vmem:[%s5 + $0x90] sm:$0xff]
        %v2728 = vld [vmem:[%s5 + $0x98] sm:$0xff]
        %v2729 = vld [vmem:[%s5 + $0xa0] sm:$0xff]
        %v2730 = vld [vmem:[%s5 + $0xa8] sm:$0xff]
        %v2731 = vld [vmem:[%s5 + $0xb0] sm:$0xff]
        %v2732 = vld [vmem:[%s5 + $0xb8] sm:$0xff]
        %v2733 = vld [vmem:[%s5 + $0xc0] sm:$0xff]
        %v2734 = vld [vmem:[%s5 + $0xc8] sm:$0xff]
        %v2735 = vld [vmem:[%s5 + $0xd0] sm:$0xff]
        %v2736 = vld [vmem:[%s5 + $0xd8] sm:$0xff]
        %v2737 = vld [vmem:[%s5 + $0xe0] sm:$0xff]
        %v2738 = vld [vmem:[%s5 + $0xe8] sm:$0xff]
        %v2739 = vld [vmem:[%s5 + $0xf0] sm:$0xff]
        %v2740 = vld [vmem:[%s5 + $0xf8] sm:$0xff]
        %v2741 = vld [vmem:[%s5 + $0x100] sm:$0xff]
        %v2742 = vld [vmem:[%s5 + $0x108] sm:$0xff]
        %v2743 = vld [vmem:[%s5 + $0x110] sm:$0xff]
        %v2744 = vld [vmem:[%s5 + $0x118] sm:$0xff]
        %v2745 = vld [vmem:[%s5 + $0x120] sm:$0xff]
        %v2746 = vld [vmem:[%s5 + $0x128] sm:$0xff]
        %v2747 = vld [vmem:[%s5 + $0x130] sm:$0xff]
        %v2748 = vld [vmem:[%s5 + $0x138] sm:$0xff]
        %v2749 = vld [vmem:[%s5 + $0x140] sm:$0xff]
        %v2750 = vld [vmem:[%s5 + $0x148] sm:$0xff]
        %v2751 = vld [vmem:[%s5 + $0x150] sm:$0xff]
        %v2752 = vld [vmem:[%s5 + $0x158] sm:$0xff]
        %v2753 = vld [vmem:[%s5 + $0x160] sm:$0xff]
        %v2754 = vld [vmem:[%s5 + $0x168] sm:$0xff]
        %v2755 = vld [vmem:[%s5 + $0x170] sm:$0xff]
        %v2756 = vld [vmem:[%s5 + $0x178] sm:$0xff]
        %v2757 = vld [vmem:[%s529] sm:$0xff]
        %v2758 = vld [vmem:[%s529 + $0x8] sm:$0xff]
        %v2759 = vld [vmem:[%s529 + $0x10] sm:$0xff]
        %v2760 = vld [vmem:[%s529 + $0x18] sm:$0xff]
        %v2761 = vld [vmem:[%s529 + $0x20] sm:$0xff]
        %v2762 = vld [vmem:[%s529 + $0x28] sm:$0xff]
        %v2763 = vld [vmem:[%s529 + $0x30] sm:$0xff]
        %v2764 = vld [vmem:[%s529 + $0x38] sm:$0xff]
        %v2765 = vld [vmem:[%s529 + $0x40] sm:$0xff]
        %v2766 = vld [vmem:[%s529 + $0x48] sm:$0xff]
        %v2767 = vld [vmem:[%s529 + $0x50] sm:$0xff]
        %v2768 = vld [vmem:[%s529 + $0x58] sm:$0xff]
        %v2769 = vld [vmem:[%s529 + $0x60] sm:$0xff]
        %v2770 = vld [vmem:[%s529 + $0x68] sm:$0xff]
        %v2771 = vld [vmem:[%s529 + $0x70] sm:$0xff]
        %v2772 = vld [vmem:[%s529 + $0x78] sm:$0xff]
        %v2773 = vld [vmem:[%s529 + $0x80] sm:$0xff]
        %v2774 = vld [vmem:[%s529 + $0x88] sm:$0xff]
        %v2775 = vld [vmem:[%s529 + $0x90] sm:$0xff]
        %v2776 = vld [vmem:[%s529 + $0x98] sm:$0xff]
        %v2777 = vld [vmem:[%s529 + $0xa0] sm:$0xff]
        %v2778 = vld [vmem:[%s529 + $0xa8] sm:$0xff]
        %v2779 = vld [vmem:[%s529 + $0xb0] sm:$0xff]
        %v2780 = vld [vmem:[%s529 + $0xb8] sm:$0xff]
        %v2781 = vld [vmem:[%s529 + $0xc0] sm:$0xff]
        %v2782 = vld [vmem:[%s529 + $0xc8] sm:$0xff]
        %v2783 = vld [vmem:[%s529 + $0xd0] sm:$0xff]
        %v2784 = vld [vmem:[%s529 + $0xd8] sm:$0xff]
        %v2785 = vld [vmem:[%s529 + $0xe0] sm:$0xff]
        %v2786 = vld [vmem:[%s529 + $0xe8] sm:$0xff]
        %v2787 = vld [vmem:[%s529 + $0xf0] sm:$0xff]
        %v2788 = vld [vmem:[%s529 + $0xf8] sm:$0xff]
        %v2789 = vld [vmem:[%s529 + $0x100] sm:$0xff]
        %v2790 = vld [vmem:[%s529 + $0x108] sm:$0xff]
        %v2791 = vld [vmem:[%s529 + $0x110] sm:$0xff]
        %v2792 = vld [vmem:[%s529 + $0x118] sm:$0xff]
        %v2793 = vld [vmem:[%s529 + $0x120] sm:$0xff]
        %v2794 = vld [vmem:[%s529 + $0x128] sm:$0xff]
        %v2795 = vld [vmem:[%s529 + $0x130] sm:$0xff]
        %v2796 = vld [vmem:[%s529 + $0x138] sm:$0xff]
        %v2797 = vld [vmem:[%s529 + $0x140] sm:$0xff]
        %v2798 = vld [vmem:[%s529 + $0x148] sm:$0xff]
        %v2799 = vld [vmem:[%s529 + $0x150] sm:$0xff]
        %v2800 = vld [vmem:[%s529 + $0x158] sm:$0xff]
        %v2801 = vld [vmem:[%s529 + $0x160] sm:$0xff]
        %v2802 = vld [vmem:[%s529 + $0x168] sm:$0xff]
        %v2803 = vld [vmem:[%s529 + $0x170] sm:$0xff]
        %v2804 = vld [vmem:[%s529 + $0x178] sm:$0xff]
        %v2805 = vld [vmem:[%s529 + $0x180] sm:$0xff]
        %v2806 = vld [vmem:[%s529 + $0x188] sm:$0xff]
        %v2807 = vld [vmem:[%s529 + $0x190] sm:$0xff]
        %v2808 = vld [vmem:[%s529 + $0x198] sm:$0xff]
        %v2809 = vld [vmem:[%s529 + $0x1a0] sm:$0xff]
        %v2810 = vld [vmem:[%s529 + $0x1a8] sm:$0xff]
        %v2811 = vld [vmem:[%s529 + $0x1b0] sm:$0xff]
        %v2812 = vld [vmem:[%s529 + $0x1b8] sm:$0xff]
        %v2813 = vld [vmem:[%s529 + $0x1c0] sm:$0xff]
        %v2814 = vld [vmem:[%s529 + $0x1c8] sm:$0xff]
        %v2815 = vld [vmem:[%s529 + $0x1d0] sm:$0xff]
        %v2816 = vld [vmem:[%s529 + $0x1d8] sm:$0xff]
        %v2817 = vld [vmem:[%s529 + $0x1e0] sm:$0xff]
        %v2818 = vld [vmem:[%s529 + $0x1e8] sm:$0xff]
        %v2819 = vld [vmem:[%s529 + $0x1f0] sm:$0xff]
        %v2820 = vld [vmem:[%s529 + $0x1f8] sm:$0xff]
        %v2821 = vld [vmem:[%s529 + $0x200] sm:$0xff]
        %v2822 = vld [vmem:[%s529 + $0x208] sm:$0xff]
        %v2823 = vld [vmem:[%s529 + $0x210] sm:$0xff]
        %v2824 = vld [vmem:[%s529 + $0x218] sm:$0xff]
        %v2825 = vld [vmem:[%s529 + $0x220] sm:$0xff]
        %v2826 = vld [vmem:[%s529 + $0x228] sm:$0xff]
        %v2827 = vld [vmem:[%s529 + $0x230] sm:$0xff]
        %v2828 = vld [vmem:[%s529 + $0x238] sm:$0xff]
        %v2829 = vld [vmem:[%s529 + $0x240] sm:$0xff]
        %v2830 = vld [vmem:[%s529 + $0x248] sm:$0xff]
        %v2831 = vld [vmem:[%s529 + $0x250] sm:$0xff]
        %v2832 = vld [vmem:[%s529 + $0x258] sm:$0xff]
        %v2833 = vld [vmem:[%s529 + $0x260] sm:$0xff]
        %v2834 = vld [vmem:[%s529 + $0x268] sm:$0xff]
        %v2835 = vld [vmem:[%s529 + $0x270] sm:$0xff]
        %v2836 = vld [vmem:[%s529 + $0x278] sm:$0xff]
        %v2837 = vld [vmem:[%s529 + $0x280] sm:$0xff]
        %v2838 = vld [vmem:[%s529 + $0x288] sm:$0xff]
        %v2839 = vld [vmem:[%s529 + $0x290] sm:$0xff]
        %v2840 = vld [vmem:[%s529 + $0x298] sm:$0xff]
        %v2841 = vld [vmem:[%s529 + $0x2a0] sm:$0xff]
        %v2842 = vld [vmem:[%s529 + $0x2a8] sm:$0xff]
        %v2843 = vld [vmem:[%s529 + $0x2b0] sm:$0xff]
        %v2844 = vld [vmem:[%s529 + $0x2b8] sm:$0xff]
        %v2845 = vld [vmem:[%s529 + $0x2c0] sm:$0xff]
        %v2846 = vld [vmem:[%s529 + $0x2c8] sm:$0xff]
        %v2847 = vld [vmem:[%s529 + $0x2d0] sm:$0xff]
        %v2848 = vld [vmem:[%s529 + $0x2d8] sm:$0xff]
        %v2849 = vld [vmem:[%s529 + $0x2e0] sm:$0xff]
        %v2850 = vld [vmem:[%s529 + $0x2e8] sm:$0xff]
        %v2851 = vld [vmem:[%s529 + $0x2f0] sm:$0xff]
        %v2852 = vld [vmem:[%s529 + $0x2f8] sm:$0xff]
        %v2853 = vld [vmem:[%s529 + $0x300] sm:$0xff]
        %v2854 = vld [vmem:[%s529 + $0x308] sm:$0xff]
        %v2855 = vld [vmem:[%s529 + $0x310] sm:$0xff]
        %v2856 = vld [vmem:[%s529 + $0x318] sm:$0xff]
        %v2857 = vld [vmem:[%s529 + $0x320] sm:$0xff]
        %v2858 = vld [vmem:[%s529 + $0x328] sm:$0xff]
        %v2859 = vld [vmem:[%s529 + $0x330] sm:$0xff]
        %v2860 = vld [vmem:[%s529 + $0x338] sm:$0xff]
        %v2861 = vld [vmem:[%s529 + $0x340] sm:$0xff]
        %v2862 = vld [vmem:[%s529 + $0x348] sm:$0xff]
        %v2863 = vld [vmem:[%s529 + $0x350] sm:$0xff]
        %v2864 = vld [vmem:[%s529 + $0x358] sm:$0xff]
        %v2865 = vld [vmem:[%s529 + $0x360] sm:$0xff]
        %v2866 = vld [vmem:[%s529 + $0x368] sm:$0xff]
        %v2867 = vld [vmem:[%s529 + $0x370] sm:$0xff]
        %v2868 = vld [vmem:[%s529 + $0x378] sm:$0xff]
        %v2869 = vld [vmem:[%s529 + $0x380] sm:$0xff]
        %v2870 = vld [vmem:[%s529 + $0x388] sm:$0xff]
        %v2871 = vld [vmem:[%s529 + $0x390] sm:$0xff]
        %v2872 = vld [vmem:[%s529 + $0x398] sm:$0xff]
        %v2873 = vld [vmem:[%s529 + $0x3a0] sm:$0xff]
        %v2874 = vld [vmem:[%s529 + $0x3a8] sm:$0xff]
        %v2875 = vld [vmem:[%s529 + $0x3b0] sm:$0xff]
        %v2876 = vld [vmem:[%s529 + $0x3b8] sm:$0xff]
        %v2877 = vld [vmem:[%s529 + $0x3c0] sm:$0xff]
        %v2878 = vld [vmem:[%s529 + $0x3c8] sm:$0xff]
        %v2879 = vld [vmem:[%s529 + $0x3d0] sm:$0xff]
        %v2880 = vld [vmem:[%s529 + $0x3d8] sm:$0xff]
        %v2881 = vld [vmem:[%s529 + $0x3e0] sm:$0xff]
        %v2882 = vld [vmem:[%s529 + $0x3e8] sm:$0xff]
        %v2883 = vld [vmem:[%s529 + $0x3f0] sm:$0xff]
        %v2884 = vld [vmem:[%s529 + $0x3f8] sm:$0xff]
        %v2885 = vld [vmem:[%s529 + $0x400] sm:$0xff]
        %v2886 = vld [vmem:[%s529 + $0x408] sm:$0xff]
        %v2887 = vld [vmem:[%s529 + $0x410] sm:$0xff]
        %v2888 = vld [vmem:[%s529 + $0x418] sm:$0xff]
        %v2889 = vld [vmem:[%s529 + $0x420] sm:$0xff]
        %v2890 = vld [vmem:[%s529 + $0x428] sm:$0xff]
        %v2891 = vld [vmem:[%s529 + $0x430] sm:$0xff]
        %v2892 = vld [vmem:[%s529 + $0x438] sm:$0xff]
        %v2893 = vld [vmem:[%s529 + $0x440] sm:$0xff]
        %v2894 = vld [vmem:[%s529 + $0x448] sm:$0xff]
        %v2895 = vld [vmem:[%s529 + $0x450] sm:$0xff]
        %v2896 = vld [vmem:[%s529 + $0x458] sm:$0xff]
        %v2897 = vld [vmem:[%s529 + $0x460] sm:$0xff]
        %v2898 = vld [vmem:[%s529 + $0x468] sm:$0xff]
        %v2899 = vld [vmem:[%s529 + $0x470] sm:$0xff]
        %v2900 = vld [vmem:[%s529 + $0x478] sm:$0xff]
        %v3045 = vunpack.c.l.b16 %v2757
        %v3046 = vunpack.c.h.b16 %v2757
        %v3047 = vunpack.c.l.b16 %v2758
        %v3048 = vunpack.c.h.b16 %v2758
        %v3049 = vunpack.c.l.b16 %v2759
        %v3050 = vunpack.c.h.b16 %v2759
        %v3051 = vunpack.c.l.b16 %v2760
        %v3052 = vunpack.c.h.b16 %v2760
        %v3053 = vunpack.c.l.b16 %v2761
        %v3054 = vunpack.c.h.b16 %v2761
        %v3055 = vunpack.c.l.b16 %v2762
        %v3056 = vunpack.c.h.b16 %v2762
        %v3057 = vunpack.c.l.b16 %v2763
        %v3058 = vunpack.c.h.b16 %v2763
        %v3059 = vunpack.c.l.b16 %v2764
        %v3060 = vunpack.c.h.b16 %v2764
        %v3061 = vunpack.c.l.b16 %v2765
        %v3062 = vunpack.c.h.b16 %v2765
        %v3063 = vunpack.c.l.b16 %v2766
        %v3064 = vunpack.c.h.b16 %v2766
        %v3065 = vunpack.c.l.b16 %v2767
        %v3066 = vunpack.c.h.b16 %v2767
        %v3067 = vunpack.c.l.b16 %v2768
        %v3068 = vunpack.c.h.b16 %v2768
        %v3069 = vunpack.c.l.b16 %v2769
        %v3070 = vunpack.c.h.b16 %v2769
        %v3071 = vunpack.c.l.b16 %v2770
        %v3072 = vunpack.c.h.b16 %v2770
        %v3073 = vunpack.c.l.b16 %v2771
        %v3074 = vunpack.c.h.b16 %v2771
        %v3075 = vunpack.c.l.b16 %v2772
        %v3076 = vunpack.c.h.b16 %v2772
        %v3077 = vunpack.c.l.b16 %v2773
        %v3078 = vunpack.c.h.b16 %v2773
        %v3079 = vunpack.c.l.b16 %v2774
        %v3080 = vunpack.c.h.b16 %v2774
        %v3081 = vunpack.c.l.b16 %v2775
        %v3082 = vunpack.c.h.b16 %v2775
        %v3083 = vunpack.c.l.b16 %v2776
        %v3084 = vunpack.c.h.b16 %v2776
        %v3085 = vunpack.c.l.b16 %v2777
        %v3086 = vunpack.c.h.b16 %v2777
        %v3087 = vunpack.c.l.b16 %v2778
        %v3088 = vunpack.c.h.b16 %v2778
        %v3089 = vunpack.c.l.b16 %v2779
        %v3090 = vunpack.c.h.b16 %v2779
        %v3091 = vunpack.c.l.b16 %v2780
        %v3092 = vunpack.c.h.b16 %v2780
        %v3093 = vunpack.c.l.b16 %v2781
        %v3094 = vunpack.c.h.b16 %v2781
        %v3095 = vunpack.c.l.b16 %v2782
        %v3096 = vunpack.c.h.b16 %v2782
        %v3097 = vunpack.c.l.b16 %v2783
        %v3098 = vunpack.c.h.b16 %v2783
        %v3099 = vunpack.c.l.b16 %v2784
        %v3100 = vunpack.c.h.b16 %v2784
        %v3101 = vunpack.c.l.b16 %v2785
        %v3102 = vunpack.c.h.b16 %v2785
        %v3103 = vunpack.c.l.b16 %v2786
        %v3104 = vunpack.c.h.b16 %v2786
        %v3105 = vunpack.c.l.b16 %v2787
        %v3106 = vunpack.c.h.b16 %v2787
        %v3107 = vunpack.c.l.b16 %v2788
        %v3108 = vunpack.c.h.b16 %v2788
        %v3109 = vunpack.c.l.b16 %v2789
        %v3110 = vunpack.c.h.b16 %v2789
        %v3111 = vunpack.c.l.b16 %v2790
        %v3112 = vunpack.c.h.b16 %v2790
        %v3113 = vunpack.c.l.b16 %v2791
        %v3114 = vunpack.c.h.b16 %v2791
        %v3115 = vunpack.c.l.b16 %v2792
        %v3116 = vunpack.c.h.b16 %v2792
        %v3117 = vunpack.c.l.b16 %v2793
        %v3118 = vunpack.c.h.b16 %v2793
        %v3119 = vunpack.c.l.b16 %v2794
        %v3120 = vunpack.c.h.b16 %v2794
        %v3121 = vunpack.c.l.b16 %v2795
        %v3122 = vunpack.c.h.b16 %v2795
        %v3123 = vunpack.c.l.b16 %v2796
        %v3124 = vunpack.c.h.b16 %v2796
        %v3125 = vunpack.c.l.b16 %v2797
        %v3126 = vunpack.c.h.b16 %v2797
        %v3127 = vunpack.c.l.b16 %v2798
        %v3128 = vunpack.c.h.b16 %v2798
        %v3129 = vunpack.c.l.b16 %v2799
        %v3130 = vunpack.c.h.b16 %v2799
        %v3131 = vunpack.c.l.b16 %v2800
        %v3132 = vunpack.c.h.b16 %v2800
        %v3133 = vunpack.c.l.b16 %v2801
        %v3134 = vunpack.c.h.b16 %v2801
        %v3135 = vunpack.c.l.b16 %v2802
        %v3136 = vunpack.c.h.b16 %v2802
        %v3137 = vunpack.c.l.b16 %v2803
        %v3138 = vunpack.c.h.b16 %v2803
        %v3139 = vunpack.c.l.b16 %v2804
        %v3140 = vunpack.c.h.b16 %v2804
        %v3141 = vunpack.c.l.b16 %v2805
        %v3142 = vunpack.c.h.b16 %v2805
        %v3143 = vunpack.c.l.b16 %v2806
        %v3144 = vunpack.c.h.b16 %v2806
        %v3145 = vunpack.c.l.b16 %v2807
        %v3146 = vunpack.c.h.b16 %v2807
        %v3147 = vunpack.c.l.b16 %v2808
        %v3148 = vunpack.c.h.b16 %v2808
        %v3149 = vunpack.c.l.b16 %v2809
        %v3150 = vunpack.c.h.b16 %v2809
        %v3151 = vunpack.c.l.b16 %v2810
        %v3152 = vunpack.c.h.b16 %v2810
        %v3153 = vunpack.c.l.b16 %v2811
        %v3154 = vunpack.c.h.b16 %v2811
        %v3155 = vunpack.c.l.b16 %v2812
        %v3156 = vunpack.c.h.b16 %v2812
        %v3157 = vunpack.c.l.b16 %v2813
        %v3158 = vunpack.c.h.b16 %v2813
        %v3159 = vunpack.c.l.b16 %v2814
        %v3160 = vunpack.c.h.b16 %v2814
        %v3161 = vunpack.c.l.b16 %v2815
        %v3162 = vunpack.c.h.b16 %v2815
        %v3163 = vunpack.c.l.b16 %v2816
        %v3164 = vunpack.c.h.b16 %v2816
        %v3165 = vunpack.c.l.b16 %v2817
        %v3166 = vunpack.c.h.b16 %v2817
        %v3167 = vunpack.c.l.b16 %v2818
        %v3168 = vunpack.c.h.b16 %v2818
        %v3169 = vunpack.c.l.b16 %v2819
        %v3170 = vunpack.c.h.b16 %v2819
        %v3171 = vunpack.c.l.b16 %v2820
        %v3172 = vunpack.c.h.b16 %v2820
        %v3173 = vunpack.c.l.b16 %v2821
        %v3174 = vunpack.c.h.b16 %v2821
        %v3175 = vunpack.c.l.b16 %v2822
        %v3176 = vunpack.c.h.b16 %v2822
        %v3177 = vunpack.c.l.b16 %v2823
        %v3178 = vunpack.c.h.b16 %v2823
        %v3179 = vunpack.c.l.b16 %v2824
        %v3180 = vunpack.c.h.b16 %v2824
        %v3181 = vunpack.c.l.b16 %v2825
        %v3182 = vunpack.c.h.b16 %v2825
        %v3183 = vunpack.c.l.b16 %v2826
        %v3184 = vunpack.c.h.b16 %v2826
        %v3185 = vunpack.c.l.b16 %v2827
        %v3186 = vunpack.c.h.b16 %v2827
        %v3187 = vunpack.c.l.b16 %v2828
        %v3188 = vunpack.c.h.b16 %v2828
        %v3189 = vunpack.c.l.b16 %v2829
        %v3190 = vunpack.c.h.b16 %v2829
        %v3191 = vunpack.c.l.b16 %v2830
        %v3192 = vunpack.c.h.b16 %v2830
        %v3193 = vunpack.c.l.b16 %v2831
        %v3194 = vunpack.c.h.b16 %v2831
        %v3195 = vunpack.c.l.b16 %v2832
        %v3196 = vunpack.c.h.b16 %v2832
        %v3197 = vunpack.c.l.b16 %v2833
        %v3198 = vunpack.c.h.b16 %v2833
        %v3199 = vunpack.c.l.b16 %v2834
        %v3200 = vunpack.c.h.b16 %v2834
        %v3201 = vunpack.c.l.b16 %v2835
        %v3202 = vunpack.c.h.b16 %v2835
        %v3203 = vunpack.c.l.b16 %v2836
        %v3204 = vunpack.c.h.b16 %v2836
        %v3205 = vunpack.c.l.b16 %v2837
        %v3206 = vunpack.c.h.b16 %v2837
        %v3207 = vunpack.c.l.b16 %v2838
        %v3208 = vunpack.c.h.b16 %v2838
        %v3209 = vunpack.c.l.b16 %v2839
        %v3210 = vunpack.c.h.b16 %v2839
        %v3211 = vunpack.c.l.b16 %v2840
        %v3212 = vunpack.c.h.b16 %v2840
        %v3213 = vunpack.c.l.b16 %v2841
        %v3214 = vunpack.c.h.b16 %v2841
        %v3215 = vunpack.c.l.b16 %v2842
        %v3216 = vunpack.c.h.b16 %v2842
        %v3217 = vunpack.c.l.b16 %v2843
        %v3218 = vunpack.c.h.b16 %v2843
        %v3219 = vunpack.c.l.b16 %v2844
        %v3220 = vunpack.c.h.b16 %v2844
        %v3221 = vunpack.c.l.b16 %v2845
        %v3222 = vunpack.c.h.b16 %v2845
        %v3223 = vunpack.c.l.b16 %v2846
        %v3224 = vunpack.c.h.b16 %v2846
        %v3225 = vunpack.c.l.b16 %v2847
        %v3226 = vunpack.c.h.b16 %v2847
        %v3227 = vunpack.c.l.b16 %v2848
        %v3228 = vunpack.c.h.b16 %v2848
        %v3229 = vunpack.c.l.b16 %v2849
        %v3230 = vunpack.c.h.b16 %v2849
        %v3231 = vunpack.c.l.b16 %v2850
        %v3232 = vunpack.c.h.b16 %v2850
        %v3233 = vunpack.c.l.b16 %v2851
        %v3234 = vunpack.c.h.b16 %v2851
        %v3235 = vunpack.c.l.b16 %v2852
        %v3236 = vunpack.c.h.b16 %v2852
        %v3237 = vunpack.c.l.b16 %v2853
        %v3238 = vunpack.c.h.b16 %v2853
        %v3239 = vunpack.c.l.b16 %v2854
        %v3240 = vunpack.c.h.b16 %v2854
        %v3241 = vunpack.c.l.b16 %v2855
        %v3242 = vunpack.c.h.b16 %v2855
        %v3243 = vunpack.c.l.b16 %v2856
        %v3244 = vunpack.c.h.b16 %v2856
        %v3245 = vunpack.c.l.b16 %v2857
        %v3246 = vunpack.c.h.b16 %v2857
        %v3247 = vunpack.c.l.b16 %v2858
        %v3248 = vunpack.c.h.b16 %v2858
        %v3249 = vunpack.c.l.b16 %v2859
        %v3250 = vunpack.c.h.b16 %v2859
        %v3251 = vunpack.c.l.b16 %v2860
        %v3252 = vunpack.c.h.b16 %v2860
        %v3253 = vunpack.c.l.b16 %v2861
        %v3254 = vunpack.c.h.b16 %v2861
        %v3255 = vunpack.c.l.b16 %v2862
        %v3256 = vunpack.c.h.b16 %v2862
        %v3257 = vunpack.c.l.b16 %v2863
        %v3258 = vunpack.c.h.b16 %v2863
        %v3259 = vunpack.c.l.b16 %v2864
        %v3260 = vunpack.c.h.b16 %v2864
        %v3261 = vunpack.c.l.b16 %v2865
        %v3262 = vunpack.c.h.b16 %v2865
        %v3263 = vunpack.c.l.b16 %v2866
        %v3264 = vunpack.c.h.b16 %v2866
        %v3265 = vunpack.c.l.b16 %v2867
        %v3266 = vunpack.c.h.b16 %v2867
        %v3267 = vunpack.c.l.b16 %v2868
        %v3268 = vunpack.c.h.b16 %v2868
        %v3269 = vunpack.c.l.b16 %v2869
        %v3270 = vunpack.c.h.b16 %v2869
        %v3271 = vunpack.c.l.b16 %v2870
        %v3272 = vunpack.c.h.b16 %v2870
        %v3273 = vunpack.c.l.b16 %v2871
        %v3274 = vunpack.c.h.b16 %v2871
        %v3275 = vunpack.c.l.b16 %v2872
        %v3276 = vunpack.c.h.b16 %v2872
        %v3277 = vunpack.c.l.b16 %v2873
        %v3278 = vunpack.c.h.b16 %v2873
        %v3279 = vunpack.c.l.b16 %v2874
        %v3280 = vunpack.c.h.b16 %v2874
        %v3281 = vunpack.c.l.b16 %v2875
        %v3282 = vunpack.c.h.b16 %v2875
        %v3283 = vunpack.c.l.b16 %v2876
        %v3284 = vunpack.c.h.b16 %v2876
        %v3285 = vunpack.c.l.b16 %v2877
        %v3286 = vunpack.c.h.b16 %v2877
        %v3287 = vunpack.c.l.b16 %v2878
        %v3288 = vunpack.c.h.b16 %v2878
        %v3289 = vunpack.c.l.b16 %v2879
        %v3290 = vunpack.c.h.b16 %v2879
        %v3291 = vunpack.c.l.b16 %v2880
        %v3292 = vunpack.c.h.b16 %v2880
        %v3293 = vunpack.c.l.b16 %v2881
        %v3294 = vunpack.c.h.b16 %v2881
        %v3295 = vunpack.c.l.b16 %v2882
        %v3296 = vunpack.c.h.b16 %v2882
        %v3297 = vunpack.c.l.b16 %v2883
        %v3298 = vunpack.c.h.b16 %v2883
        %v3299 = vunpack.c.l.b16 %v2884
        %v3300 = vunpack.c.h.b16 %v2884
        %v3301 = vunpack.c.l.b16 %v2885
        %v3302 = vunpack.c.h.b16 %v2885
        %v3303 = vunpack.c.l.b16 %v2886
        %v3304 = vunpack.c.h.b16 %v2886
        %v3305 = vunpack.c.l.b16 %v2887
        %v3306 = vunpack.c.h.b16 %v2887
        %v3307 = vunpack.c.l.b16 %v2888
        %v3308 = vunpack.c.h.b16 %v2888
        %v3309 = vunpack.c.l.b16 %v2889
        %v3310 = vunpack.c.h.b16 %v2889
        %v3311 = vunpack.c.l.b16 %v2890
        %v3312 = vunpack.c.h.b16 %v2890
        %v3313 = vunpack.c.l.b16 %v2891
        %v3314 = vunpack.c.h.b16 %v2891
        %v3315 = vunpack.c.l.b16 %v2892
        %v3316 = vunpack.c.h.b16 %v2892
        %v3317 = vunpack.c.l.b16 %v2893
        %v3318 = vunpack.c.h.b16 %v2893
        %v3319 = vunpack.c.l.b16 %v2894
        %v3320 = vunpack.c.h.b16 %v2894
        %v3321 = vunpack.c.l.b16 %v2895
        %v3322 = vunpack.c.h.b16 %v2895
        %v3323 = vunpack.c.l.b16 %v2896
        %v3324 = vunpack.c.h.b16 %v2896
        %v3325 = vunpack.c.l.b16 %v2897
        %v3326 = vunpack.c.h.b16 %v2897
        %v3327 = vunpack.c.l.b16 %v2898
        %v3328 = vunpack.c.h.b16 %v2898
        %v3329 = vunpack.c.l.b16 %v2899
        %v3330 = vunpack.c.h.b16 %v2899
        %v3331 = vunpack.c.l.b16 %v2900
        %v3332 = vunpack.c.h.b16 %v2900
        %v3333 = vpack.c.b16 %v3051, %v3045
        %v3334 = vpack.c.b16 %v3052, %v3046
        %v3335 = vpack.c.b16 %v3053, %v3047
        %v3336 = vpack.c.b16 %v3054, %v3048
        %v3337 = vpack.c.b16 %v3055, %v3049
        %v3338 = vpack.c.b16 %v3056, %v3050
        %v3339 = vpack.c.b16 %v3063, %v3057
        %v3340 = vpack.c.b16 %v3064, %v3058
        %v3341 = vpack.c.b16 %v3065, %v3059
        %v3342 = vpack.c.b16 %v3066, %v3060
        %v3343 = vpack.c.b16 %v3067, %v3061
        %v3344 = vpack.c.b16 %v3068, %v3062
        %v3345 = vpack.c.b16 %v3075, %v3069
        %v3346 = vpack.c.b16 %v3076, %v3070
        %v3347 = vpack.c.b16 %v3077, %v3071
        %v3348 = vpack.c.b16 %v3078, %v3072
        %v3349 = vpack.c.b16 %v3079, %v3073
        %v3350 = vpack.c.b16 %v3080, %v3074
        %v3351 = vpack.c.b16 %v3087, %v3081
        %v3352 = vpack.c.b16 %v3088, %v3082
        %v3353 = vpack.c.b16 %v3089, %v3083
        %v3354 = vpack.c.b16 %v3090, %v3084
        %v3355 = vpack.c.b16 %v3091, %v3085
        %v3356 = vpack.c.b16 %v3092, %v3086
        %v3357 = vpack.c.b16 %v3099, %v3093
        %v3358 = vpack.c.b16 %v3100, %v3094
        %v3359 = vpack.c.b16 %v3101, %v3095
        %v3360 = vpack.c.b16 %v3102, %v3096
        %v3361 = vpack.c.b16 %v3103, %v3097
        %v3362 = vpack.c.b16 %v3104, %v3098
        %v3363 = vpack.c.b16 %v3111, %v3105
        %v3364 = vpack.c.b16 %v3112, %v3106
        %v3365 = vpack.c.b16 %v3113, %v3107
        %v3366 = vpack.c.b16 %v3114, %v3108
        %v3367 = vpack.c.b16 %v3115, %v3109
        %v3368 = vpack.c.b16 %v3116, %v3110
        %v3369 = vpack.c.b16 %v3123, %v3117
        %v3370 = vpack.c.b16 %v3124, %v3118
        %v3371 = vpack.c.b16 %v3125, %v3119
        %v3372 = vpack.c.b16 %v3126, %v3120
        %v3373 = vpack.c.b16 %v3127, %v3121
        %v3374 = vpack.c.b16 %v3128, %v3122
        %v3375 = vpack.c.b16 %v3135, %v3129
        %v3376 = vpack.c.b16 %v3136, %v3130
        %v3377 = vpack.c.b16 %v3137, %v3131
        %v3378 = vpack.c.b16 %v3138, %v3132
        %v3379 = vpack.c.b16 %v3139, %v3133
        %v3380 = vpack.c.b16 %v3140, %v3134
        %v3381 = vpack.c.b16 %v3147, %v3141
        %v3382 = vpack.c.b16 %v3148, %v3142
        %v3383 = vpack.c.b16 %v3149, %v3143
        %v3384 = vpack.c.b16 %v3150, %v3144
        %v3385 = vpack.c.b16 %v3151, %v3145
        %v3386 = vpack.c.b16 %v3152, %v3146
        %v3387 = vpack.c.b16 %v3159, %v3153
        %v3388 = vpack.c.b16 %v3160, %v3154
        %v3389 = vpack.c.b16 %v3161, %v3155
        %v3390 = vpack.c.b16 %v3162, %v3156
        %v3391 = vpack.c.b16 %v3163, %v3157
        %v3392 = vpack.c.b16 %v3164, %v3158
        %v3393 = vpack.c.b16 %v3171, %v3165
        %v3394 = vpack.c.b16 %v3172, %v3166
        %v3395 = vpack.c.b16 %v3173, %v3167
        %v3396 = vpack.c.b16 %v3174, %v3168
        %v3397 = vpack.c.b16 %v3175, %v3169
        %v3398 = vpack.c.b16 %v3176, %v3170
        %v3399 = vpack.c.b16 %v3183, %v3177
        %v3400 = vpack.c.b16 %v3184, %v3178
        %v3401 = vpack.c.b16 %v3185, %v3179
        %v3402 = vpack.c.b16 %v3186, %v3180
        %v3403 = vpack.c.b16 %v3187, %v3181
        %v3404 = vpack.c.b16 %v3188, %v3182
        %v3405 = vpack.c.b16 %v3195, %v3189
        %v3406 = vpack.c.b16 %v3196, %v3190
        %v3407 = vpack.c.b16 %v3197, %v3191
        %v3408 = vpack.c.b16 %v3198, %v3192
        %v3409 = vpack.c.b16 %v3199, %v3193
        %v3410 = vpack.c.b16 %v3200, %v3194
        %v3411 = vpack.c.b16 %v3207, %v3201
        %v3412 = vpack.c.b16 %v3208, %v3202
        %v3413 = vpack.c.b16 %v3209, %v3203
        %v3414 = vpack.c.b16 %v3210, %v3204
        %v3415 = vpack.c.b16 %v3211, %v3205
        %v3416 = vpack.c.b16 %v3212, %v3206
        %v3417 = vpack.c.b16 %v3219, %v3213
        %v3418 = vpack.c.b16 %v3220, %v3214
        %v3419 = vpack.c.b16 %v3221, %v3215
        %v3420 = vpack.c.b16 %v3222, %v3216
        %v3421 = vpack.c.b16 %v3223, %v3217
        %v3422 = vpack.c.b16 %v3224, %v3218
        %v3423 = vpack.c.b16 %v3231, %v3225
        %v3424 = vpack.c.b16 %v3232, %v3226
        %v3425 = vpack.c.b16 %v3233, %v3227
        %v3426 = vpack.c.b16 %v3234, %v3228
        %v3427 = vpack.c.b16 %v3235, %v3229
        %v3428 = vpack.c.b16 %v3236, %v3230
        %v3429 = vpack.c.b16 %v3243, %v3237
        %v3430 = vpack.c.b16 %v3244, %v3238
        %v3431 = vpack.c.b16 %v3245, %v3239
        %v3432 = vpack.c.b16 %v3246, %v3240
        %v3433 = vpack.c.b16 %v3247, %v3241
        %v3434 = vpack.c.b16 %v3248, %v3242
        %v3435 = vpack.c.b16 %v3255, %v3249
        %v3436 = vpack.c.b16 %v3256, %v3250
        %v3437 = vpack.c.b16 %v3257, %v3251
        %v3438 = vpack.c.b16 %v3258, %v3252
        %v3439 = vpack.c.b16 %v3259, %v3253
        %v3440 = vpack.c.b16 %v3260, %v3254
        %v3441 = vpack.c.b16 %v3267, %v3261
        %v3442 = vpack.c.b16 %v3268, %v3262
        %v3443 = vpack.c.b16 %v3269, %v3263
        %v3444 = vpack.c.b16 %v3270, %v3264
        %v3445 = vpack.c.b16 %v3271, %v3265
        %v3446 = vpack.c.b16 %v3272, %v3266
        %v3447 = vpack.c.b16 %v3279, %v3273
        %v3448 = vpack.c.b16 %v3280, %v3274
        %v3449 = vpack.c.b16 %v3281, %v3275
        %v3450 = vpack.c.b16 %v3282, %v3276
        %v3451 = vpack.c.b16 %v3283, %v3277
        %v3452 = vpack.c.b16 %v3284, %v3278
        %v3453 = vpack.c.b16 %v3291, %v3285
        %v3454 = vpack.c.b16 %v3292, %v3286
        %v3455 = vpack.c.b16 %v3293, %v3287
        %v3456 = vpack.c.b16 %v3294, %v3288
        %v3457 = vpack.c.b16 %v3295, %v3289
        %v3458 = vpack.c.b16 %v3296, %v3290
        %v3459 = vpack.c.b16 %v3303, %v3297
        %v3460 = vpack.c.b16 %v3304, %v3298
        %v3461 = vpack.c.b16 %v3305, %v3299
        %v3462 = vpack.c.b16 %v3306, %v3300
        %v3463 = vpack.c.b16 %v3307, %v3301
        %v3464 = vpack.c.b16 %v3308, %v3302
        %v3465 = vpack.c.b16 %v3315, %v3309
        %v3466 = vpack.c.b16 %v3316, %v3310
        %v3467 = vpack.c.b16 %v3317, %v3311
        %v3468 = vpack.c.b16 %v3318, %v3312
        %v3469 = vpack.c.b16 %v3319, %v3313
        %v3470 = vpack.c.b16 %v3320, %v3314
        %v3471 = vpack.c.b16 %v3327, %v3321
        %v3472 = vpack.c.b16 %v3328, %v3322
        %v3473 = vpack.c.b16 %v3329, %v3323
        %v3474 = vpack.c.b16 %v3330, %v3324
        %v3475 = vpack.c.b16 %v3331, %v3325
        %v3476 = vpack.c.b16 %v3332, %v3326
        %3621 = vmatprep.subr.bf16.mxu0 0
        %3622 = vmatpush1.bf16.msra.mxu0 %v2668
        %3623 = vmatprep.subr.bf16.mxu0 0
        %3624 = vmatpush1.bf16.msra.mxu0 %v2667
        %3625 = vmatprep.subr.bf16.mxu0 0
        %3626 = vmatpush1.bf16.msra.mxu0 %v2666
        %3627 = vmatprep.subr.bf16.mxu0 0
        %3628 = vmatpush1.bf16.msra.mxu0 %v2665
        %3629 = vmatprep.subr.bf16.mxu0 0
        %3630 = vmatpush1.bf16.msra.mxu0 %v2664
        %3631 = vmatprep.subr.bf16.mxu0 0
        %3632 = vmatpush1.bf16.msra.mxu0 %v2663
        %3633 = vmatprep.subr.bf16.mxu0 0
        %3634 = vmatpush1.bf16.msra.mxu0 %v2662
        %3635 = vmatprep.subr.bf16.mxu0 0
        %3636 = vmatpush1.bf16.msra.mxu0 %v2661
        %3637 = vmatprep.subr.bf16.mxu0 0
        %3638 = vmatpush2.bf16.msra.mxu0 %v2676
        %3639 = vmatprep.subr.bf16.mxu0 0
        %3640 = vmatpush2.bf16.msra.mxu0 %v2675
        %3641 = vmatprep.subr.bf16.mxu0 0
        %3642 = vmatpush2.bf16.msra.mxu0 %v2674
        %3643 = vmatprep.subr.bf16.mxu0 0
        %3644 = vmatpush2.bf16.msra.mxu0 %v2673
        %3645 = vmatprep.subr.bf16.mxu0 0
        %3646 = vmatpush2.bf16.msra.mxu0 %v2672
        %3647 = vmatprep.subr.bf16.mxu0 0
        %3648 = vmatpush2.bf16.msra.mxu0 %v2671
        %3649 = vmatprep.subr.bf16.mxu0 0
        %3650 = vmatpush2.bf16.msra.mxu0 %v2670
        %3651 = vmatprep.subr.bf16.mxu0 0
        %3652 = vmatpush2.bf16.msra.mxu0 %v2669
        %3653 = vmatprep.mubr.bf16.mxu0 %v3334
        %3654 = vmatmul.mubr.bf16.gmra.mxu0 %v3333
        %v3655 = vpop.f32.mrf.mxu0
        %v3656 = vadd.f32 0.0, %v3655
        %v3657 = vpop.f32.mrf.mxu0
        %v3658 = vpop.f32.mrf.mxu0
        %v3659 = vadd.f32 0.0, %v3658
        %v3660 = vpop.f32.mrf.mxu0
        %3661 = vmatprep.mubr.bf16.mxu0 %v3340
        %3662 = vmatmul.mubr.bf16.gmra.mxu0 %v3339
        %v3663 = vpop.f32.mrf.mxu0
        %v3664 = vadd.f32 0.0, %v3663
        %v3665 = vpop.f32.mrf.mxu0
        %v3666 = vpop.f32.mrf.mxu0
        %v3667 = vadd.f32 0.0, %v3666
        %v3668 = vpop.f32.mrf.mxu0
        %3669 = vmatprep.mubr.bf16.mxu0 %v3346
        %3670 = vmatmul.mubr.bf16.gmra.mxu0 %v3345
        %v3671 = vpop.f32.mrf.mxu0
        %v3672 = vadd.f32 0.0, %v3671
        %v3673 = vpop.f32.mrf.mxu0
        %v3674 = vpop.f32.mrf.mxu0
        %v3675 = vadd.f32 0.0, %v3674
        %v3676 = vpop.f32.mrf.mxu0
        %3677 = vmatprep.mubr.bf16.mxu0 %v3352
        %3678 = vmatmul.mubr.bf16.gmra.mxu0 %v3351
        %v3679 = vpop.f32.mrf.mxu0
        %v3680 = vadd.f32 0.0, %v3679
        %v3681 = vpop.f32.mrf.mxu0
        %v3682 = vpop.f32.mrf.mxu0
        %v3683 = vadd.f32 0.0, %v3682
        %v3684 = vpop.f32.mrf.mxu0
        %3685 = vmatprep.mubr.bf16.mxu0 %v3358
        %3686 = vmatmul.mubr.bf16.gmra.mxu0 %v3357
        %v3687 = vpop.f32.mrf.mxu0
        %v3688 = vadd.f32 0.0, %v3687
        %v3689 = vpop.f32.mrf.mxu0
        %v3690 = vpop.f32.mrf.mxu0
        %v3691 = vadd.f32 0.0, %v3690
        %v3692 = vpop.f32.mrf.mxu0
        %3693 = vmatprep.mubr.bf16.mxu0 %v3364
        %3694 = vmatmul.mubr.bf16.gmra.mxu0 %v3363
        %v3695 = vpop.f32.mrf.mxu0
        %v3696 = vadd.f32 0.0, %v3695
        %v3697 = vpop.f32.mrf.mxu0
        %v3698 = vpop.f32.mrf.mxu0
        %v3699 = vadd.f32 0.0, %v3698
        %v3700 = vpop.f32.mrf.mxu0
        %3701 = vmatprep.mubr.bf16.mxu0 %v3370
        %3702 = vmatmul.mubr.bf16.gmra.mxu0 %v3369
        %v3703 = vpop.f32.mrf.mxu0
        %v3704 = vadd.f32 0.0, %v3703
        %v3705 = vpop.f32.mrf.mxu0
        %v3706 = vpop.f32.mrf.mxu0
        %v3707 = vadd.f32 0.0, %v3706
        %v3708 = vpop.f32.mrf.mxu0
        %3709 = vmatprep.mubr.bf16.mxu0 %v3376
        %3710 = vmatmul.mubr.bf16.gmra.mxu0 %v3375
        %v3711 = vpop.f32.mrf.mxu0
        %v3712 = vadd.f32 0.0, %v3711
        %v3713 = vpop.f32.mrf.mxu0
        %v3714 = vpop.f32.mrf.mxu0
        %v3715 = vadd.f32 0.0, %v3714
        %v3716 = vpop.f32.mrf.mxu0
        %3717 = vmatprep.mubr.bf16.mxu0 %v3382
        %3718 = vmatmul.mubr.bf16.gmra.mxu0 %v3381
        %v3719 = vpop.f32.mrf.mxu0
        %v3720 = vadd.f32 0.0, %v3719
        %v3721 = vpop.f32.mrf.mxu0
        %v3722 = vpop.f32.mrf.mxu0
        %v3723 = vadd.f32 0.0, %v3722
        %v3724 = vpop.f32.mrf.mxu0
        %3725 = vmatprep.mubr.bf16.mxu0 %v3388
        %3726 = vmatmul.mubr.bf16.gmra.mxu0 %v3387
        %v3727 = vpop.f32.mrf.mxu0
        %v3728 = vadd.f32 0.0, %v3727
        %v3729 = vpop.f32.mrf.mxu0
        %v3730 = vpop.f32.mrf.mxu0
        %v3731 = vadd.f32 0.0, %v3730
        %v3732 = vpop.f32.mrf.mxu0
        %3733 = vmatprep.mubr.bf16.mxu0 %v3394
        %3734 = vmatmul.mubr.bf16.gmra.mxu0 %v3393
        %v3735 = vpop.f32.mrf.mxu0
        %v3736 = vadd.f32 0.0, %v3735
        %v3737 = vpop.f32.mrf.mxu0
        %v3738 = vpop.f32.mrf.mxu0
        %v3739 = vadd.f32 0.0, %v3738
        %v3740 = vpop.f32.mrf.mxu0
        %3741 = vmatprep.mubr.bf16.mxu0 %v3400
        %3742 = vmatmul.mubr.bf16.gmra.mxu0 %v3399
        %v3743 = vpop.f32.mrf.mxu0
        %v3744 = vadd.f32 0.0, %v3743
        %v3745 = vpop.f32.mrf.mxu0
        %v3746 = vpop.f32.mrf.mxu0
        %v3747 = vadd.f32 0.0, %v3746
        %v3748 = vpop.f32.mrf.mxu0
        %3749 = vmatprep.mubr.bf16.mxu0 %v3406
        %3750 = vmatmul.mubr.bf16.gmra.mxu0 %v3405
        %v3751 = vpop.f32.mrf.mxu0
        %v3752 = vadd.f32 0.0, %v3751
        %v3753 = vpop.f32.mrf.mxu0
        %v3754 = vpop.f32.mrf.mxu0
        %v3755 = vadd.f32 0.0, %v3754
        %v3756 = vpop.f32.mrf.mxu0
        %3757 = vmatprep.mubr.bf16.mxu0 %v3412
        %3758 = vmatmul.mubr.bf16.gmra.mxu0 %v3411
        %v3759 = vpop.f32.mrf.mxu0
        %v3760 = vadd.f32 0.0, %v3759
        %v3761 = vpop.f32.mrf.mxu0
        %v3762 = vpop.f32.mrf.mxu0
        %v3763 = vadd.f32 0.0, %v3762
        %v3764 = vpop.f32.mrf.mxu0
        %3765 = vmatprep.mubr.bf16.mxu0 %v3418
        %3766 = vmatmul.mubr.bf16.gmra.mxu0 %v3417
        %v3767 = vpop.f32.mrf.mxu0
        %v3768 = vadd.f32 0.0, %v3767
        %v3769 = vpop.f32.mrf.mxu0
        %v3770 = vpop.f32.mrf.mxu0
        %v3771 = vadd.f32 0.0, %v3770
        %v3772 = vpop.f32.mrf.mxu0
        %3773 = vmatprep.mubr.bf16.mxu0 %v3424
        %3774 = vmatmul.mubr.bf16.gmra.mxu0 %v3423
        %v3775 = vpop.f32.mrf.mxu0
        %v3776 = vadd.f32 0.0, %v3775
        %v3777 = vpop.f32.mrf.mxu0
        %v3778 = vpop.f32.mrf.mxu0
        %v3779 = vadd.f32 0.0, %v3778
        %v3780 = vpop.f32.mrf.mxu0
        %3781 = vmatprep.mubr.bf16.mxu0 %v3430
        %3782 = vmatmul.mubr.bf16.gmra.mxu0 %v3429
        %v3783 = vpop.f32.mrf.mxu0
        %v3784 = vadd.f32 0.0, %v3783
        %v3785 = vpop.f32.mrf.mxu0
        %v3786 = vpop.f32.mrf.mxu0
        %v3787 = vadd.f32 0.0, %v3786
        %v3788 = vpop.f32.mrf.mxu0
        %3789 = vmatprep.mubr.bf16.mxu0 %v3436
        %3790 = vmatmul.mubr.bf16.gmra.mxu0 %v3435
        %v3791 = vpop.f32.mrf.mxu0
        %v3792 = vadd.f32 0.0, %v3791
        %v3793 = vpop.f32.mrf.mxu0
        %v3794 = vpop.f32.mrf.mxu0
        %v3795 = vadd.f32 0.0, %v3794
        %v3796 = vpop.f32.mrf.mxu0
        %3797 = vmatprep.mubr.bf16.mxu0 %v3442
        %3798 = vmatmul.mubr.bf16.gmra.mxu0 %v3441
        %v3799 = vpop.f32.mrf.mxu0
        %v3800 = vadd.f32 0.0, %v3799
        %v3801 = vpop.f32.mrf.mxu0
        %v3802 = vpop.f32.mrf.mxu0
        %v3803 = vadd.f32 0.0, %v3802
        %v3804 = vpop.f32.mrf.mxu0
        %3805 = vmatprep.mubr.bf16.mxu0 %v3448
        %3806 = vmatmul.mubr.bf16.gmra.mxu0 %v3447
        %v3807 = vpop.f32.mrf.mxu0
        %v3808 = vadd.f32 0.0, %v3807
        %v3809 = vpop.f32.mrf.mxu0
        %v3810 = vpop.f32.mrf.mxu0
        %v3811 = vadd.f32 0.0, %v3810
        %v3812 = vpop.f32.mrf.mxu0
        %3813 = vmatprep.mubr.bf16.mxu0 %v3454
        %3814 = vmatmul.mubr.bf16.gmra.mxu0 %v3453
        %v3815 = vpop.f32.mrf.mxu0
        %v3816 = vadd.f32 0.0, %v3815
        %v3817 = vpop.f32.mrf.mxu0
        %v3818 = vpop.f32.mrf.mxu0
        %v3819 = vadd.f32 0.0, %v3818
        %v3820 = vpop.f32.mrf.mxu0
        %3821 = vmatprep.mubr.bf16.mxu0 %v3460
        %3822 = vmatmul.mubr.bf16.gmra.mxu0 %v3459
        %v3823 = vpop.f32.mrf.mxu0
        %v3824 = vadd.f32 0.0, %v3823
        %v3825 = vpop.f32.mrf.mxu0
        %v3826 = vpop.f32.mrf.mxu0
        %v3827 = vadd.f32 0.0, %v3826
        %v3828 = vpop.f32.mrf.mxu0
        %3829 = vmatprep.mubr.bf16.mxu0 %v3466
        %3830 = vmatmul.mubr.bf16.gmra.mxu0 %v3465
        %v3831 = vpop.f32.mrf.mxu0
        %v3832 = vadd.f32 0.0, %v3831
        %v3833 = vpop.f32.mrf.mxu0
        %v3834 = vpop.f32.mrf.mxu0
        %v3835 = vadd.f32 0.0, %v3834
        %v3836 = vpop.f32.mrf.mxu0
        %3837 = vmatprep.mubr.bf16.mxu0 %v3472
        %3838 = vmatmul.mubr.bf16.gmra.mxu0 %v3471
        %v3839 = vpop.f32.mrf.mxu0
        %v3840 = vadd.f32 0.0, %v3839
        %v3841 = vpop.f32.mrf.mxu0
        %v3842 = vpop.f32.mrf.mxu0
        %v3843 = vadd.f32 0.0, %v3842
        %v3844 = vpop.f32.mrf.mxu0
        %3845 = vdwg.mxu0
        %3846 = vmatprep.subr.bf16.mxu0 0
        %3847 = vmatpush1.bf16.msra.mxu0 %v2684
        %3848 = vmatprep.subr.bf16.mxu0 0
        %3849 = vmatpush1.bf16.msra.mxu0 %v2683
        %3850 = vmatprep.subr.bf16.mxu0 0
        %3851 = vmatpush1.bf16.msra.mxu0 %v2682
        %3852 = vmatprep.subr.bf16.mxu0 0
        %3853 = vmatpush1.bf16.msra.mxu0 %v2681
        %3854 = vmatprep.subr.bf16.mxu0 0
        %3855 = vmatpush1.bf16.msra.mxu0 %v2680
        %3856 = vmatprep.subr.bf16.mxu0 0
        %3857 = vmatpush1.bf16.msra.mxu0 %v2679
        %3858 = vmatprep.subr.bf16.mxu0 0
        %3859 = vmatpush1.bf16.msra.mxu0 %v2678
        %3860 = vmatprep.subr.bf16.mxu0 0
        %3861 = vmatpush1.bf16.msra.mxu0 %v2677
        %3862 = vmatprep.subr.bf16.mxu0 0
        %3863 = vmatpush2.bf16.msra.mxu0 %v2692
        %3864 = vmatprep.subr.bf16.mxu0 0
        %3865 = vmatpush2.bf16.msra.mxu0 %v2691
        %3866 = vmatprep.subr.bf16.mxu0 0
        %3867 = vmatpush2.bf16.msra.mxu0 %v2690
        %3868 = vmatprep.subr.bf16.mxu0 0
        %3869 = vmatpush2.bf16.msra.mxu0 %v2689
        %3870 = vmatprep.subr.bf16.mxu0 0
        %3871 = vmatpush2.bf16.msra.mxu0 %v2688
        %3872 = vmatprep.subr.bf16.mxu0 0
        %3873 = vmatpush2.bf16.msra.mxu0 %v2687
        %3874 = vmatprep.subr.bf16.mxu0 0
        %3875 = vmatpush2.bf16.msra.mxu0 %v2686
        %3876 = vmatprep.subr.bf16.mxu0 0
        %3877 = vmatpush2.bf16.msra.mxu0 %v2685
        %3878 = vmatprep.mubr.bf16.mxu0 %v3336
        %3879 = vmatmul.mubr.bf16.gmra.mxu0 %v3335
        %v3880 = vpop.f32.mrf.mxu0
        %v3881 = vadd.f32 %v3656, %v3880
        %v3882 = vpop.f32.mrf.mxu0
        %v3883 = vpop.f32.mrf.mxu0
        %v3884 = vadd.f32 %v3659, %v3883
        %v3885 = vpop.f32.mrf.mxu0
        %3886 = vmatprep.mubr.bf16.mxu0 %v3342
        %3887 = vmatmul.mubr.bf16.gmra.mxu0 %v3341
        %v3888 = vpop.f32.mrf.mxu0
        %v3889 = vadd.f32 %v3664, %v3888
        %v3890 = vpop.f32.mrf.mxu0
        %v3891 = vpop.f32.mrf.mxu0
        %v3892 = vadd.f32 %v3667, %v3891
        %v3893 = vpop.f32.mrf.mxu0
        %3894 = vmatprep.mubr.bf16.mxu0 %v3348
        %3895 = vmatmul.mubr.bf16.gmra.mxu0 %v3347
        %v3896 = vpop.f32.mrf.mxu0
        %v3897 = vadd.f32 %v3672, %v3896
        %v3898 = vpop.f32.mrf.mxu0
        %v3899 = vpop.f32.mrf.mxu0
        %v3900 = vadd.f32 %v3675, %v3899
        %v3901 = vpop.f32.mrf.mxu0
        %3902 = vmatprep.mubr.bf16.mxu0 %v3354
        %3903 = vmatmul.mubr.bf16.gmra.mxu0 %v3353
        %v3904 = vpop.f32.mrf.mxu0
        %v3905 = vadd.f32 %v3680, %v3904
        %v3906 = vpop.f32.mrf.mxu0
        %v3907 = vpop.f32.mrf.mxu0
        %v3908 = vadd.f32 %v3683, %v3907
        %v3909 = vpop.f32.mrf.mxu0
        %3910 = vmatprep.mubr.bf16.mxu0 %v3360
        %3911 = vmatmul.mubr.bf16.gmra.mxu0 %v3359
        %v3912 = vpop.f32.mrf.mxu0
        %v3913 = vadd.f32 %v3688, %v3912
        %v3914 = vpop.f32.mrf.mxu0
        %v3915 = vpop.f32.mrf.mxu0
        %v3916 = vadd.f32 %v3691, %v3915
        %v3917 = vpop.f32.mrf.mxu0
        %3918 = vmatprep.mubr.bf16.mxu0 %v3366
        %3919 = vmatmul.mubr.bf16.gmra.mxu0 %v3365
        %v3920 = vpop.f32.mrf.mxu0
        %v3921 = vadd.f32 %v3696, %v3920
        %v3922 = vpop.f32.mrf.mxu0
        %v3923 = vpop.f32.mrf.mxu0
        %v3924 = vadd.f32 %v3699, %v3923
        %v3925 = vpop.f32.mrf.mxu0
        %3926 = vmatprep.mubr.bf16.mxu0 %v3372
        %3927 = vmatmul.mubr.bf16.gmra.mxu0 %v3371
        %v3928 = vpop.f32.mrf.mxu0
        %v3929 = vadd.f32 %v3704, %v3928
        %v3930 = vpop.f32.mrf.mxu0
        %v3931 = vpop.f32.mrf.mxu0
        %v3932 = vadd.f32 %v3707, %v3931
        %v3933 = vpop.f32.mrf.mxu0
        %3934 = vmatprep.mubr.bf16.mxu0 %v3378
        %3935 = vmatmul.mubr.bf16.gmra.mxu0 %v3377
        %v3936 = vpop.f32.mrf.mxu0
        %v3937 = vadd.f32 %v3712, %v3936
        %v3938 = vpop.f32.mrf.mxu0
        %v3939 = vpop.f32.mrf.mxu0
        %v3940 = vadd.f32 %v3715, %v3939
        %v3941 = vpop.f32.mrf.mxu0
        %3942 = vmatprep.mubr.bf16.mxu0 %v3384
        %3943 = vmatmul.mubr.bf16.gmra.mxu0 %v3383
        %v3944 = vpop.f32.mrf.mxu0
        %v3945 = vadd.f32 %v3720, %v3944
        %v3946 = vpop.f32.mrf.mxu0
        %v3947 = vpop.f32.mrf.mxu0
        %v3948 = vadd.f32 %v3723, %v3947
        %v3949 = vpop.f32.mrf.mxu0
        %3950 = vmatprep.mubr.bf16.mxu0 %v3390
        %3951 = vmatmul.mubr.bf16.gmra.mxu0 %v3389
        %v3952 = vpop.f32.mrf.mxu0
        %v3953 = vadd.f32 %v3728, %v3952
        %v3954 = vpop.f32.mrf.mxu0
        %v3955 = vpop.f32.mrf.mxu0
        %v3956 = vadd.f32 %v3731, %v3955
        %v3957 = vpop.f32.mrf.mxu0
        %3958 = vmatprep.mubr.bf16.mxu0 %v3396
        %3959 = vmatmul.mubr.bf16.gmra.mxu0 %v3395
        %v3960 = vpop.f32.mrf.mxu0
        %v3961 = vadd.f32 %v3736, %v3960
        %v3962 = vpop.f32.mrf.mxu0
        %v3963 = vpop.f32.mrf.mxu0
        %v3964 = vadd.f32 %v3739, %v3963
        %v3965 = vpop.f32.mrf.mxu0
        %3966 = vmatprep.mubr.bf16.mxu0 %v3402
        %3967 = vmatmul.mubr.bf16.gmra.mxu0 %v3401
        %v3968 = vpop.f32.mrf.mxu0
        %v3969 = vadd.f32 %v3744, %v3968
        %v3970 = vpop.f32.mrf.mxu0
        %v3971 = vpop.f32.mrf.mxu0
        %v3972 = vadd.f32 %v3747, %v3971
        %v3973 = vpop.f32.mrf.mxu0
        %3974 = vmatprep.mubr.bf16.mxu0 %v3408
        %3975 = vmatmul.mubr.bf16.gmra.mxu0 %v3407
        %v3976 = vpop.f32.mrf.mxu0
        %v3977 = vadd.f32 %v3752, %v3976
        %v3978 = vpop.f32.mrf.mxu0
        %v3979 = vpop.f32.mrf.mxu0
        %v3980 = vadd.f32 %v3755, %v3979
        %v3981 = vpop.f32.mrf.mxu0
        %3982 = vmatprep.mubr.bf16.mxu0 %v3414
        %3983 = vmatmul.mubr.bf16.gmra.mxu0 %v3413
        %v3984 = vpop.f32.mrf.mxu0
        %v3985 = vadd.f32 %v3760, %v3984
        %v3986 = vpop.f32.mrf.mxu0
        %v3987 = vpop.f32.mrf.mxu0
        %v3988 = vadd.f32 %v3763, %v3987
        %v3989 = vpop.f32.mrf.mxu0
        %3990 = vmatprep.mubr.bf16.mxu0 %v3420
        %3991 = vmatmul.mubr.bf16.gmra.mxu0 %v3419
        %v3992 = vpop.f32.mrf.mxu0
        %v3993 = vadd.f32 %v3768, %v3992
        %v3994 = vpop.f32.mrf.mxu0
        %v3995 = vpop.f32.mrf.mxu0
        %v3996 = vadd.f32 %v3771, %v3995
        %v3997 = vpop.f32.mrf.mxu0
        %3998 = vmatprep.mubr.bf16.mxu0 %v3426
        %3999 = vmatmul.mubr.bf16.gmra.mxu0 %v3425
        %v4000 = vpop.f32.mrf.mxu0
        %v4001 = vadd.f32 %v3776, %v4000
        %v4002 = vpop.f32.mrf.mxu0
        %v4003 = vpop.f32.mrf.mxu0
        %v4004 = vadd.f32 %v3779, %v4003
        %v4005 = vpop.f32.mrf.mxu0
        %4006 = vmatprep.mubr.bf16.mxu0 %v3432
        %4007 = vmatmul.mubr.bf16.gmra.mxu0 %v3431
        %v4008 = vpop.f32.mrf.mxu0
        %v4009 = vadd.f32 %v3784, %v4008
        %v4010 = vpop.f32.mrf.mxu0
        %v4011 = vpop.f32.mrf.mxu0
        %v4012 = vadd.f32 %v3787, %v4011
        %v4013 = vpop.f32.mrf.mxu0
        %4014 = vmatprep.mubr.bf16.mxu0 %v3438
        %4015 = vmatmul.mubr.bf16.gmra.mxu0 %v3437
        %v4016 = vpop.f32.mrf.mxu0
        %v4017 = vadd.f32 %v3792, %v4016
        %v4018 = vpop.f32.mrf.mxu0
        %v4019 = vpop.f32.mrf.mxu0
        %v4020 = vadd.f32 %v3795, %v4019
        %v4021 = vpop.f32.mrf.mxu0
        %4022 = vmatprep.mubr.bf16.mxu0 %v3444
        %4023 = vmatmul.mubr.bf16.gmra.mxu0 %v3443
        %v4024 = vpop.f32.mrf.mxu0
        %v4025 = vadd.f32 %v3800, %v4024
        %v4026 = vpop.f32.mrf.mxu0
        %v4027 = vpop.f32.mrf.mxu0
        %v4028 = vadd.f32 %v3803, %v4027
        %v4029 = vpop.f32.mrf.mxu0
        %4030 = vmatprep.mubr.bf16.mxu0 %v3450
        %4031 = vmatmul.mubr.bf16.gmra.mxu0 %v3449
        %v4032 = vpop.f32.mrf.mxu0
        %v4033 = vadd.f32 %v3808, %v4032
        %v4034 = vpop.f32.mrf.mxu0
        %v4035 = vpop.f32.mrf.mxu0
        %v4036 = vadd.f32 %v3811, %v4035
        %v4037 = vpop.f32.mrf.mxu0
        %4038 = vmatprep.mubr.bf16.mxu0 %v3456
        %4039 = vmatmul.mubr.bf16.gmra.mxu0 %v3455
        %v4040 = vpop.f32.mrf.mxu0
        %v4041 = vadd.f32 %v3816, %v4040
        %v4042 = vpop.f32.mrf.mxu0
        %v4043 = vpop.f32.mrf.mxu0
        %v4044 = vadd.f32 %v3819, %v4043
        %v4045 = vpop.f32.mrf.mxu0
        %4046 = vmatprep.mubr.bf16.mxu0 %v3462
        %4047 = vmatmul.mubr.bf16.gmra.mxu0 %v3461
        %v4048 = vpop.f32.mrf.mxu0
        %v4049 = vadd.f32 %v3824, %v4048
        %v4050 = vpop.f32.mrf.mxu0
        %v4051 = vpop.f32.mrf.mxu0
        %v4052 = vadd.f32 %v3827, %v4051
        %v4053 = vpop.f32.mrf.mxu0
        %4054 = vmatprep.mubr.bf16.mxu0 %v3468
        %4055 = vmatmul.mubr.bf16.gmra.mxu0 %v3467
        %v4056 = vpop.f32.mrf.mxu0
        %v4057 = vadd.f32 %v3832, %v4056
        %v4058 = vpop.f32.mrf.mxu0
        %v4059 = vpop.f32.mrf.mxu0
        %v4060 = vadd.f32 %v3835, %v4059
        %v4061 = vpop.f32.mrf.mxu0
        %4062 = vmatprep.mubr.bf16.mxu0 %v3474
        %4063 = vmatmul.mubr.bf16.gmra.mxu0 %v3473
        %v4064 = vpop.f32.mrf.mxu0
        %v4065 = vadd.f32 %v3840, %v4064
        %v4066 = vpop.f32.mrf.mxu0
        %v4067 = vpop.f32.mrf.mxu0
        %v4068 = vadd.f32 %v3843, %v4067
        %v4069 = vpop.f32.mrf.mxu0
        %4070 = vdwg.mxu0
        %4071 = vmatprep.subr.bf16.mxu0 0
        %4072 = vmatpush1.bf16.msra.mxu0 %v2700
        %4073 = vmatprep.subr.bf16.mxu0 0
        %4074 = vmatpush1.bf16.msra.mxu0 %v2699
        %4075 = vmatprep.subr.bf16.mxu0 0
        %4076 = vmatpush1.bf16.msra.mxu0 %v2698
        %4077 = vmatprep.subr.bf16.mxu0 0
        %4078 = vmatpush1.bf16.msra.mxu0 %v2697
        %4079 = vmatprep.subr.bf16.mxu0 0
        %4080 = vmatpush1.bf16.msra.mxu0 %v2696
        %4081 = vmatprep.subr.bf16.mxu0 0
        %4082 = vmatpush1.bf16.msra.mxu0 %v2695
        %4083 = vmatprep.subr.bf16.mxu0 0
        %4084 = vmatpush1.bf16.msra.mxu0 %v2694
        %4085 = vmatprep.subr.bf16.mxu0 0
        %4086 = vmatpush1.bf16.msra.mxu0 %v2693
        %4087 = vmatprep.subr.bf16.mxu0 0
        %4088 = vmatpush2.bf16.msra.mxu0 %v2708
        %4089 = vmatprep.subr.bf16.mxu0 0
        %4090 = vmatpush2.bf16.msra.mxu0 %v2707
        %4091 = vmatprep.subr.bf16.mxu0 0
        %4092 = vmatpush2.bf16.msra.mxu0 %v2706
        %4093 = vmatprep.subr.bf16.mxu0 0
        %4094 = vmatpush2.bf16.msra.mxu0 %v2705
        %4095 = vmatprep.subr.bf16.mxu0 0
        %4096 = vmatpush2.bf16.msra.mxu0 %v2704
        %4097 = vmatprep.subr.bf16.mxu0 0
        %4098 = vmatpush2.bf16.msra.mxu0 %v2703
        %4099 = vmatprep.subr.bf16.mxu0 0
        %4100 = vmatpush2.bf16.msra.mxu0 %v2702
        %4101 = vmatprep.subr.bf16.mxu0 0
        %4102 = vmatpush2.bf16.msra.mxu0 %v2701
        %4103 = vmatprep.mubr.bf16.mxu0 %v3338
        %4104 = vmatmul.mubr.bf16.gmra.mxu0 %v3337
        %v4105 = vpop.f32.mrf.mxu0
        %v4106 = vadd.f32 %v3881, %v4105
        %v4107 = vpop.f32.mrf.mxu0
        %v4108 = vpop.f32.mrf.mxu0
        %v4109 = vadd.f32 %v3884, %v4108
        %v4110 = vpop.f32.mrf.mxu0
        %4111 = vmatprep.mubr.bf16.mxu0 %v3344
        %4112 = vmatmul.mubr.bf16.gmra.mxu0 %v3343
        %v4113 = vpop.f32.mrf.mxu0
        %v4114 = vadd.f32 %v3889, %v4113
        %v4115 = vpop.f32.mrf.mxu0
        %v4116 = vpop.f32.mrf.mxu0
        %v4117 = vadd.f32 %v3892, %v4116
        %v4118 = vpop.f32.mrf.mxu0
        %4119 = vmatprep.mubr.bf16.mxu0 %v3350
        %4120 = vmatmul.mubr.bf16.gmra.mxu0 %v3349
        %v4121 = vpop.f32.mrf.mxu0
        %v4122 = vadd.f32 %v3897, %v4121
        %v4123 = vpop.f32.mrf.mxu0
        %v4124 = vpop.f32.mrf.mxu0
        %v4125 = vadd.f32 %v3900, %v4124
        %v4126 = vpop.f32.mrf.mxu0
        %4127 = vmatprep.mubr.bf16.mxu0 %v3356
        %4128 = vmatmul.mubr.bf16.gmra.mxu0 %v3355
        %v4129 = vpop.f32.mrf.mxu0
        %v4130 = vadd.f32 %v3905, %v4129
        %v4131 = vpop.f32.mrf.mxu0
        %v4132 = vpop.f32.mrf.mxu0
        %v4133 = vadd.f32 %v3908, %v4132
        %v4134 = vpop.f32.mrf.mxu0
        %4135 = vmatprep.mubr.bf16.mxu0 %v3362
        %4136 = vmatmul.mubr.bf16.gmra.mxu0 %v3361
        %v4137 = vpop.f32.mrf.mxu0
        %v4138 = vadd.f32 %v3913, %v4137
        %v4139 = vpop.f32.mrf.mxu0
        %v4140 = vpop.f32.mrf.mxu0
        %v4141 = vadd.f32 %v3916, %v4140
        %v4142 = vpop.f32.mrf.mxu0
        %4143 = vmatprep.mubr.bf16.mxu0 %v3368
        %4144 = vmatmul.mubr.bf16.gmra.mxu0 %v3367
        %v4145 = vpop.f32.mrf.mxu0
        %v4146 = vadd.f32 %v3921, %v4145
        %v4147 = vpop.f32.mrf.mxu0
        %v4148 = vpop.f32.mrf.mxu0
        %v4149 = vadd.f32 %v3924, %v4148
        %v4150 = vpop.f32.mrf.mxu0
        %4151 = vmatprep.mubr.bf16.mxu0 %v3374
        %4152 = vmatmul.mubr.bf16.gmra.mxu0 %v3373
        %v4153 = vpop.f32.mrf.mxu0
        %v4154 = vadd.f32 %v3929, %v4153
        %v4155 = vpop.f32.mrf.mxu0
        %v4156 = vpop.f32.mrf.mxu0
        %v4157 = vadd.f32 %v3932, %v4156
        %v4158 = vpop.f32.mrf.mxu0
        %4159 = vmatprep.mubr.bf16.mxu0 %v3380
        %4160 = vmatmul.mubr.bf16.gmra.mxu0 %v3379
        %v4161 = vpop.f32.mrf.mxu0
        %v4162 = vadd.f32 %v3937, %v4161
        %v4163 = vpop.f32.mrf.mxu0
        %v4164 = vpop.f32.mrf.mxu0
        %v4165 = vadd.f32 %v3940, %v4164
        %v4166 = vpop.f32.mrf.mxu0
        %4167 = vmatprep.mubr.bf16.mxu0 %v3386
        %4168 = vmatmul.mubr.bf16.gmra.mxu0 %v3385
        %v4169 = vpop.f32.mrf.mxu0
        %v4170 = vadd.f32 %v3945, %v4169
        %v4171 = vpop.f32.mrf.mxu0
        %v4172 = vpop.f32.mrf.mxu0
        %v4173 = vadd.f32 %v3948, %v4172
        %v4174 = vpop.f32.mrf.mxu0
        %4175 = vmatprep.mubr.bf16.mxu0 %v3392
        %4176 = vmatmul.mubr.bf16.gmra.mxu0 %v3391
        %v4177 = vpop.f32.mrf.mxu0
        %v4178 = vadd.f32 %v3953, %v4177
        %v4179 = vpop.f32.mrf.mxu0
        %v4180 = vpop.f32.mrf.mxu0
        %v4181 = vadd.f32 %v3956, %v4180
        %v4182 = vpop.f32.mrf.mxu0
        %4183 = vmatprep.mubr.bf16.mxu0 %v3398
        %4184 = vmatmul.mubr.bf16.gmra.mxu0 %v3397
        %v4185 = vpop.f32.mrf.mxu0
        %v4186 = vadd.f32 %v3961, %v4185
        %v4187 = vpop.f32.mrf.mxu0
        %v4188 = vpop.f32.mrf.mxu0
        %v4189 = vadd.f32 %v3964, %v4188
        %v4190 = vpop.f32.mrf.mxu0
        %4191 = vmatprep.mubr.bf16.mxu0 %v3404
        %4192 = vmatmul.mubr.bf16.gmra.mxu0 %v3403
        %v4193 = vpop.f32.mrf.mxu0
        %v4194 = vadd.f32 %v3969, %v4193
        %v4195 = vpop.f32.mrf.mxu0
        %v4196 = vpop.f32.mrf.mxu0
        %v4197 = vadd.f32 %v3972, %v4196
        %v4198 = vpop.f32.mrf.mxu0
        %4199 = vmatprep.mubr.bf16.mxu0 %v3410
        %4200 = vmatmul.mubr.bf16.gmra.mxu0 %v3409
        %v4201 = vpop.f32.mrf.mxu0
        %v4202 = vadd.f32 %v3977, %v4201
        %v4203 = vpop.f32.mrf.mxu0
        %v4204 = vpop.f32.mrf.mxu0
        %v4205 = vadd.f32 %v3980, %v4204
        %v4206 = vpop.f32.mrf.mxu0
        %4207 = vmatprep.mubr.bf16.mxu0 %v3416
        %4208 = vmatmul.mubr.bf16.gmra.mxu0 %v3415
        %v4209 = vpop.f32.mrf.mxu0
        %v4210 = vadd.f32 %v3985, %v4209
        %v4211 = vpop.f32.mrf.mxu0
        %v4212 = vpop.f32.mrf.mxu0
        %v4213 = vadd.f32 %v3988, %v4212
        %v4214 = vpop.f32.mrf.mxu0
        %4215 = vmatprep.mubr.bf16.mxu0 %v3422
        %4216 = vmatmul.mubr.bf16.gmra.mxu0 %v3421
        %v4217 = vpop.f32.mrf.mxu0
        %v4218 = vadd.f32 %v3993, %v4217
        %v4219 = vpop.f32.mrf.mxu0
        %v4220 = vpop.f32.mrf.mxu0
        %v4221 = vadd.f32 %v3996, %v4220
        %v4222 = vpop.f32.mrf.mxu0
        %4223 = vmatprep.mubr.bf16.mxu0 %v3428
        %4224 = vmatmul.mubr.bf16.gmra.mxu0 %v3427
        %v4225 = vpop.f32.mrf.mxu0
        %v4226 = vadd.f32 %v4001, %v4225
        %v4227 = vpop.f32.mrf.mxu0
        %v4228 = vpop.f32.mrf.mxu0
        %v4229 = vadd.f32 %v4004, %v4228
        %v4230 = vpop.f32.mrf.mxu0
        %4231 = vmatprep.mubr.bf16.mxu0 %v3434
        %4232 = vmatmul.mubr.bf16.gmra.mxu0 %v3433
        %v4233 = vpop.f32.mrf.mxu0
        %v4234 = vadd.f32 %v4009, %v4233
        %v4235 = vpop.f32.mrf.mxu0
        %v4236 = vpop.f32.mrf.mxu0
        %v4237 = vadd.f32 %v4012, %v4236
        %v4238 = vpop.f32.mrf.mxu0
        %4239 = vmatprep.mubr.bf16.mxu0 %v3440
        %4240 = vmatmul.mubr.bf16.gmra.mxu0 %v3439
        %v4241 = vpop.f32.mrf.mxu0
        %v4242 = vadd.f32 %v4017, %v4241
        %v4243 = vpop.f32.mrf.mxu0
        %v4244 = vpop.f32.mrf.mxu0
        %v4245 = vadd.f32 %v4020, %v4244
        %v4246 = vpop.f32.mrf.mxu0
        %4247 = vmatprep.mubr.bf16.mxu0 %v3446
        %4248 = vmatmul.mubr.bf16.gmra.mxu0 %v3445
        %v4249 = vpop.f32.mrf.mxu0
        %v4250 = vadd.f32 %v4025, %v4249
        %v4251 = vpop.f32.mrf.mxu0
        %v4252 = vpop.f32.mrf.mxu0
        %v4253 = vadd.f32 %v4028, %v4252
        %v4254 = vpop.f32.mrf.mxu0
        %4255 = vmatprep.mubr.bf16.mxu0 %v3452
        %4256 = vmatmul.mubr.bf16.gmra.mxu0 %v3451
        %v4257 = vpop.f32.mrf.mxu0
        %v4258 = vadd.f32 %v4033, %v4257
        %v4259 = vpop.f32.mrf.mxu0
        %v4260 = vpop.f32.mrf.mxu0
        %v4261 = vadd.f32 %v4036, %v4260
        %v4262 = vpop.f32.mrf.mxu0
        %4263 = vmatprep.mubr.bf16.mxu0 %v3458
        %4264 = vmatmul.mubr.bf16.gmra.mxu0 %v3457
        %v4265 = vpop.f32.mrf.mxu0
        %v4266 = vadd.f32 %v4041, %v4265
        %v4267 = vpop.f32.mrf.mxu0
        %v4268 = vpop.f32.mrf.mxu0
        %v4269 = vadd.f32 %v4044, %v4268
        %v4270 = vpop.f32.mrf.mxu0
        %4271 = vmatprep.mubr.bf16.mxu0 %v3464
        %4272 = vmatmul.mubr.bf16.gmra.mxu0 %v3463
        %v4273 = vpop.f32.mrf.mxu0
        %v4274 = vadd.f32 %v4049, %v4273
        %v4275 = vpop.f32.mrf.mxu0
        %v4276 = vpop.f32.mrf.mxu0
        %v4277 = vadd.f32 %v4052, %v4276
        %v4278 = vpop.f32.mrf.mxu0
        %4279 = vmatprep.mubr.bf16.mxu0 %v3470
        %4280 = vmatmul.mubr.bf16.gmra.mxu0 %v3469
        %v4281 = vpop.f32.mrf.mxu0
        %v4282 = vadd.f32 %v4057, %v4281
        %v4283 = vpop.f32.mrf.mxu0
        %v4284 = vpop.f32.mrf.mxu0
        %v4285 = vadd.f32 %v4060, %v4284
        %v4286 = vpop.f32.mrf.mxu0
        %4287 = vmatprep.mubr.bf16.mxu0 %v3476
        %4288 = vmatmul.mubr.bf16.gmra.mxu0 %v3475
        %v4289 = vpop.f32.mrf.mxu0
        %v4290 = vadd.f32 %v4065, %v4289
        %v4291 = vpop.f32.mrf.mxu0
        %v4292 = vpop.f32.mrf.mxu0
        %v4293 = vadd.f32 %v4068, %v4292
        %v4294 = vpop.f32.mrf.mxu0
        %4295 = vdwg.mxu0
        %v4296 = vadd.f32 %v2709, %v4106
        %v4297 = vadd.f32 %v2710, %v4109
        %v4298 = vadd.f32 %v2711, %v4114
        %v4299 = vadd.f32 %v2712, %v4117
        %v4300 = vadd.f32 %v2713, %v4122
        %v4301 = vadd.f32 %v2714, %v4125
        %v4302 = vadd.f32 %v2715, %v4130
        %v4303 = vadd.f32 %v2716, %v4133
        %v4304 = vadd.f32 %v2717, %v4138
        %v4305 = vadd.f32 %v2718, %v4141
        %v4306 = vadd.f32 %v2719, %v4146
        %v4307 = vadd.f32 %v2720, %v4149
        %v4308 = vadd.f32 %v2721, %v4154
        %v4309 = vadd.f32 %v2722, %v4157
        %v4310 = vadd.f32 %v2723, %v4162
        %v4311 = vadd.f32 %v2724, %v4165
        %v4312 = vadd.f32 %v2725, %v4170
        %v4313 = vadd.f32 %v2726, %v4173
        %v4314 = vadd.f32 %v2727, %v4178
        %v4315 = vadd.f32 %v2728, %v4181
        %v4316 = vadd.f32 %v2729, %v4186
        %v4317 = vadd.f32 %v2730, %v4189
        %v4318 = vadd.f32 %v2731, %v4194
        %v4319 = vadd.f32 %v2732, %v4197
        %v4320 = vadd.f32 %v2733, %v4202
        %v4321 = vadd.f32 %v2734, %v4205
        %v4322 = vadd.f32 %v2735, %v4210
        %v4323 = vadd.f32 %v2736, %v4213
        %v4324 = vadd.f32 %v2737, %v4218
        %v4325 = vadd.f32 %v2738, %v4221
        %v4326 = vadd.f32 %v2739, %v4226
        %v4327 = vadd.f32 %v2740, %v4229
        %v4328 = vadd.f32 %v2741, %v4234
        %v4329 = vadd.f32 %v2742, %v4237
        %v4330 = vadd.f32 %v2743, %v4242
        %v4331 = vadd.f32 %v2744, %v4245
        %v4332 = vadd.f32 %v2745, %v4250
        %v4333 = vadd.f32 %v2746, %v4253
        %v4334 = vadd.f32 %v2747, %v4258
        %v4335 = vadd.f32 %v2748, %v4261
        %v4336 = vadd.f32 %v2749, %v4266
        %v4337 = vadd.f32 %v2750, %v4269
        %v4338 = vadd.f32 %v2751, %v4274
        %v4339 = vadd.f32 %v2752, %v4277
        %v4340 = vadd.f32 %v2753, %v4282
        %v4341 = vadd.f32 %v2754, %v4285
        %v4342 = vadd.f32 %v2755, %v4290
        %v4343 = vadd.f32 %v2756, %v4293
        %vm4344 = vcmask 400384
        %4345 = vst.msk [vmem:[%s5] sm:$0xff] %vm4344, %v4296
        %4346 = vst.msk [vmem:[%s5 + $0x8] sm:$0xff] %vm4344, %v4297
        %4347 = vst.msk [vmem:[%s5 + $0x10] sm:$0xff] %vm4344, %v4298
        %4348 = vst.msk [vmem:[%s5 + $0x18] sm:$0xff] %vm4344, %v4299
        %4349 = vst.msk [vmem:[%s5 + $0x20] sm:$0xff] %vm4344, %v4300
        %4350 = vst.msk [vmem:[%s5 + $0x28] sm:$0xff] %vm4344, %v4301
        %4351 = vst.msk [vmem:[%s5 + $0x30] sm:$0xff] %vm4344, %v4302
        %4352 = vst.msk [vmem:[%s5 + $0x38] sm:$0xff] %vm4344, %v4303
        %4353 = vst.msk [vmem:[%s5 + $0x40] sm:$0xff] %vm4344, %v4304
        %4354 = vst.msk [vmem:[%s5 + $0x48] sm:$0xff] %vm4344, %v4305
        %4355 = vst.msk [vmem:[%s5 + $0x50] sm:$0xff] %vm4344, %v4306
        %4356 = vst.msk [vmem:[%s5 + $0x58] sm:$0xff] %vm4344, %v4307
        %4357 = vst.msk [vmem:[%s5 + $0x60] sm:$0xff] %vm4344, %v4308
        %4358 = vst.msk [vmem:[%s5 + $0x68] sm:$0xff] %vm4344, %v4309
        %4359 = vst.msk [vmem:[%s5 + $0x70] sm:$0xff] %vm4344, %v4310
        %4360 = vst.msk [vmem:[%s5 + $0x78] sm:$0xff] %vm4344, %v4311
        %4361 = vst.msk [vmem:[%s5 + $0x80] sm:$0xff] %vm4344, %v4312
        %4362 = vst.msk [vmem:[%s5 + $0x88] sm:$0xff] %vm4344, %v4313
        %4363 = vst.msk [vmem:[%s5 + $0x90] sm:$0xff] %vm4344, %v4314
        %4364 = vst.msk [vmem:[%s5 + $0x98] sm:$0xff] %vm4344, %v4315
        %4365 = vst.msk [vmem:[%s5 + $0xa0] sm:$0xff] %vm4344, %v4316
        %4366 = vst.msk [vmem:[%s5 + $0xa8] sm:$0xff] %vm4344, %v4317
        %4367 = vst.msk [vmem:[%s5 + $0xb0] sm:$0xff] %vm4344, %v4318
        %4368 = vst.msk [vmem:[%s5 + $0xb8] sm:$0xff] %vm4344, %v4319
        %4369 = vst.msk [vmem:[%s5 + $0xc0] sm:$0xff] %vm4344, %v4320
        %4370 = vst.msk [vmem:[%s5 + $0xc8] sm:$0xff] %vm4344, %v4321
        %4371 = vst.msk [vmem:[%s5 + $0xd0] sm:$0xff] %vm4344, %v4322
        %4372 = vst.msk [vmem:[%s5 + $0xd8] sm:$0xff] %vm4344, %v4323
        %4373 = vst.msk [vmem:[%s5 + $0xe0] sm:$0xff] %vm4344, %v4324
        %4374 = vst.msk [vmem:[%s5 + $0xe8] sm:$0xff] %vm4344, %v4325
        %4375 = vst.msk [vmem:[%s5 + $0xf0] sm:$0xff] %vm4344, %v4326
        %4376 = vst.msk [vmem:[%s5 + $0xf8] sm:$0xff] %vm4344, %v4327
        %4377 = vst.msk [vmem:[%s5 + $0x100] sm:$0xff] %vm4344, %v4328
        %4378 = vst.msk [vmem:[%s5 + $0x108] sm:$0xff] %vm4344, %v4329
        %4379 = vst.msk [vmem:[%s5 + $0x110] sm:$0xff] %vm4344, %v4330
        %4380 = vst.msk [vmem:[%s5 + $0x118] sm:$0xff] %vm4344, %v4331
        %4381 = vst.msk [vmem:[%s5 + $0x120] sm:$0xff] %vm4344, %v4332
        %4382 = vst.msk [vmem:[%s5 + $0x128] sm:$0xff] %vm4344, %v4333
        %4383 = vst.msk [vmem:[%s5 + $0x130] sm:$0xff] %vm4344, %v4334
        %4384 = vst.msk [vmem:[%s5 + $0x138] sm:$0xff] %vm4344, %v4335
        %4385 = vst.msk [vmem:[%s5 + $0x140] sm:$0xff] %vm4344, %v4336
        %4386 = vst.msk [vmem:[%s5 + $0x148] sm:$0xff] %vm4344, %v4337
        %4387 = vst.msk [vmem:[%s5 + $0x150] sm:$0xff] %vm4344, %v4338
        %4388 = vst.msk [vmem:[%s5 + $0x158] sm:$0xff] %vm4344, %v4339
        %4389 = vst.msk [vmem:[%s5 + $0x160] sm:$0xff] %vm4344, %v4340
        %4390 = vst.msk [vmem:[%s5 + $0x168] sm:$0xff] %vm4344, %v4341
        %4391 = vst.msk [vmem:[%s5 + $0x170] sm:$0xff] %vm4344, %v4342
        %4392 = vst.msk [vmem:[%s5 + $0x178] sm:$0xff] %vm4344, %v4343
        // Predicated region
        $region68: #{se_block_pallas.1} parent=58 // pred_check
          %p4393 = pneg %p154
        $region69: #{se_block_pallas.1} parent=58 // pred_check_branch
          %4395 = sbr.rel (%p4393) target = $region71
        $region70: #{se_block_pallas.1} parent=58 // pred_region
          _
        $region71: #{se_block_pallas.1} parent=58 // pred_fallthru
          _
        // Predicated region
        $region72: #{se_block_pallas.1} parent=58 // pred_check
          %p4396 = pneg %p154
        $region73: #{se_block_pallas.1} parent=58 // pred_check_branch
          %4398 = sbr.rel (%p4396) target = $region75
        $region74: #{se_block_pallas.1} parent=58 // pred_region
          _
        $region75: #{se_block_pallas.1} parent=58 // pred_fallthru
          _
      $region59: #{se_block_pallas.1} parent=5 // pred_fallthru
        _
      %p4399 = scmp.le.s32.totalorder 2, %s11
      // Predicated region
      $region76: #{se_block_pallas.1} parent=5 // pred_check
        %p4400 = pneg %p4399
      $region77: #{se_block_pallas.1} parent=5 // pred_check_branch
        %4402 = sbr.rel (%p4400) target = $region79
      $region78: #{se_block_pallas.1} parent=5 // pred_region
        %s4403 = ssub.s32 %s11, 2
      $region79: #{se_block_pallas.1} parent=5 // pred_fallthru
        _
    $region6: #{se_block_pallas.1} parent=1 // loop_footer
      %s15 = sadd.s32 1, %s11
    $region7: #{se_block_pallas.1} parent=1 // loop_footer_branch
      %10 = sbr.rel target = $region3
    $region8: #{se_block_pallas.1} parent=1 // loop_exit
      _

</llo_original>
